<compile_context>
chip_gen: v6e
topology: v6e:2x2x1
jax: 0.10.0
libtpu: 0.0.40
codegen_flags: <defaults>
</compile_context>

<pallas_src>
import functools

import jax
import jax.numpy as jnp
from jax.experimental import pallas as pl
from jax.experimental.pallas import tpu as pltpu

VMEM_LIMIT = 32 * 1024 * 1024  # portable across v5e / v6e / v7x (v7x physical = 64 MiB)


def _round_up(a, b):
    return (a + b - 1) // b * b


def _pick_tile(dim, cap):
    for t in (cap, cap // 2, cap // 4, cap // 8):
        if t and dim % t == 0:
            return t
    return dim


# ----------------------- generic tiled matmul (MXU) ------------------------ #

def _mm_kernel(act, x_ref, w_ref, b_ref, o_ref, acc_ref):
    @pl.when(pl.program_id(2) == 0)
    def _():
        acc_ref[...] = jnp.zeros_like(acc_ref)

    acc_ref[...] += jnp.dot(x_ref[...], w_ref[...],
                            preferred_element_type=jnp.float32)

    @pl.when(pl.program_id(2) == pl.num_programs(2) - 1)
    def _():
        y = acc_ref[...] + b_ref[...]
        if act == "swish":
            y = y * jax.nn.sigmoid(y)
        elif act == "sigmoid":
            y = jax.nn.sigmoid(y)
        o_ref[...] = y.astype(o_ref.dtype)


def pallas_linear(x, w, b, act="none", out_dtype=jnp.bfloat16, tm_cap=256):
    """y = act(x @ w + b), bf16 operands, f32 accumulation, tiled + pipelined."""
    M, K = x.shape
    N = w.shape[1]

    tm = min(tm_cap, _round_up(M, 8))
    Mp = _round_up(M, tm)
    if K <= 2048:                       # single K block (padded to sublane multiple)
        tk = _round_up(K, 8)
        Kp = tk
    else:                               # K-axis accumulation over 512-deep chunks
        tk = 512
        Kp = _round_up(K, tk)
    if N % 128 == 0 and N > 512:
        tn = 256 if N % 256 == 0 else 128
    else:
        tn = N                          # full (lane-dense when N % 128 == 0)

    xb = x.astype(jnp.bfloat16)
    wb = w.astype(jnp.bfloat16)
    if (Mp, Kp) != (M, K):
        xb = jnp.pad(xb, ((0, Mp - M), (0, Kp - K)))
    if Kp != K:
        wb = jnp.pad(wb, ((0, Kp - K), (0, 0)))
    bb = b.reshape(1, N).astype(jnp.float32)

    out = pl.pallas_call(
        functools.partial(_mm_kernel, act),
        out_shape=jax.ShapeDtypeStruct((Mp, N), out_dtype),
        grid=(Mp // tm, N // tn, Kp // tk),
        in_specs=[
            pl.BlockSpec((tm, tk), lambda i, j, k: (i, k)),
            pl.BlockSpec((tk, tn), lambda i, j, k: (k, j)),
            pl.BlockSpec((1, tn), lambda i, j, k: (0, j)),
        ],
        out_specs=pl.BlockSpec((tm, tn), lambda i, j, k: (i, j)),
        scratch_shapes=[pltpu.VMEM((tm, tn), jnp.float32)],
        compiler_params=pltpu.CompilerParams(
            dimension_semantics=("parallel", "parallel", "arbitrary"),
            vmem_limit_bytes=VMEM_LIMIT),
    )(xb, wb, bb)
    return out[:M] if Mp != M else out


# -------------- depthwise 3x3 + bias + swish + fused SE squeeze ------------- #

def _dw3x3_kernel(H, W, xp_ref, wt_ref, b_ref, o_ref, po_ref):
    x = xp_ref[0].astype(jnp.float32)          # (H+2, W+2, C), one image per grid step
    wt = wt_ref[...].astype(jnp.float32)       # (9, C)
    C = x.shape[-1]
    acc = jnp.zeros((H, W, C), jnp.float32)
    for dy in range(3):
        rows = x[dy:dy + H]                    # leading-dim slice (cheap)
        for dx in range(3):
            acc = acc + rows[:, dx:dx + W, :] * wt[dy * 3 + dx]
    acc = acc + b_ref[0]
    acc = acc * jax.nn.sigmoid(acc)            # swish
    o_ref[0] = acc.astype(o_ref.dtype)
    pooled = jnp.sum(acc.reshape(H * W, C), axis=0, keepdims=True) * (1.0 / (H * W))
    po_ref[0] = pooled.astype(po_ref.dtype)    # fused SE squeeze (spatial mean)


def pallas_dw3x3(x, wt, b):
    Nb, H, W, Ce = x.shape
    xp = jnp.pad(x, ((0, 0), (1, 1), (1, 1), (0, 0)))
    Hp, Wp = H + 2, W + 2
    return pl.pallas_call(
        functools.partial(_dw3x3_kernel, H, W),
        out_shape=(jax.ShapeDtypeStruct((Nb, H, W, Ce), jnp.bfloat16),
                   jax.ShapeDtypeStruct((Nb, 1, Ce), jnp.bfloat16)),
        grid=(Nb,),
        in_specs=[
            pl.BlockSpec((1, Hp, Wp, Ce), lambda i: (i, 0, 0, 0)),
            pl.BlockSpec((9, Ce), lambda i: (0, 0)),
            pl.BlockSpec((1, Ce), lambda i: (0, 0)),
        ],
        out_specs=(pl.BlockSpec((1, H, W, Ce), lambda i: (i, 0, 0, 0)),
                   pl.BlockSpec((1, 1, Ce), lambda i: (i, 0, 0))),
        compiler_params=pltpu.CompilerParams(
            dimension_semantics=("parallel",),
            vmem_limit_bytes=VMEM_LIMIT),
    )(xp, wt, b)


# ------------------- fused SE excitation (fc1+swish+fc2+sigmoid) ------------ #

def _se_kernel(p_ref, w1_ref, b1_ref, w2_ref, b2_ref, o_ref):
    nb, _, ce = p_ref.shape
    p = p_ref[...].reshape(nb, ce)
    h = jnp.dot(p, w1_ref[...], preferred_element_type=jnp.float32) + b1_ref[...]
    h = h * jax.nn.sigmoid(h)
    g = jnp.dot(h.astype(jnp.bfloat16), w2_ref[...],
                preferred_element_type=jnp.float32) + b2_ref[...]
    g = jax.nn.sigmoid(g)
    o_ref[...] = g.reshape(o_ref.shape).astype(o_ref.dtype)


def pallas_se(pooled, w1, b1, w2, b2):
    Nb, _, Ce = pooled.shape
    Cse = w1.shape[1]
    return pl.pallas_call(
        _se_kernel,
        out_shape=jax.ShapeDtypeStruct((Nb, 1, Ce), jnp.bfloat16),
        grid=(1,),
        in_specs=[
            pl.BlockSpec((Nb, 1, Ce), lambda i: (0, 0, 0)),
            pl.BlockSpec((Ce, Cse), lambda i: (0, 0)),
            pl.BlockSpec((1, Cse), lambda i: (0, 0)),
            pl.BlockSpec((Cse, Ce), lambda i: (0, 0)),
            pl.BlockSpec((1, Ce), lambda i: (0, 0)),
        ],
        out_specs=pl.BlockSpec((Nb, 1, Ce), lambda i: (0, 0, 0)),
        compiler_params=pltpu.CompilerParams(
            dimension_semantics=("arbitrary",),
            vmem_limit_bytes=VMEM_LIMIT),
    )(pooled, w1.astype(jnp.bfloat16), b1.reshape(1, Cse).astype(jnp.float32),
      w2.astype(jnp.bfloat16), b2.reshape(1, Ce).astype(jnp.float32))


# ---- fused: SE gate * x -> 1x1 proj -> +residual -> head 1x1 -> swish -> GAP ---- #
# Nothing between the SE gates and the pooled (1, 1280) features touches HBM:
# both the (M, Cproj) block output and the (M, 1280) head activation stay in VMEM.

def _proj_head_gap_kernel(hw, x_ref, g_ref, wp_ref, bp_ref, r_ref,
                          wh_ref, bh_ref, o_ref, acc_ref):
    mi = pl.program_id(1)

    @pl.when(mi == 0)
    def _():
        acc_ref[...] = jnp.zeros_like(acc_ref)

    gated = x_ref[...] * g_ref[0]                              # (tm,Ce)*(1,Ce), bf16
    y = jnp.dot(gated, wp_ref[...], preferred_element_type=jnp.float32)
    y = y + bp_ref[...] + r_ref[...].astype(jnp.float32)       # +residual (block output)
    z = jnp.dot(y.astype(jnp.bfloat16), wh_ref[...],
                preferred_element_type=jnp.float32)
    z = z + bh_ref[...]
    z = z * jax.nn.sigmoid(z)                                  # head swish
    acc_ref[...] += jnp.sum(z, axis=0, keepdims=True)          # partial spatial sum

    @pl.when(mi == pl.num_programs(1) - 1)
    def _():
        o_ref[0] = (acc_ref[...] * (1.0 / hw)).astype(o_ref.dtype)


def pallas_se_proj_head_gap(h, gates, wp, bp, resid, wh, bh, nb, hw):
    _, Ce = h.shape
    Cp = wp.shape[1]
    Cf = wh.shape[1]
    tm = _pick_tile(hw, 256)
    mt = hw // tm
    return pl.pallas_call(
        functools.partial(_proj_head_gap_kernel, hw),
        out_shape=jax.ShapeDtypeStruct((nb, 1, Cf), jnp.bfloat16),
        grid=(nb, mt),                                          # reduction (mi) last
        in_specs=[
            pl.BlockSpec((tm, Ce), lambda bi, mi: (bi * mt + mi, 0)),
            pl.BlockSpec((1, 1, Ce), lambda bi, mi: (bi, 0, 0)),
            pl.BlockSpec((Ce, Cp), lambda bi, mi: (0, 0)),
            pl.BlockSpec((1, Cp), lambda bi, mi: (0, 0)),
            pl.BlockSpec((tm, Cp), lambda bi, mi: (bi * mt + mi, 0)),
            pl.BlockSpec((Cp, Cf), lambda bi, mi: (0, 0)),
            pl.BlockSpec((1, Cf), lambda bi, mi: (0, 0)),
        ],
        out_specs=pl.BlockSpec((1, 1, Cf), lambda bi, mi: (bi, 0, 0)),
        scratch_shapes=[pltpu.VMEM((1, Cf), jnp.float32)],
        compiler_params=pltpu.CompilerParams(
            dimension_semantics=("parallel", "arbitrary"),
            vmem_limit_bytes=VMEM_LIMIT),
    )(h, gates, wp.astype(jnp.bfloat16), bp.reshape(1, Cp).astype(jnp.float32),
      resid, wh.astype(jnp.bfloat16), bh.reshape(1, Cf).astype(jnp.float32))


# ------------------------------ model wrapper ------------------------------ #

def init_params(key, num_classes, cin=3, c_stem=32, c_exp=128, c_se=8, c_feat=1280):
    ks = jax.random.split(key, 16)

    def w(k, shape, scale=0.05):
        return (scale * jax.random.normal(k, shape)).astype(jnp.float32)

    nc_pad = _round_up(num_classes, 128)       # lane-dense classifier store path
    fc_w = jnp.pad(w(ks[14], (c_feat, num_classes)), ((0, 0), (0, nc_pad - num_classes)))
    fc_b = jnp.pad(w(ks[15], (num_classes,)), ((0, nc_pad - num_classes),))
    return {
        "stem_w": w(ks[0], (9 * cin, c_stem)),
        "stem_b": w(ks[1], (c_stem,)),
        "exp_w": w(ks[2], (c_stem, c_exp)),
        "exp_b": w(ks[3], (c_exp,)),
        "dw_w": w(ks[4], (9, c_exp)),
        "dw_b": w(ks[5], (1, c_exp)),
        "se1_w": w(ks[6], (c_exp, c_se)),
        "se1_b": w(ks[7], (c_se,)),
        "se2_w": w(ks[8], (c_se, c_exp)),
        "se2_b": w(ks[9], (c_exp,)),
        "proj_w": w(ks[10], (c_exp, c_stem)),
        "proj_b": w(ks[11], (c_stem,)),
        "head_w": w(ks[12], (c_stem, c_feat)),
        "head_b": w(ks[13], (c_feat,)),
        "fc_w": fc_w,
        "fc_b": fc_b,
    }


def net_forward(params, num_classes, x_nchw):
    # NCHW (PyTorch convention) -> NHWC so channels live on the 128-lane axis.
    x = jnp.transpose(x_nchw, (0, 2, 3, 1)).astype(jnp.float32)
    Nb, H, W, Cin = x.shape
    Ho, Wo = H // 2, W // 2
    HW = Ho * Wo

    # --- stem: 3x3 stride-2 conv (pad 1) via im2col + tiled MXU matmul, swish ---
    # (im2col gather kept in the wrapper; K=27 is zero-padded to 32 inside pallas_linear)
    xp = jnp.pad(x, ((0, 0), (1, 1), (1, 1), (0, 0)))
    cols = [xp[:, dy:dy + 2 * Ho:2, dx:dx + 2 * Wo:2, :]
            for dy in range(3) for dx in range(3)]
    patches = jnp.concatenate(cols, axis=-1).reshape(Nb * HW, 9 * Cin)
    y = pallas_linear(patches, params["stem_w"], params["stem_b"], act="swish")

    # --- MBConv block: expand -> dw3x3(+fused pool) -> SE excitation ---
    h = pallas_linear(y, params["exp_w"], params["exp_b"], act="swish")
    Ce = h.shape[-1]
    dw, pooled = pallas_dw3x3(h.reshape(Nb, Ho, Wo, Ce), params["dw_w"], params["dw_b"])
    gates = pallas_se(pooled, params["se1_w"], params["se1_b"],
                      params["se2_w"], params["se2_b"])

    # --- fused tail: gate*x -> proj -> +residual -> head 1x1 -> swish -> GAP ---
    feat = pallas_se_proj_head_gap(dw.reshape(Nb * HW, Ce), gates,
                                   params["proj_w"], params["proj_b"], y,
                                   params["head_w"], params["head_b"], Nb, HW)

    # --- replaced classifier: nn.Sequential(nn.Linear(1280, num_classes)) ---
    logits = pallas_linear(feat.reshape(Nb, -1), params["fc_w"], params["fc_b"],
                           act="none", out_dtype=jnp.float32)
    return logits[:, :num_classes]


if __name__ == "__main__":
    key = jax.random.PRNGKey(0)
    kx, kp = jax.random.split(key)

    num_classes = 10
    x = jax.random.normal(kx, (2, 3, 16, 16), dtype=jnp.float32)  # NCHW like PyTorch
    params = init_params(kp, num_classes)

    fwd = jax.jit(functools.partial(net_forward, params, num_classes))
    out = fwd(x)
    jax.block_until_ready(out)
    assert out.shape == (2, num_classes) and out.dtype == jnp.float32
    print("KERNEL_OK")
</pallas_src>

<mosaic_0001>
module attributes {stable_mosaic.version = 11 : i64} {
  func.func @_mm_kernel(%arg0: i32, %arg1: i32, %arg2: i32, %arg3: memref<128x32xbf16, #tpu.memory_space<vmem>>, %arg4: memref<32x128xbf16, #tpu.memory_space<vmem>>, %arg5: memref<1x128xf32, #tpu.memory_space<vmem>>, %arg6: memref<128x128xbf16, #tpu.memory_space<vmem>>, %arg7: memref<128x128xf32, #tpu.memory_space<vmem>>) attributes {dimension_semantics = [#tpu.dimension_semantics<parallel>, #tpu.dimension_semantics<parallel>, #tpu.dimension_semantics<arbitrary>], iteration_bounds = array<i64: 1, 1, 1>, scalar_prefetch = 0 : i64, scratch_operands = 1 : i64, tpu.core_type = #tpu.core_type<tc>, window_params = [{transform_indices = @transform_0, window_bounds = array<i64: 128, 32>}, {transform_indices = @transform_1, window_bounds = array<i64: 32, 128>}, {transform_indices = @transform_2, window_bounds = array<i64: 1, 128>}, {transform_indices = @transform_3, window_bounds = array<i64: 128, 128>}]} {
    %c0_i32 = arith.constant 0 : i32
    %0 = arith.cmpi eq, %arg2, %c0_i32 : i32
    %1 = arith.extui %0 : i1 to i32
    %c0_i32_0 = arith.constant 0 : i32
    %2 = arith.cmpi ne, %1, %c0_i32_0 : i32
    scf.if %2 {
      %cst_10 = arith.constant 0.000000e+00 : f32
      %12 = vector.broadcast %cst_10 : f32 to vector<128x128xf32>
      %c0_11 = arith.constant 0 : index
      %c0_12 = arith.constant 0 : index
      %13 = vector.load %arg7[%c0_11, %c0_12] : memref<128x128xf32, #tpu.memory_space<vmem>>, vector<128x128xf32>
      tpu.vector_store %arg7[%c0_11, %c0_12], %12 {strides = array<i32>} : memref<128x128xf32, #tpu.memory_space<vmem>>, vector<128x128xf32>,
    } else {
    }
    %c0 = arith.constant 0 : index
    %c0_1 = arith.constant 0 : index
    %3 = vector.load %arg7[%c0, %c0_1] : memref<128x128xf32, #tpu.memory_space<vmem>>, vector<128x128xf32>
    %c0_2 = arith.constant 0 : index
    %c0_3 = arith.constant 0 : index
    %4 = vector.load %arg3[%c0_2, %c0_3] : memref<128x32xbf16, #tpu.memory_space<vmem>>, vector<128x32xbf16>
    %c0_4 = arith.constant 0 : index
    %c0_5 = arith.constant 0 : index
    %5 = vector.load %arg4[%c0_4, %c0_5] : memref<32x128xbf16, #tpu.memory_space<vmem>>, vector<32x128xbf16>
    %cst = arith.constant dense<0.000000e+00> : vector<128x128xf32>
    %6 = tpu.matmul %4, %5, %cst {dimension_numbers = #tpu.dot_dimension_numbers<[1], [0], [0], [1], [0, 0, 1, 1], [], []>} : vector<128x32xbf16>, vector<32x128xbf16>, vector<128x128xf32> -> vector<128x128xf32>
    %7 = arith.addf %3, %6 : vector<128x128xf32>
    %c0_6 = arith.constant 0 : index
    %c0_7 = arith.constant 0 : index
    %8 = vector.load %arg7[%c0_6, %c0_7] : memref<128x128xf32, #tpu.memory_space<vmem>>, vector<128x128xf32>
    tpu.vector_store %arg7[%c0_6, %c0_7], %7 {strides = array<i32>} : memref<128x128xf32, #tpu.memory_space<vmem>>, vector<128x128xf32>,
    %c0_i32_8 = arith.constant 0 : i32
    %9 = arith.cmpi eq, %arg2, %c0_i32_8 : i32
    %10 = arith.extui %9 : i1 to i32
    %c0_i32_9 = arith.constant 0 : i32
    %11 = arith.cmpi ne, %10, %c0_i32_9 : i32
    scf.if %11 {
      %c0_10 = arith.constant 0 : index
      %c0_11 = arith.constant 0 : index
      %12 = vector.load %arg7[%c0_10, %c0_11] : memref<128x128xf32, #tpu.memory_space<vmem>>, vector<128x128xf32>
      %c0_12 = arith.constant 0 : index
      %c0_13 = arith.constant 0 : index
      %13 = vector.load %arg5[%c0_12, %c0_13] : memref<1x128xf32, #tpu.memory_space<vmem>>, vector<1x128xf32>
      %14 = vector.broadcast %13 : vector<1x128xf32> to vector<128x128xf32>
      %15 = arith.addf %12, %14 : vector<128x128xf32>
      %16 = arith.negf %15 : vector<128x128xf32>
      %17 = math.exp %16 : vector<128x128xf32>
      %cst_14 = arith.constant 1.000000e+00 : f32
      %18 = vector.broadcast %cst_14 : f32 to vector<128x128xf32>
      %19 = arith.addf %18, %17 : vector<128x128xf32>
      %20 = arith.divf %18, %19 : vector<128x128xf32>
      %21 = arith.mulf %15, %20 : vector<128x128xf32>
      %22 = arith.truncf %21 : vector<128x128xf32> to vector<128x128xbf16>
      %c0_15 = arith.constant 0 : index
      %c0_16 = arith.constant 0 : index
      %23 = vector.load %arg6[%c0_15, %c0_16] : memref<128x128xbf16, #tpu.memory_space<vmem>>, vector<128x128xbf16>
      tpu.vector_store %arg6[%c0_15, %c0_16], %22 {strides = array<i32>} : memref<128x128xbf16, #tpu.memory_space<vmem>>, vector<128x128xbf16>,
    } else {
    }
    return
  }
  func.func @transform_0(%arg0: i32, %arg1: i32, %arg2: i32) -> (i32, i32) {
    %c0_i32 = arith.constant 0 : i32
    return %arg0, %arg2 : i32, i32
  }
  func.func @transform_1(%arg0: i32, %arg1: i32, %arg2: i32) -> (i32, i32) {
    %c0_i32 = arith.constant 0 : i32
    return %arg2, %arg1 : i32, i32
  }
  func.func @transform_2(%arg0: i32, %arg1: i32, %arg2: i32) -> (i32, i32) {
    %c0_i32 = arith.constant 0 : i32
    %c0_i32_0 = arith.constant 0 : i32
    return %c0_i32, %arg1 : i32, i32
  }
  func.func @transform_3(%arg0: i32, %arg1: i32, %arg2: i32) -> (i32, i32) {
    %c0_i32 = arith.constant 0 : i32
    return %arg0, %arg1 : i32, i32
  }
}

module attributes {stable_mosaic.version = 11 : i64} {
  func.func @_mm_kernel(%arg0: i32, %arg1: i32, %arg2: i32, %arg3: memref<128x32xbf16, #tpu.memory_space<vmem>>, %arg4: memref<32x32xbf16, #tpu.memory_space<vmem>>, %arg5: memref<1x32xf32, #tpu.memory_space<vmem>>, %arg6: memref<128x32xbf16, #tpu.memory_space<vmem>>, %arg7: memref<128x32xf32, #tpu.memory_space<vmem>>) attributes {dimension_semantics = [#tpu.dimension_semantics<parallel>, #tpu.dimension_semantics<parallel>, #tpu.dimension_semantics<arbitrary>], iteration_bounds = array<i64: 1, 1, 1>, scalar_prefetch = 0 : i64, scratch_operands = 1 : i64, tpu.core_type = #tpu.core_type<tc>, window_params = [{transform_indices = @transform_0, window_bounds = array<i64: 128, 32>}, {transform_indices = @transform_1, window_bounds = array<i64: 32, 32>}, {transform_indices = @transform_2, window_bounds = array<i64: 1, 32>}, {transform_indices = @transform_3, window_bounds = array<i64: 128, 32>}]} {
    %c0_i32 = arith.constant 0 : i32
    %0 = arith.cmpi eq, %arg2, %c0_i32 : i32
    %1 = arith.extui %0 : i1 to i32
    %c0_i32_0 = arith.constant 0 : i32
    %2 = arith.cmpi ne, %1, %c0_i32_0 : i32
    scf.if %2 {
      %cst_10 = arith.constant 0.000000e+00 : f32
      %12 = vector.broadcast %cst_10 : f32 to vector<128x32xf32>
      %c0_11 = arith.constant 0 : index
      %c0_12 = arith.constant 0 : index
      %13 = vector.load %arg7[%c0_11, %c0_12] : memref<128x32xf32, #tpu.memory_space<vmem>>, vector<128x32xf32>
      tpu.vector_store %arg7[%c0_11, %c0_12], %12 {strides = array<i32>} : memref<128x32xf32, #tpu.memory_space<vmem>>, vector<128x32xf32>,
    } else {
    }
    %c0 = arith.constant 0 : index
    %c0_1 = arith.constant 0 : index
    %3 = vector.load %arg7[%c0, %c0_1] : memref<128x32xf32, #tpu.memory_space<vmem>>, vector<128x32xf32>
    %c0_2 = arith.constant 0 : index
    %c0_3 = arith.constant 0 : index
    %4 = vector.load %arg3[%c0_2, %c0_3] : memref<128x32xbf16, #tpu.memory_space<vmem>>, vector<128x32xbf16>
    %c0_4 = arith.constant 0 : index
    %c0_5 = arith.constant 0 : index
    %5 = vector.load %arg4[%c0_4, %c0_5] : memref<32x32xbf16, #tpu.memory_space<vmem>>, vector<32x32xbf16>
    %cst = arith.constant dense<0.000000e+00> : vector<128x32xf32>
    %6 = tpu.matmul %4, %5, %cst {dimension_numbers = #tpu.dot_dimension_numbers<[1], [0], [0], [1], [0, 0, 1, 1], [], []>} : vector<128x32xbf16>, vector<32x32xbf16>, vector<128x32xf32> -> vector<128x32xf32>
    %7 = arith.addf %3, %6 : vector<128x32xf32>
    %c0_6 = arith.constant 0 : index
    %c0_7 = arith.constant 0 : index
    %8 = vector.load %arg7[%c0_6, %c0_7] : memref<128x32xf32, #tpu.memory_space<vmem>>, vector<128x32xf32>
    tpu.vector_store %arg7[%c0_6, %c0_7], %7 {strides = array<i32>} : memref<128x32xf32, #tpu.memory_space<vmem>>, vector<128x32xf32>,
    %c0_i32_8 = arith.constant 0 : i32
    %9 = arith.cmpi eq, %arg2, %c0_i32_8 : i32
    %10 = arith.extui %9 : i1 to i32
    %c0_i32_9 = arith.constant 0 : i32
    %11 = arith.cmpi ne, %10, %c0_i32_9 : i32
    scf.if %11 {
      %c0_10 = arith.constant 0 : index
      %c0_11 = arith.constant 0 : index
      %12 = vector.load %arg7[%c0_10, %c0_11] : memref<128x32xf32, #tpu.memory_space<vmem>>, vector<128x32xf32>
      %c0_12 = arith.constant 0 : index
      %c0_13 = arith.constant 0 : index
      %13 = vector.load %arg5[%c0_12, %c0_13] : memref<1x32xf32, #tpu.memory_space<vmem>>, vector<1x32xf32>
      %14 = vector.broadcast %13 : vector<1x32xf32> to vector<128x32xf32>
      %15 = arith.addf %12, %14 : vector<128x32xf32>
      %16 = arith.negf %15 : vector<128x32xf32>
      %17 = math.exp %16 : vector<128x32xf32>
      %cst_14 = arith.constant 1.000000e+00 : f32
      %18 = vector.broadcast %cst_14 : f32 to vector<128x32xf32>
      %19 = arith.addf %18, %17 : vector<128x32xf32>
      %20 = arith.divf %18, %19 : vector<128x32xf32>
      %21 = arith.mulf %15, %20 : vector<128x32xf32>
      %22 = arith.truncf %21 : vector<128x32xf32> to vector<128x32xbf16>
      %c0_15 = arith.constant 0 : index
      %c0_16 = arith.constant 0 : index
      %23 = vector.load %arg6[%c0_15, %c0_16] : memref<128x32xbf16, #tpu.memory_space<vmem>>, vector<128x32xbf16>
      tpu.vector_store %arg6[%c0_15, %c0_16], %22 {strides = array<i32>} : memref<128x32xbf16, #tpu.memory_space<vmem>>, vector<128x32xbf16>,
    } else {
    }
    return
  }
  func.func @transform_0(%arg0: i32, %arg1: i32, %arg2: i32) -> (i32, i32) {
    %c0_i32 = arith.constant 0 : i32
    return %arg0, %arg2 : i32, i32
  }
  func.func @transform_1(%arg0: i32, %arg1: i32, %arg2: i32) -> (i32, i32) {
    %c0_i32 = arith.constant 0 : i32
    return %arg2, %arg1 : i32, i32
  }
  func.func @transform_2(%arg0: i32, %arg1: i32, %arg2: i32) -> (i32, i32) {
    %c0_i32 = arith.constant 0 : i32
    %c0_i32_0 = arith.constant 0 : i32
    return %c0_i32, %arg1 : i32, i32
  }
  func.func @transform_3(%arg0: i32, %arg1: i32, %arg2: i32) -> (i32, i32) {
    %c0_i32 = arith.constant 0 : i32
    return %arg0, %arg1 : i32, i32
  }
}

module attributes {stable_mosaic.version = 11 : i64} {
  func.func @_dw3x3_kernel(%arg0: i32, %arg1: memref<1x10x10x128xbf16, #tpu.memory_space<vmem>>, %arg2: memref<9x128xf32, #tpu.memory_space<vmem>>, %arg3: memref<1x128xf32, #tpu.memory_space<vmem>>, %arg4: memref<1x8x8x128xbf16, #tpu.memory_space<vmem>>, %arg5: memref<1x1x128xbf16, #tpu.memory_space<vmem>>) attributes {dimension_semantics = [#tpu.dimension_semantics<parallel>], iteration_bounds = array<i64: 2>, scalar_prefetch = 0 : i64, scratch_operands = 0 : i64, tpu.core_type = #tpu.core_type<tc>, window_params = [{transform_indices = @transform_0, window_bounds = array<i64: 1, 10, 10, 128>}, {pipeline_mode = #tpu.pipeline_mode<synchronous>, transform_indices = @transform_1, window_bounds = array<i64: 9, 128>}, {pipeline_mode = #tpu.pipeline_mode<synchronous>, transform_indices = @transform_2, window_bounds = array<i64: 1, 128>}, {transform_indices = @transform_3, window_bounds = array<i64: 1, 8, 8, 128>}, {transform_indices = @transform_4, window_bounds = array<i64: 1, 1, 128>}]} {
    %c0 = arith.constant 0 : index
    %c0_0 = arith.constant 0 : index
    %c0_1 = arith.constant 0 : index
    %c0_2 = arith.constant 0 : index
    %0 = vector.load %arg1[%c0, %c0_0, %c0_1, %c0_2] : memref<1x10x10x128xbf16, #tpu.memory_space<vmem>>, vector<1x10x10x128xbf16>
    %1 = vector.shape_cast %0 : vector<1x10x10x128xbf16> to vector<10x10x128xbf16>
    %2 = arith.extf %1 : vector<10x10x128xbf16> to vector<10x10x128xf32>
    %c0_3 = arith.constant 0 : index
    %c0_4 = arith.constant 0 : index
    %3 = vector.load %arg2[%c0_3, %c0_4] : memref<9x128xf32, #tpu.memory_space<vmem>>, vector<9x128xf32>
    %cst = arith.constant 0.000000e+00 : f32
    %4 = vector.broadcast %cst : f32 to vector<8x8x128xf32>
    %5 = vector.extract_strided_slice %2 {offsets = [0, 0, 0], sizes = [8, 10, 128], strides = [1, 1, 1]} : vector<10x10x128xf32> to vector<8x10x128xf32>
    %6 = vector.extract_strided_slice %5 {offsets = [0, 0, 0], sizes = [8, 8, 128], strides = [1, 1, 1]} : vector<8x10x128xf32> to vector<8x8x128xf32>
    %7 = vector.extract_strided_slice %3 {offsets = [0, 0], sizes = [1, 128], strides = [1, 1]} : vector<9x128xf32> to vector<1x128xf32>
    %8 = vector.shape_cast %7 : vector<1x128xf32> to vector<128xf32>
    %9 = vector.shape_cast %8 : vector<128xf32> to vector<1x1x128xf32>
    %10 = vector.broadcast %9 : vector<1x1x128xf32> to vector<8x8x128xf32>
    %11 = arith.mulf %6, %10 : vector<8x8x128xf32>
    %12 = arith.addf %4, %11 : vector<8x8x128xf32>
    %13 = vector.extract_strided_slice %5 {offsets = [0, 1, 0], sizes = [8, 8, 128], strides = [1, 1, 1]} : vector<8x10x128xf32> to vector<8x8x128xf32>
    %14 = vector.extract_strided_slice %3 {offsets = [1, 0], sizes = [1, 128], strides = [1, 1]} : vector<9x128xf32> to vector<1x128xf32>
    %15 = vector.shape_cast %14 : vector<1x128xf32> to vector<128xf32>
    %16 = vector.shape_cast %15 : vector<128xf32> to vector<1x1x128xf32>
    %17 = vector.broadcast %16 : vector<1x1x128xf32> to vector<8x8x128xf32>
    %18 = arith.mulf %13, %17 : vector<8x8x128xf32>
    %19 = arith.addf %12, %18 : vector<8x8x128xf32>
    %20 = vector.extract_strided_slice %5 {offsets = [0, 2, 0], sizes = [8, 8, 128], strides = [1, 1, 1]} : vector<8x10x128xf32> to vector<8x8x128xf32>
    %21 = vector.extract_strided_slice %3 {offsets = [2, 0], sizes = [1, 128], strides = [1, 1]} : vector<9x128xf32> to vector<1x128xf32>
    %22 = vector.shape_cast %21 : vector<1x128xf32> to vector<128xf32>
    %23 = vector.shape_cast %22 : vector<128xf32> to vector<1x1x128xf32>
    %24 = vector.broadcast %23 : vector<1x1x128xf32> to vector<8x8x128xf32>
    %25 = arith.mulf %20, %24 : vector<8x8x128xf32>
    %26 = arith.addf %19, %25 : vector<8x8x128xf32>
    %27 = vector.extract_strided_slice %2 {offsets = [1, 0, 0], sizes = [8, 10, 128], strides = [1, 1, 1]} : vector<10x10x128xf32> to vector<8x10x128xf32>
    %28 = vector.extract_strided_slice %27 {offsets = [0, 0, 0], sizes = [8, 8, 128], strides = [1, 1, 1]} : vector<8x10x128xf32> to vector<8x8x128xf32>
    %29 = vector.extract_strided_slice %3 {offsets = [3, 0], sizes = [1, 128], strides = [1, 1]} : vector<9x128xf32> to vector<1x128xf32>
    %30 = vector.shape_cast %29 : vector<1x128xf32> to vector<128xf32>
    %31 = vector.shape_cast %30 : vector<128xf32> to vector<1x1x128xf32>
    %32 = vector.broadcast %31 : vector<1x1x128xf32> to vector<8x8x128xf32>
    %33 = arith.mulf %28, %32 : vector<8x8x128xf32>
    %34 = arith.addf %26, %33 : vector<8x8x128xf32>
    %35 = vector.extract_strided_slice %27 {offsets = [0, 1, 0], sizes = [8, 8, 128], strides = [1, 1, 1]} : vector<8x10x128xf32> to vector<8x8x128xf32>
    %36 = vector.extract_strided_slice %3 {offsets = [4, 0], sizes = [1, 128], strides = [1, 1]} : vector<9x128xf32> to vector<1x128xf32>
    %37 = vector.shape_cast %36 : vector<1x128xf32> to vector<128xf32>
    %38 = vector.shape_cast %37 : vector<128xf32> to vector<1x1x128xf32>
    %39 = vector.broadcast %38 : vector<1x1x128xf32> to vector<8x8x128xf32>
    %40 = arith.mulf %35, %39 : vector<8x8x128xf32>
    %41 = arith.addf %34, %40 : vector<8x8x128xf32>
    %42 = vector.extract_strided_slice %27 {offsets = [0, 2, 0], sizes = [8, 8, 128], strides = [1, 1, 1]} : vector<8x10x128xf32> to vector<8x8x128xf32>
    %43 = vector.extract_strided_slice %3 {offsets = [5, 0], sizes = [1, 128], strides = [1, 1]} : vector<9x128xf32> to vector<1x128xf32>
    %44 = vector.shape_cast %43 : vector<1x128xf32> to vector<128xf32>
    %45 = vector.shape_cast %44 : vector<128xf32> to vector<1x1x128xf32>
    %46 = vector.broadcast %45 : vector<1x1x128xf32> to vector<8x8x128xf32>
    %47 = arith.mulf %42, %46 : vector<8x8x128xf32>
    %48 = arith.addf %41, %47 : vector<8x8x128xf32>
    %49 = vector.extract_strided_slice %2 {offsets = [2, 0, 0], sizes = [8, 10, 128], strides = [1, 1, 1]} : vector<10x10x128xf32> to vector<8x10x128xf32>
    %50 = vector.extract_strided_slice %49 {offsets = [0, 0, 0], sizes = [8, 8, 128], strides = [1, 1, 1]} : vector<8x10x128xf32> to vector<8x8x128xf32>
    %51 = vector.extract_strided_slice %3 {offsets = [6, 0], sizes = [1, 128], strides = [1, 1]} : vector<9x128xf32> to vector<1x128xf32>
    %52 = vector.shape_cast %51 : vector<1x128xf32> to vector<128xf32>
    %53 = vector.shape_cast %52 : vector<128xf32> to vector<1x1x128xf32>
    %54 = vector.broadcast %53 : vector<1x1x128xf32> to vector<8x8x128xf32>
    %55 = arith.mulf %50, %54 : vector<8x8x128xf32>
    %56 = arith.addf %48, %55 : vector<8x8x128xf32>
    %57 = vector.extract_strided_slice %49 {offsets = [0, 1, 0], sizes = [8, 8, 128], strides = [1, 1, 1]} : vector<8x10x128xf32> to vector<8x8x128xf32>
    %58 = vector.extract_strided_slice %3 {offsets = [7, 0], sizes = [1, 128], strides = [1, 1]} : vector<9x128xf32> to vector<1x128xf32>
    %59 = vector.shape_cast %58 : vector<1x128xf32> to vector<128xf32>
    %60 = vector.shape_cast %59 : vector<128xf32> to vector<1x1x128xf32>
    %61 = vector.broadcast %60 : vector<1x1x128xf32> to vector<8x8x128xf32>
    %62 = arith.mulf %57, %61 : vector<8x8x128xf32>
    %63 = arith.addf %56, %62 : vector<8x8x128xf32>
    %64 = vector.extract_strided_slice %49 {offsets = [0, 2, 0], sizes = [8, 8, 128], strides = [1, 1, 1]} : vector<8x10x128xf32> to vector<8x8x128xf32>
    %65 = vector.extract_strided_slice %3 {offsets = [8, 0], sizes = [1, 128], strides = [1, 1]} : vector<9x128xf32> to vector<1x128xf32>
    %66 = vector.shape_cast %65 : vector<1x128xf32> to vector<128xf32>
    %67 = vector.shape_cast %66 : vector<128xf32> to vector<1x1x128xf32>
    %68 = vector.broadcast %67 : vector<1x1x128xf32> to vector<8x8x128xf32>
    %69 = arith.mulf %64, %68 : vector<8x8x128xf32>
    %70 = arith.addf %63, %69 : vector<8x8x128xf32>
    %c0_5 = arith.constant 0 : index
    %c0_6 = arith.constant 0 : index
    %71 = vector.load %arg3[%c0_5, %c0_6] : memref<1x128xf32, #tpu.memory_space<vmem>>, vector<1x128xf32>
    %72 = vector.shape_cast %71 : vector<1x128xf32> to vector<128xf32>
    %73 = vector.shape_cast %72 : vector<128xf32> to vector<1x1x128xf32>
    %74 = vector.broadcast %73 : vector<1x1x128xf32> to vector<8x8x128xf32>
    %75 = arith.addf %70, %74 : vector<8x8x128xf32>
    %76 = arith.negf %75 : vector<8x8x128xf32>
    %77 = math.exp %76 : vector<8x8x128xf32>
    %cst_7 = arith.constant 1.000000e+00 : f32
    %78 = vector.broadcast %cst_7 : f32 to vector<8x8x128xf32>
    %79 = arith.addf %78, %77 : vector<8x8x128xf32>
    %80 = arith.divf %78, %79 : vector<8x8x128xf32>
    %81 = arith.mulf %75, %80 : vector<8x8x128xf32>
    %82 = arith.truncf %81 : vector<8x8x128xf32> to vector<8x8x128xbf16>
    %c0_8 = arith.constant 0 : index
    %c0_9 = arith.constant 0 : index
    %c0_10 = arith.constant 0 : index
    %c0_11 = arith.constant 0 : index
    %83 = vector.load %arg4[%c0_8, %c0_9, %c0_10, %c0_11] : memref<1x8x8x128xbf16, #tpu.memory_space<vmem>>, vector<1x8x8x128xbf16>
    %84 = vector.shape_cast %83 : vector<1x8x8x128xbf16> to vector<8x8x128xbf16>
    %85 = vector.shape_cast %82 : vector<8x8x128xbf16> to vector<1x8x8x128xbf16>
    tpu.vector_store %arg4[%c0_8, %c0_9, %c0_10, %c0_11], %85 {strides = array<i32>} : memref<1x8x8x128xbf16, #tpu.memory_space<vmem>>, vector<1x8x8x128xbf16>,
    %86 = vector.shape_cast %81 : vector<8x8x128xf32> to vector<64x128xf32>
    %cst_12 = arith.constant dense<0.000000e+00> : vector<128xf32>
    %87 = vector.multi_reduction <add>, %86, %cst_12 [0] : vector<64x128xf32> to vector<128xf32>
    %88 = vector.shape_cast %87 : vector<128xf32> to vector<1x128xf32>
    %cst_13 = arith.constant 1.562500e-02 : f32
    %89 = vector.broadcast %cst_13 : f32 to vector<1x128xf32>
    %90 = arith.mulf %88, %89 : vector<1x128xf32>
    %91 = arith.truncf %90 : vector<1x128xf32> to vector<1x128xbf16>
    %c0_14 = arith.constant 0 : index
    %c0_15 = arith.constant 0 : index
    %c0_16 = arith.constant 0 : index
    %92 = vector.load %arg5[%c0_14, %c0_15, %c0_16] : memref<1x1x128xbf16, #tpu.memory_space<vmem>>, vector<1x1x128xbf16>
    %93 = vector.shape_cast %92 : vector<1x1x128xbf16> to vector<1x128xbf16>
    %94 = vector.shape_cast %91 : vector<1x128xbf16> to vector<1x1x128xbf16>
    tpu.vector_store %arg5[%c0_14, %c0_15, %c0_16], %94 {strides = array<i32>} : memref<1x1x128xbf16, #tpu.memory_space<vmem>>, vector<1x1x128xbf16>,
    return
  }
  func.func @transform_0(%arg0: i32) -> (i32, i32, i32, i32) {
    %c0_i32 = arith.constant 0 : i32
    %c0_i32_0 = arith.constant 0 : i32
    %c0_i32_1 = arith.constant 0 : i32
    %c0_i32_2 = arith.constant 0 : i32
    return %arg0, %c0_i32, %c0_i32_0, %c0_i32_1 : i32, i32, i32, i32
  }
  func.func @transform_1(%arg0: i32) -> (i32, i32) {
    %c0_i32 = arith.constant 0 : i32
    %c0_i32_0 = arith.constant 0 : i32
    %c0_i32_1 = arith.constant 0 : i32
    return %c0_i32, %c0_i32_0 : i32, i32
  }
  func.func @transform_2(%arg0: i32) -> (i32, i32) {
    %c0_i32 = arith.constant 0 : i32
    %c0_i32_0 = arith.constant 0 : i32
    %c0_i32_1 = arith.constant 0 : i32
    return %c0_i32, %c0_i32_0 : i32, i32
  }
  func.func @transform_3(%arg0: i32) -> (i32, i32, i32, i32) {
    %c0_i32 = arith.constant 0 : i32
    %c0_i32_0 = arith.constant 0 : i32
    %c0_i32_1 = arith.constant 0 : i32
    %c0_i32_2 = arith.constant 0 : i32
    return %arg0, %c0_i32, %c0_i32_0, %c0_i32_1 : i32, i32, i32, i32
  }
  func.func @transform_4(%arg0: i32) -> (i32, i32, i32) {
    %c0_i32 = arith.constant 0 : i32
    %c0_i32_0 = arith.constant 0 : i32
    %c0_i32_1 = arith.constant 0 : i32
    return %arg0, %c0_i32, %c0_i32_0 : i32, i32, i32
  }
}

module attributes {stable_mosaic.version = 11 : i64} {
  func.func @_se_kernel(%arg0: i32, %arg1: memref<2x1x128xbf16, #tpu.memory_space<vmem>>, %arg2: memref<128x8xbf16, #tpu.memory_space<vmem>>, %arg3: memref<1x8xf32, #tpu.memory_space<vmem>>, %arg4: memref<8x128xbf16, #tpu.memory_space<vmem>>, %arg5: memref<1x128xf32, #tpu.memory_space<vmem>>, %arg6: memref<2x1x128xbf16, #tpu.memory_space<vmem>>) attributes {dimension_semantics = [#tpu.dimension_semantics<arbitrary>], iteration_bounds = array<i64: 1>, scalar_prefetch = 0 : i64, scratch_operands = 0 : i64, tpu.core_type = #tpu.core_type<tc>, window_params = [{pipeline_mode = #tpu.pipeline_mode<synchronous>, transform_indices = @transform_0, window_bounds = array<i64: 2, 1, 128>}, {pipeline_mode = #tpu.pipeline_mode<synchronous>, transform_indices = @transform_1, window_bounds = array<i64: 128, 8>}, {pipeline_mode = #tpu.pipeline_mode<synchronous>, transform_indices = @transform_2, window_bounds = array<i64: 1, 8>}, {pipeline_mode = #tpu.pipeline_mode<synchronous>, transform_indices = @transform_3, window_bounds = array<i64: 8, 128>}, {pipeline_mode = #tpu.pipeline_mode<synchronous>, transform_indices = @transform_4, window_bounds = array<i64: 1, 128>}, {pipeline_mode = #tpu.pipeline_mode<synchronous>, transform_indices = @transform_5, window_bounds = array<i64: 2, 1, 128>}]} {
    %c0 = arith.constant 0 : index
    %c0_0 = arith.constant 0 : index
    %c0_1 = arith.constant 0 : index
    %0 = vector.load %arg1[%c0, %c0_0, %c0_1] : memref<2x1x128xbf16, #tpu.memory_space<vmem>>, vector<2x1x128xbf16>
    %1 = vector.shape_cast %0 : vector<2x1x128xbf16> to vector<2x128xbf16>
    %c0_2 = arith.constant 0 : index
    %c0_3 = arith.constant 0 : index
    %2 = vector.load %arg2[%c0_2, %c0_3] : memref<128x8xbf16, #tpu.memory_space<vmem>>, vector<128x8xbf16>
    %cst = arith.constant dense<0.000000e+00> : vector<2x8xf32>
    %3 = tpu.matmul %1, %2, %cst {dimension_numbers = #tpu.dot_dimension_numbers<[1], [0], [0], [1], [0, 0, 1, 1], [], []>} : vector<2x128xbf16>, vector<128x8xbf16>, vector<2x8xf32> -> vector<2x8xf32>
    %c0_4 = arith.constant 0 : index
    %c0_5 = arith.constant 0 : index
    %4 = vector.load %arg3[%c0_4, %c0_5] : memref<1x8xf32, #tpu.memory_space<vmem>>, vector<1x8xf32>
    %5 = vector.broadcast %4 : vector<1x8xf32> to vector<2x8xf32>
    %6 = arith.addf %3, %5 : vector<2x8xf32>
    %7 = arith.negf %6 : vector<2x8xf32>
    %8 = math.exp %7 : vector<2x8xf32>
    %cst_6 = arith.constant 1.000000e+00 : f32
    %9 = vector.broadcast %cst_6 : f32 to vector<2x8xf32>
    %10 = arith.addf %9, %8 : vector<2x8xf32>
    %11 = arith.divf %9, %10 : vector<2x8xf32>
    %12 = arith.mulf %6, %11 : vector<2x8xf32>
    %13 = arith.truncf %12 : vector<2x8xf32> to vector<2x8xbf16>
    %c0_7 = arith.constant 0 : index
    %c0_8 = arith.constant 0 : index
    %14 = vector.load %arg4[%c0_7, %c0_8] : memref<8x128xbf16, #tpu.memory_space<vmem>>, vector<8x128xbf16>
    %cst_9 = arith.constant dense<0.000000e+00> : vector<2x128xf32>
    %15 = tpu.matmul %13, %14, %cst_9 {dimension_numbers = #tpu.dot_dimension_numbers<[1], [0], [0], [1], [0, 0, 1, 1], [], []>} : vector<2x8xbf16>, vector<8x128xbf16>, vector<2x128xf32> -> vector<2x128xf32>
    %c0_10 = arith.constant 0 : index
    %c0_11 = arith.constant 0 : index
    %16 = vector.load %arg5[%c0_10, %c0_11] : memref<1x128xf32, #tpu.memory_space<vmem>>, vector<1x128xf32>
    %17 = vector.broadcast %16 : vector<1x128xf32> to vector<2x128xf32>
    %18 = arith.addf %15, %17 : vector<2x128xf32>
    %19 = arith.negf %18 : vector<2x128xf32>
    %20 = math.exp %19 : vector<2x128xf32>
    %cst_12 = arith.constant 1.000000e+00 : f32
    %21 = vector.broadcast %cst_12 : f32 to vector<2x128xf32>
    %22 = arith.addf %21, %20 : vector<2x128xf32>
    %23 = arith.divf %21, %22 : vector<2x128xf32>
    %24 = vector.shape_cast %23 : vector<2x128xf32> to vector<2x1x128xf32>
    %25 = arith.truncf %24 : vector<2x1x128xf32> to vector<2x1x128xbf16>
    %c0_13 = arith.constant 0 : index
    %c0_14 = arith.constant 0 : index
    %c0_15 = arith.constant 0 : index
    %26 = vector.load %arg6[%c0_13, %c0_14, %c0_15] : memref<2x1x128xbf16, #tpu.memory_space<vmem>>, vector<2x1x128xbf16>
    tpu.vector_store %arg6[%c0_13, %c0_14, %c0_15], %25 {strides = array<i32>} : memref<2x1x128xbf16, #tpu.memory_space<vmem>>, vector<2x1x128xbf16>,
    return
  }
  func.func @transform_0(%arg0: i32) -> (i32, i32, i32) {
    %c0_i32 = arith.constant 0 : i32
    %c0_i32_0 = arith.constant 0 : i32
    %c0_i32_1 = arith.constant 0 : i32
    %c0_i32_2 = arith.constant 0 : i32
    return %c0_i32, %c0_i32_0, %c0_i32_1 : i32, i32, i32
  }
  func.func @transform_1(%arg0: i32) -> (i32, i32) {
    %c0_i32 = arith.constant 0 : i32
    %c0_i32_0 = arith.constant 0 : i32
    %c0_i32_1 = arith.constant 0 : i32
    return %c0_i32, %c0_i32_0 : i32, i32
  }
  func.func @transform_2(%arg0: i32) -> (i32, i32) {
    %c0_i32 = arith.constant 0 : i32
    %c0_i32_0 = arith.constant 0 : i32
    %c0_i32_1 = arith.constant 0 : i32
    return %c0_i32, %c0_i32_0 : i32, i32
  }
  func.func @transform_3(%arg0: i32) -> (i32, i32) {
    %c0_i32 = arith.constant 0 : i32
    %c0_i32_0 = arith.constant 0 : i32
    %c0_i32_1 = arith.constant 0 : i32
    return %c0_i32, %c0_i32_0 : i32, i32
  }
  func.func @transform_4(%arg0: i32) -> (i32, i32) {
    %c0_i32 = arith.constant 0 : i32
    %c0_i32_0 = arith.constant 0 : i32
    %c0_i32_1 = arith.constant 0 : i32
    return %c0_i32, %c0_i32_0 : i32, i32
  }
  func.func @transform_5(%arg0: i32) -> (i32, i32, i32) {
    %c0_i32 = arith.constant 0 : i32
    %c0_i32_0 = arith.constant 0 : i32
    %c0_i32_1 = arith.constant 0 : i32
    %c0_i32_2 = arith.constant 0 : i32
    return %c0_i32, %c0_i32_0, %c0_i32_1 : i32, i32, i32
  }
}

module attributes {stable_mosaic.version = 11 : i64} {
  func.func @_proj_head_gap_kernel(%arg0: i32, %arg1: i32, %arg2: memref<64x128xbf16, #tpu.memory_space<vmem>>, %arg3: memref<1x1x128xbf16, #tpu.memory_space<vmem>>, %arg4: memref<128x32xbf16, #tpu.memory_space<vmem>>, %arg5: memref<1x32xf32, #tpu.memory_space<vmem>>, %arg6: memref<64x32xbf16, #tpu.memory_space<vmem>>, %arg7: memref<32x1280xbf16, #tpu.memory_space<vmem>>, %arg8: memref<1x1280xf32, #tpu.memory_space<vmem>>, %arg9: memref<1x1x1280xbf16, #tpu.memory_space<vmem>>, %arg10: memref<1x1280xf32, #tpu.memory_space<vmem>>) attributes {dimension_semantics = [#tpu.dimension_semantics<parallel>, #tpu.dimension_semantics<arbitrary>], iteration_bounds = array<i64: 2, 1>, scalar_prefetch = 0 : i64, scratch_operands = 1 : i64, tpu.core_type = #tpu.core_type<tc>, window_params = [{transform_indices = @transform_0, window_bounds = array<i64: 64, 128>}, {transform_indices = @transform_1, window_bounds = array<i64: 1, 1, 128>}, {pipeline_mode = #tpu.pipeline_mode<synchronous>, transform_indices = @transform_2, window_bounds = array<i64: 128, 32>}, {pipeline_mode = #tpu.pipeline_mode<synchronous>, transform_indices = @transform_3, window_bounds = array<i64: 1, 32>}, {transform_indices = @transform_4, window_bounds = array<i64: 64, 32>}, {pipeline_mode = #tpu.pipeline_mode<synchronous>, transform_indices = @transform_5, window_bounds = array<i64: 32, 1280>}, {pipeline_mode = #tpu.pipeline_mode<synchronous>, transform_indices = @transform_6, window_bounds = array<i64: 1, 1280>}, {transform_indices = @transform_7, window_bounds = array<i64: 1, 1, 1280>}]} {
    %c0_i32 = arith.constant 0 : i32
    %0 = arith.cmpi eq, %arg1, %c0_i32 : i32
    %1 = arith.extui %0 : i1 to i32
    %c0_i32_0 = arith.constant 0 : i32
    %2 = arith.cmpi ne, %1, %c0_i32_0 : i32
    scf.if %2 {
      %cst_24 = arith.constant 0.000000e+00 : f32
      %36 = vector.broadcast %cst_24 : f32 to vector<1x1280xf32>
      %c0_25 = arith.constant 0 : index
      %c0_26 = arith.constant 0 : index
      %37 = vector.load %arg10[%c0_25, %c0_26] : memref<1x1280xf32, #tpu.memory_space<vmem>>, vector<1x1280xf32>
      tpu.vector_store %arg10[%c0_25, %c0_26], %36 {strides = array<i32>} : memref<1x1280xf32, #tpu.memory_space<vmem>>, vector<1x1280xf32>,
    } else {
    }
    %c0 = arith.constant 0 : index
    %c0_1 = arith.constant 0 : index
    %3 = vector.load %arg2[%c0, %c0_1] : memref<64x128xbf16, #tpu.memory_space<vmem>>, vector<64x128xbf16>
    %c0_2 = arith.constant 0 : index
    %c0_3 = arith.constant 0 : index
    %c0_4 = arith.constant 0 : index
    %4 = vector.load %arg3[%c0_2, %c0_3, %c0_4] : memref<1x1x128xbf16, #tpu.memory_space<vmem>>, vector<1x1x128xbf16>
    %5 = vector.shape_cast %4 : vector<1x1x128xbf16> to vector<1x128xbf16>
    %6 = vector.broadcast %5 : vector<1x128xbf16> to vector<64x128xbf16>
    %7 = arith.mulf %3, %6 : vector<64x128xbf16>
    %c0_5 = arith.constant 0 : index
    %c0_6 = arith.constant 0 : index
    %8 = vector.load %arg4[%c0_5, %c0_6] : memref<128x32xbf16, #tpu.memory_space<vmem>>, vector<128x32xbf16>
    %cst = arith.constant dense<0.000000e+00> : vector<64x32xf32>
    %9 = tpu.matmul %7, %8, %cst {dimension_numbers = #tpu.dot_dimension_numbers<[1], [0], [0], [1], [0, 0, 1, 1], [], []>} : vector<64x128xbf16>, vector<128x32xbf16>, vector<64x32xf32> -> vector<64x32xf32>
    %c0_7 = arith.constant 0 : index
    %c0_8 = arith.constant 0 : index
    %10 = vector.load %arg5[%c0_7, %c0_8] : memref<1x32xf32, #tpu.memory_space<vmem>>, vector<1x32xf32>
    %11 = vector.broadcast %10 : vector<1x32xf32> to vector<64x32xf32>
    %12 = arith.addf %9, %11 : vector<64x32xf32>
    %c0_9 = arith.constant 0 : index
    %c0_10 = arith.constant 0 : index
    %13 = vector.load %arg6[%c0_9, %c0_10] : memref<64x32xbf16, #tpu.memory_space<vmem>>, vector<64x32xbf16>
    %14 = arith.extf %13 : vector<64x32xbf16> to vector<64x32xf32>
    %15 = arith.addf %12, %14 : vector<64x32xf32>
    %16 = arith.truncf %15 : vector<64x32xf32> to vector<64x32xbf16>
    %c0_11 = arith.constant 0 : index
    %c0_12 = arith.constant 0 : index
    %17 = vector.load %arg7[%c0_11, %c0_12] : memref<32x1280xbf16, #tpu.memory_space<vmem>>, vector<32x1280xbf16>
    %cst_13 = arith.constant dense<0.000000e+00> : vector<64x1280xf32>
    %18 = tpu.matmul %16, %17, %cst_13 {dimension_numbers = #tpu.dot_dimension_numbers<[1], [0], [0], [1], [0, 0, 1, 1], [], []>} : vector<64x32xbf16>, vector<32x1280xbf16>, vector<64x1280xf32> -> vector<64x1280xf32>
    %c0_14 = arith.constant 0 : index
    %c0_15 = arith.constant 0 : index
    %19 = vector.load %arg8[%c0_14, %c0_15] : memref<1x1280xf32, #tpu.memory_space<vmem>>, vector<1x1280xf32>
    %20 = vector.broadcast %19 : vector<1x1280xf32> to vector<64x1280xf32>
    %21 = arith.addf %18, %20 : vector<64x1280xf32>
    %22 = arith.negf %21 : vector<64x1280xf32>
    %23 = math.exp %22 : vector<64x1280xf32>
    %cst_16 = arith.constant 1.000000e+00 : f32
    %24 = vector.broadcast %cst_16 : f32 to vector<64x1280xf32>
    %25 = arith.addf %24, %23 : vector<64x1280xf32>
    %26 = arith.divf %24, %25 : vector<64x1280xf32>
    %27 = arith.mulf %21, %26 : vector<64x1280xf32>
    %c0_17 = arith.constant 0 : index
    %c0_18 = arith.constant 0 : index
    %28 = vector.load %arg10[%c0_17, %c0_18] : memref<1x1280xf32, #tpu.memory_space<vmem>>, vector<1x1280xf32>
    %cst_19 = arith.constant dense<0.000000e+00> : vector<1280xf32>
    %29 = vector.multi_reduction <add>, %27, %cst_19 [0] : vector<64x1280xf32> to vector<1280xf32>
    %30 = vector.shape_cast %29 : vector<1280xf32> to vector<1x1280xf32>
    %31 = arith.addf %28, %30 : vector<1x1280xf32>
    %c0_20 = arith.constant 0 : index
    %c0_21 = arith.constant 0 : index
    %32 = vector.load %arg10[%c0_20, %c0_21] : memref<1x1280xf32, #tpu.memory_space<vmem>>, vector<1x1280xf32>
    tpu.vector_store %arg10[%c0_20, %c0_21], %31 {strides = array<i32>} : memref<1x1280xf32, #tpu.memory_space<vmem>>, vector<1x1280xf32>,
    %c0_i32_22 = arith.constant 0 : i32
    %33 = arith.cmpi eq, %arg1, %c0_i32_22 : i32
    %34 = arith.extui %33 : i1 to i32
    %c0_i32_23 = arith.constant 0 : i32
    %35 = arith.cmpi ne, %34, %c0_i32_23 : i32
    scf.if %35 {
      %c0_24 = arith.constant 0 : index
      %c0_25 = arith.constant 0 : index
      %36 = vector.load %arg10[%c0_24, %c0_25] : memref<1x1280xf32, #tpu.memory_space<vmem>>, vector<1x1280xf32>
      %cst_26 = arith.constant 1.562500e-02 : f32
      %37 = vector.broadcast %cst_26 : f32 to vector<1x1280xf32>
      %38 = arith.mulf %36, %37 : vector<1x1280xf32>
      %39 = arith.truncf %38 : vector<1x1280xf32> to vector<1x1280xbf16>
      %c0_27 = arith.constant 0 : index
      %c0_28 = arith.constant 0 : index
      %c0_29 = arith.constant 0 : index
      %40 = vector.load %arg9[%c0_27, %c0_28, %c0_29] : memref<1x1x1280xbf16, #tpu.memory_space<vmem>>, vector<1x1x1280xbf16>
      %41 = vector.shape_cast %40 : vector<1x1x1280xbf16> to vector<1x1280xbf16>
      %42 = vector.shape_cast %39 : vector<1x1280xbf16> to vector<1x1x1280xbf16>
      tpu.vector_store %arg9[%c0_27, %c0_28, %c0_29], %42 {strides = array<i32>} : memref<1x1x1280xbf16, #tpu.memory_space<vmem>>, vector<1x1x1280xbf16>,
    } else {
    }
    return
  }
  func.func @transform_0(%arg0: i32, %arg1: i32) -> (i32, i32) {
    %c1_i32 = arith.constant 1 : i32
    %0 = arith.muli %arg0, %c1_i32 : i32
    %1 = arith.addi %0, %arg1 : i32
    %c0_i32 = arith.constant 0 : i32
    %c0_i32_0 = arith.constant 0 : i32
    return %1, %c0_i32 : i32, i32
  }
  func.func @transform_1(%arg0: i32, %arg1: i32) -> (i32, i32, i32) {
    %c0_i32 = arith.constant 0 : i32
    %c0_i32_0 = arith.constant 0 : i32
    %c0_i32_1 = arith.constant 0 : i32
    return %arg0, %c0_i32, %c0_i32_0 : i32, i32, i32
  }
  func.func @transform_2(%arg0: i32, %arg1: i32) -> (i32, i32) {
    %c0_i32 = arith.constant 0 : i32
    %c0_i32_0 = arith.constant 0 : i32
    %c0_i32_1 = arith.constant 0 : i32
    return %c0_i32, %c0_i32_0 : i32, i32
  }
  func.func @transform_3(%arg0: i32, %arg1: i32) -> (i32, i32) {
    %c0_i32 = arith.constant 0 : i32
    %c0_i32_0 = arith.constant 0 : i32
    %c0_i32_1 = arith.constant 0 : i32
    return %c0_i32, %c0_i32_0 : i32, i32
  }
  func.func @transform_4(%arg0: i32, %arg1: i32) -> (i32, i32) {
    %c1_i32 = arith.constant 1 : i32
    %0 = arith.muli %arg0, %c1_i32 : i32
    %1 = arith.addi %0, %arg1 : i32
    %c0_i32 = arith.constant 0 : i32
    %c0_i32_0 = arith.constant 0 : i32
    return %1, %c0_i32 : i32, i32
  }
  func.func @transform_5(%arg0: i32, %arg1: i32) -> (i32, i32) {
    %c0_i32 = arith.constant 0 : i32
    %c0_i32_0 = arith.constant 0 : i32
    %c0_i32_1 = arith.constant 0 : i32
    return %c0_i32, %c0_i32_0 : i32, i32
  }
  func.func @transform_6(%arg0: i32, %arg1: i32) -> (i32, i32) {
    %c0_i32 = arith.constant 0 : i32
    %c0_i32_0 = arith.constant 0 : i32
    %c0_i32_1 = arith.constant 0 : i32
    return %c0_i32, %c0_i32_0 : i32, i32
  }
  func.func @transform_7(%arg0: i32, %arg1: i32) -> (i32, i32, i32) {
    %c0_i32 = arith.constant 0 : i32
    %c0_i32_0 = arith.constant 0 : i32
    %c0_i32_1 = arith.constant 0 : i32
    return %arg0, %c0_i32, %c0_i32_0 : i32, i32, i32
  }
}

module attributes {stable_mosaic.version = 11 : i64} {
  func.func @_mm_kernel(%arg0: i32, %arg1: i32, %arg2: i32, %arg3: memref<8x1280xbf16, #tpu.memory_space<vmem>>, %arg4: memref<1280x128xbf16, #tpu.memory_space<vmem>>, %arg5: memref<1x128xf32, #tpu.memory_space<vmem>>, %arg6: memref<8x128xf32, #tpu.memory_space<vmem>>, %arg7: memref<8x128xf32, #tpu.memory_space<vmem>>) attributes {dimension_semantics = [#tpu.dimension_semantics<parallel>, #tpu.dimension_semantics<parallel>, #tpu.dimension_semantics<arbitrary>], iteration_bounds = array<i64: 1, 1, 1>, scalar_prefetch = 0 : i64, scratch_operands = 1 : i64, tpu.core_type = #tpu.core_type<tc>, window_params = [{transform_indices = @transform_0, window_bounds = array<i64: 8, 1280>}, {transform_indices = @transform_1, window_bounds = array<i64: 1280, 128>}, {transform_indices = @transform_2, window_bounds = array<i64: 1, 128>}, {transform_indices = @transform_3, window_bounds = array<i64: 8, 128>}]} {
    %c0_i32 = arith.constant 0 : i32
    %0 = arith.cmpi eq, %arg2, %c0_i32 : i32
    %1 = arith.extui %0 : i1 to i32
    %c0_i32_0 = arith.constant 0 : i32
    %2 = arith.cmpi ne, %1, %c0_i32_0 : i32
    scf.if %2 {
      %cst_10 = arith.constant 0.000000e+00 : f32
      %12 = vector.broadcast %cst_10 : f32 to vector<8x128xf32>
      %c0_11 = arith.constant 0 : index
      %c0_12 = arith.constant 0 : index
      %13 = vector.load %arg7[%c0_11, %c0_12] : memref<8x128xf32, #tpu.memory_space<vmem>>, vector<8x128xf32>
      tpu.vector_store %arg7[%c0_11, %c0_12], %12 {strides = array<i32>} : memref<8x128xf32, #tpu.memory_space<vmem>>, vector<8x128xf32>,
    } else {
    }
    %c0 = arith.constant 0 : index
    %c0_1 = arith.constant 0 : index
    %3 = vector.load %arg7[%c0, %c0_1] : memref<8x128xf32, #tpu.memory_space<vmem>>, vector<8x128xf32>
    %c0_2 = arith.constant 0 : index
    %c0_3 = arith.constant 0 : index
    %4 = vector.load %arg3[%c0_2, %c0_3] : memref<8x1280xbf16, #tpu.memory_space<vmem>>, vector<8x1280xbf16>
    %c0_4 = arith.constant 0 : index
    %c0_5 = arith.constant 0 : index
    %5 = vector.load %arg4[%c0_4, %c0_5] : memref<1280x128xbf16, #tpu.memory_space<vmem>>, vector<1280x128xbf16>
    %cst = arith.constant dense<0.000000e+00> : vector<8x128xf32>
    %6 = tpu.matmul %4, %5, %cst {dimension_numbers = #tpu.dot_dimension_numbers<[1], [0], [0], [1], [0, 0, 1, 1], [], []>} : vector<8x1280xbf16>, vector<1280x128xbf16>, vector<8x128xf32> -> vector<8x128xf32>
    %7 = arith.addf %3, %6 : vector<8x128xf32>
    %c0_6 = arith.constant 0 : index
    %c0_7 = arith.constant 0 : index
    %8 = vector.load %arg7[%c0_6, %c0_7] : memref<8x128xf32, #tpu.memory_space<vmem>>, vector<8x128xf32>
    tpu.vector_store %arg7[%c0_6, %c0_7], %7 {strides = array<i32>} : memref<8x128xf32, #tpu.memory_space<vmem>>, vector<8x128xf32>,
    %c0_i32_8 = arith.constant 0 : i32
    %9 = arith.cmpi eq, %arg2, %c0_i32_8 : i32
    %10 = arith.extui %9 : i1 to i32
    %c0_i32_9 = arith.constant 0 : i32
    %11 = arith.cmpi ne, %10, %c0_i32_9 : i32
    scf.if %11 {
      %c0_10 = arith.constant 0 : index
      %c0_11 = arith.constant 0 : index
      %12 = vector.load %arg7[%c0_10, %c0_11] : memref<8x128xf32, #tpu.memory_space<vmem>>, vector<8x128xf32>
      %c0_12 = arith.constant 0 : index
      %c0_13 = arith.constant 0 : index
      %13 = vector.load %arg5[%c0_12, %c0_13] : memref<1x128xf32, #tpu.memory_space<vmem>>, vector<1x128xf32>
      %14 = vector.broadcast %13 : vector<1x128xf32> to vector<8x128xf32>
      %15 = arith.addf %12, %14 : vector<8x128xf32>
      %c0_14 = arith.constant 0 : index
      %c0_15 = arith.constant 0 : index
      %16 = vector.load %arg6[%c0_14, %c0_15] : memref<8x128xf32, #tpu.memory_space<vmem>>, vector<8x128xf32>
      tpu.vector_store %arg6[%c0_14, %c0_15], %15 {strides = array<i32>} : memref<8x128xf32, #tpu.memory_space<vmem>>, vector<8x128xf32>,
    } else {
    }
    return
  }
  func.func @transform_0(%arg0: i32, %arg1: i32, %arg2: i32) -> (i32, i32) {
    %c0_i32 = arith.constant 0 : i32
    return %arg0, %arg2 : i32, i32
  }
  func.func @transform_1(%arg0: i32, %arg1: i32, %arg2: i32) -> (i32, i32) {
    %c0_i32 = arith.constant 0 : i32
    return %arg2, %arg1 : i32, i32
  }
  func.func @transform_2(%arg0: i32, %arg1: i32, %arg2: i32) -> (i32, i32) {
    %c0_i32 = arith.constant 0 : i32
    %c0_i32_0 = arith.constant 0 : i32
    return %c0_i32, %arg1 : i32, i32
  }
  func.func @transform_3(%arg0: i32, %arg1: i32, %arg2: i32) -> (i32, i32) {
    %c0_i32 = arith.constant 0 : i32
    return %arg0, %arg1 : i32, i32
  }
}

</mosaic_0001>

<llo_original>
// kernel: net_forward.6
$region0: #{net_forward.6}
  #allocation0 [shape = 'u32[]', space=smem, size = 0x4, offset = 0x4, fixed_abs, tag = 'smem constant byte address 0x4 - core index']
  #allocation1 [shape = 'u32[144,128]{1,0:T(1,128)}', space=vmem, size = 0x12000, scoped, tag = 'internal scratch']
  #allocation2 [shape = 'f32[128,32]{1,0:T(8,128)}', space=vmem, size = 0x10000, scoped, tag = 'scratch operand']
  %s0 = inlined_call_operand.vmem [shape: bf16[128,32], index: 0, kind: input, shape index: {}]
  %s1 = inlined_call_operand.vmem [shape: bf16[32,32], index: 1, kind: input, shape index: {}]
  %s2 = inlined_call_operand.vmem [shape: f32[1,32], index: 2, kind: input, shape index: {}]
  %s3 = inlined_call_operand.vmem [shape: bf16[128,32], index: 3, kind: output, shape index: {}]
  %s4 = sld [smem:[#allocation0]]
  $region30: #{net_forward.6} parent=0
    _
  %s6 = ssub.s32 1, %s4
  %s7 = scalar_select 0, %s6, %s4
  // Predicated region
  $region2: #{net_forward.6} parent=0 // pred_check
    _
  $region3: #{net_forward.6} parent=0 // pred_check_branch
    %9 = sbr.rel (0) target = $region5
  $region4: #{net_forward.6} parent=0 // pred_region
    _
  $region5: #{net_forward.6} parent=0 // pred_fallthru
    _
  // Predicated region
  $region6: #{net_forward.6} parent=0 // pred_check
    _
  $region7: #{net_forward.6} parent=0 // pred_check_branch
    %11 = sbr.rel (0) target = $region9
  $region8: #{net_forward.6} parent=0 // pred_region
    _
  $region9: #{net_forward.6} parent=0 // pred_fallthru
    _
  // Predicated region
  $region10: #{net_forward.6} parent=0 // pred_check
    _
  $region11: #{net_forward.6} parent=0 // pred_check_branch
    %13 = sbr.rel (0) target = $region13
  $region12: #{net_forward.6} parent=0 // pred_region
    _
  $region13: #{net_forward.6} parent=0 // pred_fallthru
    _
  %p15 = scmp.eq.s32.totalorder 0, 0
  // Predicated region
  $region14: #{net_forward.6} parent=0 // pred_check
    %p16 = pneg %p15
  $region15: #{net_forward.6} parent=0 // pred_check_branch
    %18 = sbr.rel (%p16) target = $region17
  $region16: #{net_forward.6} parent=0 // pred_region
    %vm19 = vcmask 261120
    %20 = vst.msk [vmem:[#allocation2] sm:$0xff] %vm19, 0.0
    %21 = vst.msk [vmem:[#allocation2 + $0x8] sm:$0xff] %vm19, 0.0
    %22 = vst.msk [vmem:[#allocation2 + $0x10] sm:$0xff] %vm19, 0.0
    %23 = vst.msk [vmem:[#allocation2 + $0x18] sm:$0xff] %vm19, 0.0
    %24 = vst.msk [vmem:[#allocation2 + $0x20] sm:$0xff] %vm19, 0.0
    %25 = vst.msk [vmem:[#allocation2 + $0x28] sm:$0xff] %vm19, 0.0
    %26 = vst.msk [vmem:[#allocation2 + $0x30] sm:$0xff] %vm19, 0.0
    %27 = vst.msk [vmem:[#allocation2 + $0x38] sm:$0xff] %vm19, 0.0
    %28 = vst.msk [vmem:[#allocation2 + $0x40] sm:$0xff] %vm19, 0.0
    %29 = vst.msk [vmem:[#allocation2 + $0x48] sm:$0xff] %vm19, 0.0
    %30 = vst.msk [vmem:[#allocation2 + $0x50] sm:$0xff] %vm19, 0.0
    %31 = vst.msk [vmem:[#allocation2 + $0x58] sm:$0xff] %vm19, 0.0
    %32 = vst.msk [vmem:[#allocation2 + $0x60] sm:$0xff] %vm19, 0.0
    %33 = vst.msk [vmem:[#allocation2 + $0x68] sm:$0xff] %vm19, 0.0
    %34 = vst.msk [vmem:[#allocation2 + $0x70] sm:$0xff] %vm19, 0.0
    %35 = vst.msk [vmem:[#allocation2 + $0x78] sm:$0xff] %vm19, 0.0
  $region17: #{net_forward.6} parent=0 // pred_fallthru
    _
  %v36 = vld [vmem:[#allocation2] sm:$0xff]
  %v37 = vld [vmem:[#allocation2 + $0x8] sm:$0xff]
  %v38 = vld [vmem:[#allocation2 + $0x10] sm:$0xff]
  %v39 = vld [vmem:[#allocation2 + $0x18] sm:$0xff]
  %v40 = vld [vmem:[#allocation2 + $0x20] sm:$0xff]
  %v41 = vld [vmem:[#allocation2 + $0x28] sm:$0xff]
  %v42 = vld [vmem:[#allocation2 + $0x30] sm:$0xff]
  %v43 = vld [vmem:[#allocation2 + $0x38] sm:$0xff]
  %v44 = vld [vmem:[#allocation2 + $0x40] sm:$0xff]
  %v45 = vld [vmem:[#allocation2 + $0x48] sm:$0xff]
  %v46 = vld [vmem:[#allocation2 + $0x50] sm:$0xff]
  %v47 = vld [vmem:[#allocation2 + $0x58] sm:$0xff]
  %v48 = vld [vmem:[#allocation2 + $0x60] sm:$0xff]
  %v49 = vld [vmem:[#allocation2 + $0x68] sm:$0xff]
  %v50 = vld [vmem:[#allocation2 + $0x70] sm:$0xff]
  %v51 = vld [vmem:[#allocation2 + $0x78] sm:$0xff]
  %v52 = vld [vmem:[%s0] sm:$0xf]
  %v53 = vld [vmem:[%s0 + $0x4] sm:$0xf]
  %v54 = vld [vmem:[%s0 + $0x8] sm:$0xf]
  %v55 = vld [vmem:[%s0 + $0xc] sm:$0xf]
  %v56 = vld [vmem:[%s0 + $0x10] sm:$0xf]
  %v57 = vld [vmem:[%s0 + $0x14] sm:$0xf]
  %v58 = vld [vmem:[%s0 + $0x18] sm:$0xf]
  %v59 = vld [vmem:[%s0 + $0x1c] sm:$0xf]
  %v60 = vld [vmem:[%s0 + $0x20] sm:$0xf]
  %v61 = vld [vmem:[%s0 + $0x24] sm:$0xf]
  %v62 = vld [vmem:[%s0 + $0x28] sm:$0xf]
  %v63 = vld [vmem:[%s0 + $0x2c] sm:$0xf]
  %v64 = vld [vmem:[%s0 + $0x30] sm:$0xf]
  %v65 = vld [vmem:[%s0 + $0x34] sm:$0xf]
  %v66 = vld [vmem:[%s0 + $0x38] sm:$0xf]
  %v67 = vld [vmem:[%s0 + $0x3c] sm:$0xf]
  %v68 = vld [vmem:[%s1] sm:$0xf]
  %v69 = vld [vmem:[%s1 + $0x4] sm:$0xf]
  %v70 = vld [vmem:[%s1 + $0x8] sm:$0xf]
  %v71 = vld [vmem:[%s1 + $0xc] sm:$0xf]
  %v88 = vunpack.c.l.b16 %v52
  %v89 = vunpack.c.l.b16 %v53
  %v90 = vunpack.c.l.b16 %v54
  %v91 = vunpack.c.l.b16 %v55
  %v92 = vunpack.c.l.b16 %v56
  %v93 = vunpack.c.l.b16 %v57
  %v94 = vunpack.c.l.b16 %v58
  %v95 = vunpack.c.l.b16 %v59
  %v96 = vunpack.c.l.b16 %v60
  %v97 = vunpack.c.l.b16 %v61
  %v98 = vunpack.c.l.b16 %v62
  %v99 = vunpack.c.l.b16 %v63
  %v100 = vunpack.c.l.b16 %v64
  %v101 = vunpack.c.l.b16 %v65
  %v102 = vunpack.c.l.b16 %v66
  %v103 = vunpack.c.l.b16 %v67
  %v104 = vpack.c.b16 %v89, %v88
  %v105 = vpack.c.b16 %v91, %v90
  %v106 = vpack.c.b16 %v93, %v92
  %v107 = vpack.c.b16 %v95, %v94
  %v108 = vpack.c.b16 %v97, %v96
  %v109 = vpack.c.b16 %v99, %v98
  %v110 = vpack.c.b16 %v101, %v100
  %v111 = vpack.c.b16 %v103, %v102
  %v116 = vunpack.c.l.b16 %v68
  %v117 = vunpack.c.l.b16 %v69
  %v118 = vunpack.c.l.b16 %v70
  %v119 = vunpack.c.l.b16 %v71
  %v120 = vpack.c.b16 %v117, %v116
  %v121 = vpack.c.b16 %v119, %v118
  %vm124 = vcmask 261120
  %v126 = vsel %vm124, %v104, 0
  %v129 = vsel %vm124, %v105, 0
  %v132 = vsel %vm124, %v106, 0
  %v135 = vsel %vm124, %v107, 0
  %v138 = vsel %vm124, %v108, 0
  %v141 = vsel %vm124, %v109, 0
  %v144 = vsel %vm124, %v110, 0
  %v147 = vsel %vm124, %v111, 0
  %149 = vmatprep.subr.bf16.mxu0 0
  %150 = vmatpush1.bf16.msra.mxu0 0
  %151 = vmatprep.subr.bf16.mxu0 0
  %152 = vmatpush1.bf16.msra.mxu0 0
  %153 = vmatprep.subr.bf16.mxu0 0
  %154 = vmatpush1.bf16.msra.mxu0 0
  %155 = vmatprep.subr.bf16.mxu0 0
  %156 = vmatpush1.bf16.msra.mxu0 0
  %157 = vmatprep.subr.bf16.mxu0 0
  %158 = vmatpush1.bf16.msra.mxu0 0
  %159 = vmatprep.subr.bf16.mxu0 0
  %160 = vmatpush1.bf16.msra.mxu0 0
  %161 = vmatprep.subr.bf16.mxu0 0
  %162 = vmatpush1.bf16.msra.mxu0 %v121
  %163 = vmatprep.subr.bf16.mxu0 0
  %164 = vmatpush1.bf16.msra.mxu0 %v120
  %165 = vmatprep.subr.bf16.mxu0 0
  %166 = vmatpush2.bf16.msra.mxu0 0
  %167 = vmatprep.subr.bf16.mxu0 0
  %168 = vmatpush2.bf16.msra.mxu0 0
  %169 = vmatprep.subr.bf16.mxu0 0
  %170 = vmatpush2.bf16.msra.mxu0 0
  %171 = vmatprep.subr.bf16.mxu0 0
  %172 = vmatpush2.bf16.msra.mxu0 0
  %173 = vmatprep.subr.bf16.mxu0 0
  %174 = vmatpush2.bf16.msra.mxu0 0
  %175 = vmatprep.subr.bf16.mxu0 0
  %176 = vmatpush2.bf16.msra.mxu0 0
  %177 = vmatprep.subr.bf16.mxu0 0
  %178 = vmatpush2.bf16.msra.mxu0 0
  %179 = vmatprep.subr.bf16.mxu0 0
  %180 = vmatpush2.bf16.msra.mxu0 0
  %181 = vmatprep.mubr.bf16.mxu0 0
  %182 = vmatmul.mubr.bf16.gmra.mxu0 %v126
  %v183 = vpop.f32.mrf.mxu0
  %v184 = vadd.f32 0.0, %v183
  %v185 = vpop.f32.mrf.mxu0
  %v186 = vpop.f32.mrf.mxu0
  %v187 = vadd.f32 0.0, %v186
  %v188 = vpop.f32.mrf.mxu0
  %189 = vmatprep.mubr.bf16.mxu0 0
  %190 = vmatmul.mubr.bf16.gmra.mxu0 %v129
  %v191 = vpop.f32.mrf.mxu0
  %v192 = vadd.f32 0.0, %v191
  %v193 = vpop.f32.mrf.mxu0
  %v194 = vpop.f32.mrf.mxu0
  %v195 = vadd.f32 0.0, %v194
  %v196 = vpop.f32.mrf.mxu0
  %197 = vmatprep.mubr.bf16.mxu0 0
  %198 = vmatmul.mubr.bf16.gmra.mxu0 %v132
  %v199 = vpop.f32.mrf.mxu0
  %v200 = vadd.f32 0.0, %v199
  %v201 = vpop.f32.mrf.mxu0
  %v202 = vpop.f32.mrf.mxu0
  %v203 = vadd.f32 0.0, %v202
  %v204 = vpop.f32.mrf.mxu0
  %205 = vmatprep.mubr.bf16.mxu0 0
  %206 = vmatmul.mubr.bf16.gmra.mxu0 %v135
  %v207 = vpop.f32.mrf.mxu0
  %v208 = vadd.f32 0.0, %v207
  %v209 = vpop.f32.mrf.mxu0
  %v210 = vpop.f32.mrf.mxu0
  %v211 = vadd.f32 0.0, %v210
  %v212 = vpop.f32.mrf.mxu0
  %213 = vmatprep.mubr.bf16.mxu0 0
  %214 = vmatmul.mubr.bf16.gmra.mxu0 %v138
  %v215 = vpop.f32.mrf.mxu0
  %v216 = vadd.f32 0.0, %v215
  %v217 = vpop.f32.mrf.mxu0
  %v218 = vpop.f32.mrf.mxu0
  %v219 = vadd.f32 0.0, %v218
  %v220 = vpop.f32.mrf.mxu0
  %221 = vmatprep.mubr.bf16.mxu0 0
  %222 = vmatmul.mubr.bf16.gmra.mxu0 %v141
  %v223 = vpop.f32.mrf.mxu0
  %v224 = vadd.f32 0.0, %v223
  %v225 = vpop.f32.mrf.mxu0
  %v226 = vpop.f32.mrf.mxu0
  %v227 = vadd.f32 0.0, %v226
  %v228 = vpop.f32.mrf.mxu0
  %229 = vmatprep.mubr.bf16.mxu0 0
  %230 = vmatmul.mubr.bf16.gmra.mxu0 %v144
  %v231 = vpop.f32.mrf.mxu0
  %v232 = vadd.f32 0.0, %v231
  %v233 = vpop.f32.mrf.mxu0
  %v234 = vpop.f32.mrf.mxu0
  %v235 = vadd.f32 0.0, %v234
  %v236 = vpop.f32.mrf.mxu0
  %237 = vmatprep.mubr.bf16.mxu0 0
  %238 = vmatmul.mubr.bf16.gmra.mxu0 %v147
  %v239 = vpop.f32.mrf.mxu0
  %v240 = vadd.f32 0.0, %v239
  %v241 = vpop.f32.mrf.mxu0
  %v242 = vpop.f32.mrf.mxu0
  %v243 = vadd.f32 0.0, %v242
  %v244 = vpop.f32.mrf.mxu0
  %245 = vdwg.mxu0
  %v246 = vadd.f32 %v36, %v184
  %v247 = vadd.f32 %v37, %v187
  %v248 = vadd.f32 %v38, %v192
  %v249 = vadd.f32 %v39, %v195
  %v250 = vadd.f32 %v40, %v200
  %v251 = vadd.f32 %v41, %v203
  %v252 = vadd.f32 %v42, %v208
  %v253 = vadd.f32 %v43, %v211
  %v254 = vadd.f32 %v44, %v216
  %v255 = vadd.f32 %v45, %v219
  %v256 = vadd.f32 %v46, %v224
  %v257 = vadd.f32 %v47, %v227
  %v258 = vadd.f32 %v48, %v232
  %v259 = vadd.f32 %v49, %v235
  %v260 = vadd.f32 %v50, %v240
  %v261 = vadd.f32 %v51, %v243
  %262 = vst.msk [vmem:[#allocation2] sm:$0xff] %vm124, %v246
  %263 = vst.msk [vmem:[#allocation2 + $0x8] sm:$0xff] %vm124, %v247
  %264 = vst.msk [vmem:[#allocation2 + $0x10] sm:$0xff] %vm124, %v248
  %265 = vst.msk [vmem:[#allocation2 + $0x18] sm:$0xff] %vm124, %v249
  %266 = vst.msk [vmem:[#allocation2 + $0x20] sm:$0xff] %vm124, %v250
  %267 = vst.msk [vmem:[#allocation2 + $0x28] sm:$0xff] %vm124, %v251
  %268 = vst.msk [vmem:[#allocation2 + $0x30] sm:$0xff] %vm124, %v252
  %269 = vst.msk [vmem:[#allocation2 + $0x38] sm:$0xff] %vm124, %v253
  %270 = vst.msk [vmem:[#allocation2 + $0x40] sm:$0xff] %vm124, %v254
  %271 = vst.msk [vmem:[#allocation2 + $0x48] sm:$0xff] %vm124, %v255
  %272 = vst.msk [vmem:[#allocation2 + $0x50] sm:$0xff] %vm124, %v256
  %273 = vst.msk [vmem:[#allocation2 + $0x58] sm:$0xff] %vm124, %v257
  %274 = vst.msk [vmem:[#allocation2 + $0x60] sm:$0xff] %vm124, %v258
  %275 = vst.msk [vmem:[#allocation2 + $0x68] sm:$0xff] %vm124, %v259
  %276 = vst.msk [vmem:[#allocation2 + $0x70] sm:$0xff] %vm124, %v260
  %277 = vst.msk [vmem:[#allocation2 + $0x78] sm:$0xff] %vm124, %v261
  // Predicated region
  $region18: #{net_forward.6} parent=0 // pred_check
    %p278 = pneg %p15
  $region19: #{net_forward.6} parent=0 // pred_check_branch
    %280 = sbr.rel (%p278) target = $region21
  $region20: #{net_forward.6} parent=0 // pred_region
    %v281 = vld [vmem:[#allocation2] sm:$0xff]
    %v282 = vld [vmem:[#allocation2 + $0x8] sm:$0xff]
    %v283 = vld [vmem:[#allocation2 + $0x10] sm:$0xff]
    %v284 = vld [vmem:[#allocation2 + $0x18] sm:$0xff]
    %v285 = vld [vmem:[#allocation2 + $0x20] sm:$0xff]
    %v286 = vld [vmem:[#allocation2 + $0x28] sm:$0xff]
    %v287 = vld [vmem:[#allocation2 + $0x30] sm:$0xff]
    %v288 = vld [vmem:[#allocation2 + $0x38] sm:$0xff]
    %v289 = vld [vmem:[#allocation2 + $0x40] sm:$0xff]
    %v290 = vld [vmem:[#allocation2 + $0x48] sm:$0xff]
    %v291 = vld [vmem:[#allocation2 + $0x50] sm:$0xff]
    %v292 = vld [vmem:[#allocation2 + $0x58] sm:$0xff]
    %v293 = vld [vmem:[#allocation2 + $0x60] sm:$0xff]
    %v294 = vld [vmem:[#allocation2 + $0x68] sm:$0xff]
    %v295 = vld [vmem:[#allocation2 + $0x70] sm:$0xff]
    %v296 = vld [vmem:[#allocation2 + $0x78] sm:$0xff]
    %v297 = vld [vmem:[%s2] sm:$0x1]
    %v299 = vlaneseq
    %v300 = vshrl.u32 %v299, 7
    %v301 = vsub.s32 0, %v300
    %v302 = vrot.slane %v297, %v301
    %v304 = vadd.f32 %v281, %v302
    %v305 = vadd.f32 %v282, %v302
    %v306 = vadd.f32 %v283, %v302
    %v307 = vadd.f32 %v284, %v302
    %v308 = vadd.f32 %v285, %v302
    %v309 = vadd.f32 %v286, %v302
    %v310 = vadd.f32 %v287, %v302
    %v311 = vadd.f32 %v288, %v302
    %v312 = vadd.f32 %v289, %v302
    %v313 = vadd.f32 %v290, %v302
    %v314 = vadd.f32 %v291, %v302
    %v315 = vadd.f32 %v292, %v302
    %v316 = vadd.f32 %v293, %v302
    %v317 = vadd.f32 %v294, %v302
    %v318 = vadd.f32 %v295, %v302
    %v319 = vadd.f32 %v296, %v302
    %v320 = vxor.u32 %v304, 2147483648
    %v321 = vxor.u32 %v305, 2147483648
    %v322 = vxor.u32 %v306, 2147483648
    %v323 = vxor.u32 %v307, 2147483648
    %v324 = vxor.u32 %v308, 2147483648
    %v325 = vxor.u32 %v309, 2147483648
    %v326 = vxor.u32 %v310, 2147483648
    %v327 = vxor.u32 %v311, 2147483648
    %v328 = vxor.u32 %v312, 2147483648
    %v329 = vxor.u32 %v313, 2147483648
    %v330 = vxor.u32 %v314, 2147483648
    %v331 = vxor.u32 %v315, 2147483648
    %v332 = vxor.u32 %v316, 2147483648
    %v333 = vxor.u32 %v317, 2147483648
    %v334 = vxor.u32 %v318, 2147483648
    %v335 = vxor.u32 %v319, 2147483648
    %v336 = vmul.f32 %v320, 1.442695
    %v337 = vpow.pop %v336
    %v338 = vmul.f32 %v321, 1.442695
    %v339 = vpow.pop %v338
    %v340 = vmul.f32 %v322, 1.442695
    %v341 = vpow.pop %v340
    %v342 = vmul.f32 %v323, 1.442695
    %v343 = vpow.pop %v342
    %v344 = vmul.f32 %v324, 1.442695
    %v345 = vpow.pop %v344
    %v346 = vmul.f32 %v325, 1.442695
    %v347 = vpow.pop %v346
    %v348 = vmul.f32 %v326, 1.442695
    %v349 = vpow.pop %v348
    %v350 = vmul.f32 %v327, 1.442695
    %v351 = vpow.pop %v350
    %v352 = vmul.f32 %v328, 1.442695
    %v353 = vpow.pop %v352
    %v354 = vmul.f32 %v329, 1.442695
    %v355 = vpow.pop %v354
    %v356 = vmul.f32 %v330, 1.442695
    %v357 = vpow.pop %v356
    %v358 = vmul.f32 %v331, 1.442695
    %v359 = vpow.pop %v358
    %v360 = vmul.f32 %v332, 1.442695
    %v361 = vpow.pop %v360
    %v362 = vmul.f32 %v333, 1.442695
    %v363 = vpow.pop %v362
    %v364 = vmul.f32 %v334, 1.442695
    %v365 = vpow.pop %v364
    %v366 = vmul.f32 %v335, 1.442695
    %v367 = vpow.pop %v366
    %v368 = vadd.f32 %v337, 1.0
    %v369 = vadd.f32 %v339, 1.0
    %v370 = vadd.f32 %v341, 1.0
    %v371 = vadd.f32 %v343, 1.0
    %v372 = vadd.f32 %v345, 1.0
    %v373 = vadd.f32 %v347, 1.0
    %v374 = vadd.f32 %v349, 1.0
    %v375 = vadd.f32 %v351, 1.0
    %v376 = vadd.f32 %v353, 1.0
    %v377 = vadd.f32 %v355, 1.0
    %v378 = vadd.f32 %v357, 1.0
    %v379 = vadd.f32 %v359, 1.0
    %v380 = vadd.f32 %v361, 1.0
    %v381 = vadd.f32 %v363, 1.0
    %v382 = vadd.f32 %v365, 1.0
    %v383 = vadd.f32 %v367, 1.0
    %v384 = vrcp.pop %v368
    %v385 = vmul.f32 1.0, %v384
    %v386 = vrcp.pop %v369
    %v387 = vmul.f32 1.0, %v386
    %v388 = vrcp.pop %v370
    %v389 = vmul.f32 1.0, %v388
    %v390 = vrcp.pop %v371
    %v391 = vmul.f32 1.0, %v390
    %v392 = vrcp.pop %v372
    %v393 = vmul.f32 1.0, %v392
    %v394 = vrcp.pop %v373
    %v395 = vmul.f32 1.0, %v394
    %v396 = vrcp.pop %v374
    %v397 = vmul.f32 1.0, %v396
    %v398 = vrcp.pop %v375
    %v399 = vmul.f32 1.0, %v398
    %v400 = vrcp.pop %v376
    %v401 = vmul.f32 1.0, %v400
    %v402 = vrcp.pop %v377
    %v403 = vmul.f32 1.0, %v402
    %v404 = vrcp.pop %v378
    %v405 = vmul.f32 1.0, %v404
    %v406 = vrcp.pop %v379
    %v407 = vmul.f32 1.0, %v406
    %v408 = vrcp.pop %v380
    %v409 = vmul.f32 1.0, %v408
    %v410 = vrcp.pop %v381
    %v411 = vmul.f32 1.0, %v410
    %v412 = vrcp.pop %v382
    %v413 = vmul.f32 1.0, %v412
    %v414 = vrcp.pop %v383
    %v415 = vmul.f32 1.0, %v414
    %v416 = vmul.f32 %v304, %v385
    %v417 = vmul.f32 %v305, %v387
    %v418 = vmul.f32 %v306, %v389
    %v419 = vmul.f32 %v307, %v391
    %v420 = vmul.f32 %v308, %v393
    %v421 = vmul.f32 %v309, %v395
    %v422 = vmul.f32 %v310, %v397
    %v423 = vmul.f32 %v311, %v399
    %v424 = vmul.f32 %v312, %v401
    %v425 = vmul.f32 %v313, %v403
    %v426 = vmul.f32 %v314, %v405
    %v427 = vmul.f32 %v315, %v407
    %v428 = vmul.f32 %v316, %v409
    %v429 = vmul.f32 %v317, %v411
    %v430 = vmul.f32 %v318, %v413
    %v431 = vmul.f32 %v319, %v415
    %v432 = vpack.c.bf16 %v417, %v416
    %v433 = vpack.c.bf16 %v419, %v418
    %v434 = vpack.c.bf16 %v421, %v420
    %v435 = vpack.c.bf16 %v423, %v422
    %v436 = vpack.c.bf16 %v425, %v424
    %v437 = vpack.c.bf16 %v427, %v426
    %v438 = vpack.c.bf16 %v429, %v428
    %v439 = vpack.c.bf16 %v431, %v430
    %v448 = vunpack.c.l.b16 %v432
    %v449 = vunpack.c.h.b16 %v432
    %v450 = vunpack.c.l.b16 %v433
    %v451 = vunpack.c.h.b16 %v433
    %v452 = vunpack.c.l.b16 %v434
    %v453 = vunpack.c.h.b16 %v434
    %v454 = vunpack.c.l.b16 %v435
    %v455 = vunpack.c.h.b16 %v435
    %v456 = vunpack.c.l.b16 %v436
    %v457 = vunpack.c.h.b16 %v436
    %v458 = vunpack.c.l.b16 %v437
    %v459 = vunpack.c.h.b16 %v437
    %v460 = vunpack.c.l.b16 %v438
    %v461 = vunpack.c.h.b16 %v438
    %v462 = vunpack.c.l.b16 %v439
    %v463 = vunpack.c.h.b16 %v439
    %v464 = vpack.c.b16 %v448, %v448
    %v465 = vpack.c.b16 %v449, %v449
    %v466 = vpack.c.b16 %v450, %v450
    %v467 = vpack.c.b16 %v451, %v451
    %v468 = vpack.c.b16 %v452, %v452
    %v469 = vpack.c.b16 %v453, %v453
    %v470 = vpack.c.b16 %v454, %v454
    %v471 = vpack.c.b16 %v455, %v455
    %v472 = vpack.c.b16 %v456, %v456
    %v473 = vpack.c.b16 %v457, %v457
    %v474 = vpack.c.b16 %v458, %v458
    %v475 = vpack.c.b16 %v459, %v459
    %v476 = vpack.c.b16 %v460, %v460
    %v477 = vpack.c.b16 %v461, %v461
    %v478 = vpack.c.b16 %v462, %v462
    %v479 = vpack.c.b16 %v463, %v463
    %vm496 = vcmask 257024
    %497 = vst.msk [vmem:[%s3] sm:$0xf] %vm496, %v464
    %498 = vst.msk [vmem:[%s3 + $0x4] sm:$0xf] %vm496, %v465
    %499 = vst.msk [vmem:[%s3 + $0x8] sm:$0xf] %vm496, %v466
    %500 = vst.msk [vmem:[%s3 + $0xc] sm:$0xf] %vm496, %v467
    %501 = vst.msk [vmem:[%s3 + $0x10] sm:$0xf] %vm496, %v468
    %502 = vst.msk [vmem:[%s3 + $0x14] sm:$0xf] %vm496, %v469
    %503 = vst.msk [vmem:[%s3 + $0x18] sm:$0xf] %vm496, %v470
    %504 = vst.msk [vmem:[%s3 + $0x1c] sm:$0xf] %vm496, %v471
    %505 = vst.msk [vmem:[%s3 + $0x20] sm:$0xf] %vm496, %v472
    %506 = vst.msk [vmem:[%s3 + $0x24] sm:$0xf] %vm496, %v473
    %507 = vst.msk [vmem:[%s3 + $0x28] sm:$0xf] %vm496, %v474
    %508 = vst.msk [vmem:[%s3 + $0x2c] sm:$0xf] %vm496, %v475
    %509 = vst.msk [vmem:[%s3 + $0x30] sm:$0xf] %vm496, %v476
    %510 = vst.msk [vmem:[%s3 + $0x34] sm:$0xf] %vm496, %v477
    %511 = vst.msk [vmem:[%s3 + $0x38] sm:$0xf] %vm496, %v478
    %512 = vst.msk [vmem:[%s3 + $0x3c] sm:$0xf] %vm496, %v479
  $region21: #{net_forward.6} parent=0 // pred_fallthru
    _
  // Predicated region
  $region22: #{net_forward.6} parent=0 // pred_check
    _
  $region23: #{net_forward.6} parent=0 // pred_check_branch
    %514 = sbr.rel (0) target = $region25
  $region24: #{net_forward.6} parent=0 // pred_region
    _
  $region25: #{net_forward.6} parent=0 // pred_fallthru
    _
  // Predicated region
  $region26: #{net_forward.6} parent=0 // pred_check
    _
  $region27: #{net_forward.6} parent=0 // pred_check_branch
    %516 = sbr.rel (0) target = $region29
  $region28: #{net_forward.6} parent=0 // pred_region
    _
  $region29: #{net_forward.6} parent=0 // pred_fallthru
    _

// kernel: net_forward.7
$region0: #{net_forward.7}
  #allocation0 [shape = 'u32[]', space=smem, size = 0x4, offset = 0x4, fixed_abs, tag = 'smem constant byte address 0x4 - core index']
  #allocation1 [shape = 'u32[144,128]{1,0:T(1,128)}', space=vmem, size = 0x12000, scoped, tag = 'internal scratch']
  #allocation2 [shape = 'f32[128,128]{1,0:T(8,128)}', space=vmem, size = 0x10000, scoped, tag = 'scratch operand']
  %s0 = inlined_call_operand.vmem [shape: bf16[128,32], index: 0, kind: input, shape index: {}]
  %s1 = inlined_call_operand.vmem [shape: bf16[32,128], index: 1, kind: input, shape index: {}]
  %s2 = inlined_call_operand.vmem [shape: f32[1,128], index: 2, kind: input, shape index: {}]
  %s3 = inlined_call_operand.vmem [shape: bf16[128,128], index: 3, kind: output, shape index: {}]
  %s4 = sld [smem:[#allocation0]]
  $region30: #{net_forward.7} parent=0
    _
  %s6 = ssub.s32 1, %s4
  %s7 = scalar_select 0, %s6, %s4
  // Predicated region
  $region2: #{net_forward.7} parent=0 // pred_check
    _
  $region3: #{net_forward.7} parent=0 // pred_check_branch
    %9 = sbr.rel (0) target = $region5
  $region4: #{net_forward.7} parent=0 // pred_region
    _
  $region5: #{net_forward.7} parent=0 // pred_fallthru
    _
  // Predicated region
  $region6: #{net_forward.7} parent=0 // pred_check
    _
  $region7: #{net_forward.7} parent=0 // pred_check_branch
    %11 = sbr.rel (0) target = $region9
  $region8: #{net_forward.7} parent=0 // pred_region
    _
  $region9: #{net_forward.7} parent=0 // pred_fallthru
    _
  // Predicated region
  $region10: #{net_forward.7} parent=0 // pred_check
    _
  $region11: #{net_forward.7} parent=0 // pred_check_branch
    %13 = sbr.rel (0) target = $region13
  $region12: #{net_forward.7} parent=0 // pred_region
    _
  $region13: #{net_forward.7} parent=0 // pred_fallthru
    _
  %p15 = scmp.eq.s32.totalorder 0, 0
  // Predicated region
  $region14: #{net_forward.7} parent=0 // pred_check
    %p16 = pneg %p15
  $region15: #{net_forward.7} parent=0 // pred_check_branch
    %18 = sbr.rel (%p16) target = $region17
  $region16: #{net_forward.7} parent=0 // pred_region
    %19 = vst [vmem:[#allocation2] sm:$0xff] 0.0
    %20 = vst [vmem:[#allocation2 + $0x8] sm:$0xff] 0.0
    %21 = vst [vmem:[#allocation2 + $0x10] sm:$0xff] 0.0
    %22 = vst [vmem:[#allocation2 + $0x18] sm:$0xff] 0.0
    %23 = vst [vmem:[#allocation2 + $0x20] sm:$0xff] 0.0
    %24 = vst [vmem:[#allocation2 + $0x28] sm:$0xff] 0.0
    %25 = vst [vmem:[#allocation2 + $0x30] sm:$0xff] 0.0
    %26 = vst [vmem:[#allocation2 + $0x38] sm:$0xff] 0.0
    %27 = vst [vmem:[#allocation2 + $0x40] sm:$0xff] 0.0
    %28 = vst [vmem:[#allocation2 + $0x48] sm:$0xff] 0.0
    %29 = vst [vmem:[#allocation2 + $0x50] sm:$0xff] 0.0
    %30 = vst [vmem:[#allocation2 + $0x58] sm:$0xff] 0.0
    %31 = vst [vmem:[#allocation2 + $0x60] sm:$0xff] 0.0
    %32 = vst [vmem:[#allocation2 + $0x68] sm:$0xff] 0.0
    %33 = vst [vmem:[#allocation2 + $0x70] sm:$0xff] 0.0
    %34 = vst [vmem:[#allocation2 + $0x78] sm:$0xff] 0.0
  $region17: #{net_forward.7} parent=0 // pred_fallthru
    _
  %v35 = vld [vmem:[#allocation2] sm:$0xff]
  %v36 = vld [vmem:[#allocation2 + $0x8] sm:$0xff]
  %v37 = vld [vmem:[#allocation2 + $0x10] sm:$0xff]
  %v38 = vld [vmem:[#allocation2 + $0x18] sm:$0xff]
  %v39 = vld [vmem:[#allocation2 + $0x20] sm:$0xff]
  %v40 = vld [vmem:[#allocation2 + $0x28] sm:$0xff]
  %v41 = vld [vmem:[#allocation2 + $0x30] sm:$0xff]
  %v42 = vld [vmem:[#allocation2 + $0x38] sm:$0xff]
  %v43 = vld [vmem:[#allocation2 + $0x40] sm:$0xff]
  %v44 = vld [vmem:[#allocation2 + $0x48] sm:$0xff]
  %v45 = vld [vmem:[#allocation2 + $0x50] sm:$0xff]
  %v46 = vld [vmem:[#allocation2 + $0x58] sm:$0xff]
  %v47 = vld [vmem:[#allocation2 + $0x60] sm:$0xff]
  %v48 = vld [vmem:[#allocation2 + $0x68] sm:$0xff]
  %v49 = vld [vmem:[#allocation2 + $0x70] sm:$0xff]
  %v50 = vld [vmem:[#allocation2 + $0x78] sm:$0xff]
  %v51 = vld [vmem:[%s0] sm:$0xf]
  %v52 = vld [vmem:[%s0 + $0x4] sm:$0xf]
  %v53 = vld [vmem:[%s0 + $0x8] sm:$0xf]
  %v54 = vld [vmem:[%s0 + $0xc] sm:$0xf]
  %v55 = vld [vmem:[%s0 + $0x10] sm:$0xf]
  %v56 = vld [vmem:[%s0 + $0x14] sm:$0xf]
  %v57 = vld [vmem:[%s0 + $0x18] sm:$0xf]
  %v58 = vld [vmem:[%s0 + $0x1c] sm:$0xf]
  %v59 = vld [vmem:[%s0 + $0x20] sm:$0xf]
  %v60 = vld [vmem:[%s0 + $0x24] sm:$0xf]
  %v61 = vld [vmem:[%s0 + $0x28] sm:$0xf]
  %v62 = vld [vmem:[%s0 + $0x2c] sm:$0xf]
  %v63 = vld [vmem:[%s0 + $0x30] sm:$0xf]
  %v64 = vld [vmem:[%s0 + $0x34] sm:$0xf]
  %v65 = vld [vmem:[%s0 + $0x38] sm:$0xf]
  %v66 = vld [vmem:[%s0 + $0x3c] sm:$0xf]
  %v67 = vld [vmem:[%s1] sm:$0xf]
  %v68 = vld [vmem:[%s1 + $0x4] sm:$0xf]
  %v69 = vld [vmem:[%s1 + $0x8] sm:$0xf]
  %v70 = vld [vmem:[%s1 + $0xc] sm:$0xf]
  %v87 = vunpack.c.l.b16 %v51
  %v88 = vunpack.c.l.b16 %v52
  %v89 = vunpack.c.l.b16 %v53
  %v90 = vunpack.c.l.b16 %v54
  %v91 = vunpack.c.l.b16 %v55
  %v92 = vunpack.c.l.b16 %v56
  %v93 = vunpack.c.l.b16 %v57
  %v94 = vunpack.c.l.b16 %v58
  %v95 = vunpack.c.l.b16 %v59
  %v96 = vunpack.c.l.b16 %v60
  %v97 = vunpack.c.l.b16 %v61
  %v98 = vunpack.c.l.b16 %v62
  %v99 = vunpack.c.l.b16 %v63
  %v100 = vunpack.c.l.b16 %v64
  %v101 = vunpack.c.l.b16 %v65
  %v102 = vunpack.c.l.b16 %v66
  %v103 = vpack.c.b16 %v88, %v87
  %v104 = vpack.c.b16 %v90, %v89
  %v105 = vpack.c.b16 %v92, %v91
  %v106 = vpack.c.b16 %v94, %v93
  %v107 = vpack.c.b16 %v96, %v95
  %v108 = vpack.c.b16 %v98, %v97
  %v109 = vpack.c.b16 %v100, %v99
  %v110 = vpack.c.b16 %v102, %v101
  %v115 = vunpack.c.l.b16 %v67
  %v116 = vunpack.c.l.b16 %v68
  %v117 = vunpack.c.l.b16 %v69
  %v118 = vunpack.c.l.b16 %v70
  %v119 = vpack.c.b16 %v116, %v115
  %v120 = vpack.c.b16 %v118, %v117
  %vm123 = vcmask 261120
  %v125 = vsel %vm123, %v103, 0
  %v128 = vsel %vm123, %v104, 0
  %v131 = vsel %vm123, %v105, 0
  %v134 = vsel %vm123, %v106, 0
  %v137 = vsel %vm123, %v107, 0
  %v140 = vsel %vm123, %v108, 0
  %v143 = vsel %vm123, %v109, 0
  %v146 = vsel %vm123, %v110, 0
  %148 = vmatprep.subr.bf16.mxu0 0
  %149 = vmatpush1.bf16.msra.mxu0 0
  %150 = vmatprep.subr.bf16.mxu0 0
  %151 = vmatpush1.bf16.msra.mxu0 0
  %152 = vmatprep.subr.bf16.mxu0 0
  %153 = vmatpush1.bf16.msra.mxu0 0
  %154 = vmatprep.subr.bf16.mxu0 0
  %155 = vmatpush1.bf16.msra.mxu0 0
  %156 = vmatprep.subr.bf16.mxu0 0
  %157 = vmatpush1.bf16.msra.mxu0 0
  %158 = vmatprep.subr.bf16.mxu0 0
  %159 = vmatpush1.bf16.msra.mxu0 0
  %160 = vmatprep.subr.bf16.mxu0 0
  %161 = vmatpush1.bf16.msra.mxu0 %v120
  %162 = vmatprep.subr.bf16.mxu0 0
  %163 = vmatpush1.bf16.msra.mxu0 %v119
  %164 = vmatprep.subr.bf16.mxu0 0
  %165 = vmatpush2.bf16.msra.mxu0 0
  %166 = vmatprep.subr.bf16.mxu0 0
  %167 = vmatpush2.bf16.msra.mxu0 0
  %168 = vmatprep.subr.bf16.mxu0 0
  %169 = vmatpush2.bf16.msra.mxu0 0
  %170 = vmatprep.subr.bf16.mxu0 0
  %171 = vmatpush2.bf16.msra.mxu0 0
  %172 = vmatprep.subr.bf16.mxu0 0
  %173 = vmatpush2.bf16.msra.mxu0 0
  %174 = vmatprep.subr.bf16.mxu0 0
  %175 = vmatpush2.bf16.msra.mxu0 0
  %176 = vmatprep.subr.bf16.mxu0 0
  %177 = vmatpush2.bf16.msra.mxu0 0
  %178 = vmatprep.subr.bf16.mxu0 0
  %179 = vmatpush2.bf16.msra.mxu0 0
  %180 = vmatprep.mubr.bf16.mxu0 0
  %181 = vmatmul.mubr.bf16.gmra.mxu0 %v125
  %v182 = vpop.f32.mrf.mxu0
  %v183 = vadd.f32 0.0, %v182
  %v184 = vpop.f32.mrf.mxu0
  %v185 = vpop.f32.mrf.mxu0
  %v186 = vadd.f32 0.0, %v185
  %v187 = vpop.f32.mrf.mxu0
  %188 = vmatprep.mubr.bf16.mxu0 0
  %189 = vmatmul.mubr.bf16.gmra.mxu0 %v128
  %v190 = vpop.f32.mrf.mxu0
  %v191 = vadd.f32 0.0, %v190
  %v192 = vpop.f32.mrf.mxu0
  %v193 = vpop.f32.mrf.mxu0
  %v194 = vadd.f32 0.0, %v193
  %v195 = vpop.f32.mrf.mxu0
  %196 = vmatprep.mubr.bf16.mxu0 0
  %197 = vmatmul.mubr.bf16.gmra.mxu0 %v131
  %v198 = vpop.f32.mrf.mxu0
  %v199 = vadd.f32 0.0, %v198
  %v200 = vpop.f32.mrf.mxu0
  %v201 = vpop.f32.mrf.mxu0
  %v202 = vadd.f32 0.0, %v201
  %v203 = vpop.f32.mrf.mxu0
  %204 = vmatprep.mubr.bf16.mxu0 0
  %205 = vmatmul.mubr.bf16.gmra.mxu0 %v134
  %v206 = vpop.f32.mrf.mxu0
  %v207 = vadd.f32 0.0, %v206
  %v208 = vpop.f32.mrf.mxu0
  %v209 = vpop.f32.mrf.mxu0
  %v210 = vadd.f32 0.0, %v209
  %v211 = vpop.f32.mrf.mxu0
  %212 = vmatprep.mubr.bf16.mxu0 0
  %213 = vmatmul.mubr.bf16.gmra.mxu0 %v137
  %v214 = vpop.f32.mrf.mxu0
  %v215 = vadd.f32 0.0, %v214
  %v216 = vpop.f32.mrf.mxu0
  %v217 = vpop.f32.mrf.mxu0
  %v218 = vadd.f32 0.0, %v217
  %v219 = vpop.f32.mrf.mxu0
  %220 = vmatprep.mubr.bf16.mxu0 0
  %221 = vmatmul.mubr.bf16.gmra.mxu0 %v140
  %v222 = vpop.f32.mrf.mxu0
  %v223 = vadd.f32 0.0, %v222
  %v224 = vpop.f32.mrf.mxu0
  %v225 = vpop.f32.mrf.mxu0
  %v226 = vadd.f32 0.0, %v225
  %v227 = vpop.f32.mrf.mxu0
  %228 = vmatprep.mubr.bf16.mxu0 0
  %229 = vmatmul.mubr.bf16.gmra.mxu0 %v143
  %v230 = vpop.f32.mrf.mxu0
  %v231 = vadd.f32 0.0, %v230
  %v232 = vpop.f32.mrf.mxu0
  %v233 = vpop.f32.mrf.mxu0
  %v234 = vadd.f32 0.0, %v233
  %v235 = vpop.f32.mrf.mxu0
  %236 = vmatprep.mubr.bf16.mxu0 0
  %237 = vmatmul.mubr.bf16.gmra.mxu0 %v146
  %v238 = vpop.f32.mrf.mxu0
  %v239 = vadd.f32 0.0, %v238
  %v240 = vpop.f32.mrf.mxu0
  %v241 = vpop.f32.mrf.mxu0
  %v242 = vadd.f32 0.0, %v241
  %v243 = vpop.f32.mrf.mxu0
  %244 = vdwg.mxu0
  %v245 = vadd.f32 %v35, %v183
  %v246 = vadd.f32 %v36, %v186
  %v247 = vadd.f32 %v37, %v191
  %v248 = vadd.f32 %v38, %v194
  %v249 = vadd.f32 %v39, %v199
  %v250 = vadd.f32 %v40, %v202
  %v251 = vadd.f32 %v41, %v207
  %v252 = vadd.f32 %v42, %v210
  %v253 = vadd.f32 %v43, %v215
  %v254 = vadd.f32 %v44, %v218
  %v255 = vadd.f32 %v45, %v223
  %v256 = vadd.f32 %v46, %v226
  %v257 = vadd.f32 %v47, %v231
  %v258 = vadd.f32 %v48, %v234
  %v259 = vadd.f32 %v49, %v239
  %v260 = vadd.f32 %v50, %v242
  %261 = vst [vmem:[#allocation2] sm:$0xff] %v245
  %262 = vst [vmem:[#allocation2 + $0x8] sm:$0xff] %v246
  %263 = vst [vmem:[#allocation2 + $0x10] sm:$0xff] %v247
  %264 = vst [vmem:[#allocation2 + $0x18] sm:$0xff] %v248
  %265 = vst [vmem:[#allocation2 + $0x20] sm:$0xff] %v249
  %266 = vst [vmem:[#allocation2 + $0x28] sm:$0xff] %v250
  %267 = vst [vmem:[#allocation2 + $0x30] sm:$0xff] %v251
  %268 = vst [vmem:[#allocation2 + $0x38] sm:$0xff] %v252
  %269 = vst [vmem:[#allocation2 + $0x40] sm:$0xff] %v253
  %270 = vst [vmem:[#allocation2 + $0x48] sm:$0xff] %v254
  %271 = vst [vmem:[#allocation2 + $0x50] sm:$0xff] %v255
  %272 = vst [vmem:[#allocation2 + $0x58] sm:$0xff] %v256
  %273 = vst [vmem:[#allocation2 + $0x60] sm:$0xff] %v257
  %274 = vst [vmem:[#allocation2 + $0x68] sm:$0xff] %v258
  %275 = vst [vmem:[#allocation2 + $0x70] sm:$0xff] %v259
  %276 = vst [vmem:[#allocation2 + $0x78] sm:$0xff] %v260
  // Predicated region
  $region18: #{net_forward.7} parent=0 // pred_check
    %p277 = pneg %p15
  $region19: #{net_forward.7} parent=0 // pred_check_branch
    %279 = sbr.rel (%p277) target = $region21
  $region20: #{net_forward.7} parent=0 // pred_region
    %v280 = vld [vmem:[#allocation2] sm:$0xff]
    %v281 = vld [vmem:[#allocation2 + $0x8] sm:$0xff]
    %v282 = vld [vmem:[#allocation2 + $0x10] sm:$0xff]
    %v283 = vld [vmem:[#allocation2 + $0x18] sm:$0xff]
    %v284 = vld [vmem:[#allocation2 + $0x20] sm:$0xff]
    %v285 = vld [vmem:[#allocation2 + $0x28] sm:$0xff]
    %v286 = vld [vmem:[#allocation2 + $0x30] sm:$0xff]
    %v287 = vld [vmem:[#allocation2 + $0x38] sm:$0xff]
    %v288 = vld [vmem:[#allocation2 + $0x40] sm:$0xff]
    %v289 = vld [vmem:[#allocation2 + $0x48] sm:$0xff]
    %v290 = vld [vmem:[#allocation2 + $0x50] sm:$0xff]
    %v291 = vld [vmem:[#allocation2 + $0x58] sm:$0xff]
    %v292 = vld [vmem:[#allocation2 + $0x60] sm:$0xff]
    %v293 = vld [vmem:[#allocation2 + $0x68] sm:$0xff]
    %v294 = vld [vmem:[#allocation2 + $0x70] sm:$0xff]
    %v295 = vld [vmem:[#allocation2 + $0x78] sm:$0xff]
    %v296 = vld [vmem:[%s2] sm:$0x1]
    %v298 = vlaneseq
    %v299 = vshrl.u32 %v298, 7
    %v300 = vsub.s32 0, %v299
    %v301 = vrot.slane %v296, %v300
    %v303 = vadd.f32 %v280, %v301
    %v304 = vadd.f32 %v281, %v301
    %v305 = vadd.f32 %v282, %v301
    %v306 = vadd.f32 %v283, %v301
    %v307 = vadd.f32 %v284, %v301
    %v308 = vadd.f32 %v285, %v301
    %v309 = vadd.f32 %v286, %v301
    %v310 = vadd.f32 %v287, %v301
    %v311 = vadd.f32 %v288, %v301
    %v312 = vadd.f32 %v289, %v301
    %v313 = vadd.f32 %v290, %v301
    %v314 = vadd.f32 %v291, %v301
    %v315 = vadd.f32 %v292, %v301
    %v316 = vadd.f32 %v293, %v301
    %v317 = vadd.f32 %v294, %v301
    %v318 = vadd.f32 %v295, %v301
    %v319 = vxor.u32 %v303, 2147483648
    %v320 = vxor.u32 %v304, 2147483648
    %v321 = vxor.u32 %v305, 2147483648
    %v322 = vxor.u32 %v306, 2147483648
    %v323 = vxor.u32 %v307, 2147483648
    %v324 = vxor.u32 %v308, 2147483648
    %v325 = vxor.u32 %v309, 2147483648
    %v326 = vxor.u32 %v310, 2147483648
    %v327 = vxor.u32 %v311, 2147483648
    %v328 = vxor.u32 %v312, 2147483648
    %v329 = vxor.u32 %v313, 2147483648
    %v330 = vxor.u32 %v314, 2147483648
    %v331 = vxor.u32 %v315, 2147483648
    %v332 = vxor.u32 %v316, 2147483648
    %v333 = vxor.u32 %v317, 2147483648
    %v334 = vxor.u32 %v318, 2147483648
    %v335 = vmul.f32 %v319, 1.442695
    %v336 = vpow.pop %v335
    %v337 = vmul.f32 %v320, 1.442695
    %v338 = vpow.pop %v337
    %v339 = vmul.f32 %v321, 1.442695
    %v340 = vpow.pop %v339
    %v341 = vmul.f32 %v322, 1.442695
    %v342 = vpow.pop %v341
    %v343 = vmul.f32 %v323, 1.442695
    %v344 = vpow.pop %v343
    %v345 = vmul.f32 %v324, 1.442695
    %v346 = vpow.pop %v345
    %v347 = vmul.f32 %v325, 1.442695
    %v348 = vpow.pop %v347
    %v349 = vmul.f32 %v326, 1.442695
    %v350 = vpow.pop %v349
    %v351 = vmul.f32 %v327, 1.442695
    %v352 = vpow.pop %v351
    %v353 = vmul.f32 %v328, 1.442695
    %v354 = vpow.pop %v353
    %v355 = vmul.f32 %v329, 1.442695
    %v356 = vpow.pop %v355
    %v357 = vmul.f32 %v330, 1.442695
    %v358 = vpow.pop %v357
    %v359 = vmul.f32 %v331, 1.442695
    %v360 = vpow.pop %v359
    %v361 = vmul.f32 %v332, 1.442695
    %v362 = vpow.pop %v361
    %v363 = vmul.f32 %v333, 1.442695
    %v364 = vpow.pop %v363
    %v365 = vmul.f32 %v334, 1.442695
    %v366 = vpow.pop %v365
    %v367 = vadd.f32 %v336, 1.0
    %v368 = vadd.f32 %v338, 1.0
    %v369 = vadd.f32 %v340, 1.0
    %v370 = vadd.f32 %v342, 1.0
    %v371 = vadd.f32 %v344, 1.0
    %v372 = vadd.f32 %v346, 1.0
    %v373 = vadd.f32 %v348, 1.0
    %v374 = vadd.f32 %v350, 1.0
    %v375 = vadd.f32 %v352, 1.0
    %v376 = vadd.f32 %v354, 1.0
    %v377 = vadd.f32 %v356, 1.0
    %v378 = vadd.f32 %v358, 1.0
    %v379 = vadd.f32 %v360, 1.0
    %v380 = vadd.f32 %v362, 1.0
    %v381 = vadd.f32 %v364, 1.0
    %v382 = vadd.f32 %v366, 1.0
    %v383 = vrcp.pop %v367
    %v384 = vmul.f32 1.0, %v383
    %v385 = vrcp.pop %v368
    %v386 = vmul.f32 1.0, %v385
    %v387 = vrcp.pop %v369
    %v388 = vmul.f32 1.0, %v387
    %v389 = vrcp.pop %v370
    %v390 = vmul.f32 1.0, %v389
    %v391 = vrcp.pop %v371
    %v392 = vmul.f32 1.0, %v391
    %v393 = vrcp.pop %v372
    %v394 = vmul.f32 1.0, %v393
    %v395 = vrcp.pop %v373
    %v396 = vmul.f32 1.0, %v395
    %v397 = vrcp.pop %v374
    %v398 = vmul.f32 1.0, %v397
    %v399 = vrcp.pop %v375
    %v400 = vmul.f32 1.0, %v399
    %v401 = vrcp.pop %v376
    %v402 = vmul.f32 1.0, %v401
    %v403 = vrcp.pop %v377
    %v404 = vmul.f32 1.0, %v403
    %v405 = vrcp.pop %v378
    %v406 = vmul.f32 1.0, %v405
    %v407 = vrcp.pop %v379
    %v408 = vmul.f32 1.0, %v407
    %v409 = vrcp.pop %v380
    %v410 = vmul.f32 1.0, %v409
    %v411 = vrcp.pop %v381
    %v412 = vmul.f32 1.0, %v411
    %v413 = vrcp.pop %v382
    %v414 = vmul.f32 1.0, %v413
    %v415 = vmul.f32 %v303, %v384
    %v416 = vmul.f32 %v304, %v386
    %v417 = vmul.f32 %v305, %v388
    %v418 = vmul.f32 %v306, %v390
    %v419 = vmul.f32 %v307, %v392
    %v420 = vmul.f32 %v308, %v394
    %v421 = vmul.f32 %v309, %v396
    %v422 = vmul.f32 %v310, %v398
    %v423 = vmul.f32 %v311, %v400
    %v424 = vmul.f32 %v312, %v402
    %v425 = vmul.f32 %v313, %v404
    %v426 = vmul.f32 %v314, %v406
    %v427 = vmul.f32 %v315, %v408
    %v428 = vmul.f32 %v316, %v410
    %v429 = vmul.f32 %v317, %v412
    %v430 = vmul.f32 %v318, %v414
    %v431 = vpack.c.bf16 %v416, %v415
    %v432 = vpack.c.bf16 %v418, %v417
    %v433 = vpack.c.bf16 %v420, %v419
    %v434 = vpack.c.bf16 %v422, %v421
    %v435 = vpack.c.bf16 %v424, %v423
    %v436 = vpack.c.bf16 %v426, %v425
    %v437 = vpack.c.bf16 %v428, %v427
    %v438 = vpack.c.bf16 %v430, %v429
    %v447 = vunpack.c.l.b16 %v431
    %v448 = vunpack.c.h.b16 %v431
    %v449 = vunpack.c.l.b16 %v432
    %v450 = vunpack.c.h.b16 %v432
    %v451 = vunpack.c.l.b16 %v433
    %v452 = vunpack.c.h.b16 %v433
    %v453 = vunpack.c.l.b16 %v434
    %v454 = vunpack.c.h.b16 %v434
    %v455 = vunpack.c.l.b16 %v435
    %v456 = vunpack.c.h.b16 %v435
    %v457 = vunpack.c.l.b16 %v436
    %v458 = vunpack.c.h.b16 %v436
    %v459 = vunpack.c.l.b16 %v437
    %v460 = vunpack.c.h.b16 %v437
    %v461 = vunpack.c.l.b16 %v438
    %v462 = vunpack.c.h.b16 %v438
    %v463 = vpack.c.b16 %v447, %v447
    %v464 = vpack.c.b16 %v448, %v448
    %v465 = vpack.c.b16 %v449, %v449
    %v466 = vpack.c.b16 %v450, %v450
    %v467 = vpack.c.b16 %v451, %v451
    %v468 = vpack.c.b16 %v452, %v452
    %v469 = vpack.c.b16 %v453, %v453
    %v470 = vpack.c.b16 %v454, %v454
    %v471 = vpack.c.b16 %v455, %v455
    %v472 = vpack.c.b16 %v456, %v456
    %v473 = vpack.c.b16 %v457, %v457
    %v474 = vpack.c.b16 %v458, %v458
    %v475 = vpack.c.b16 %v459, %v459
    %v476 = vpack.c.b16 %v460, %v460
    %v477 = vpack.c.b16 %v461, %v461
    %v478 = vpack.c.b16 %v462, %v462
    %495 = vst [vmem:[%s3] sm:$0xf] %v463
    %496 = vst [vmem:[%s3 + $0x4] sm:$0xf] %v464
    %497 = vst [vmem:[%s3 + $0x8] sm:$0xf] %v465
    %498 = vst [vmem:[%s3 + $0xc] sm:$0xf] %v466
    %499 = vst [vmem:[%s3 + $0x10] sm:$0xf] %v467
    %500 = vst [vmem:[%s3 + $0x14] sm:$0xf] %v468
    %501 = vst [vmem:[%s3 + $0x18] sm:$0xf] %v469
    %502 = vst [vmem:[%s3 + $0x1c] sm:$0xf] %v470
    %503 = vst [vmem:[%s3 + $0x20] sm:$0xf] %v471
    %504 = vst [vmem:[%s3 + $0x24] sm:$0xf] %v472
    %505 = vst [vmem:[%s3 + $0x28] sm:$0xf] %v473
    %506 = vst [vmem:[%s3 + $0x2c] sm:$0xf] %v474
    %507 = vst [vmem:[%s3 + $0x30] sm:$0xf] %v475
    %508 = vst [vmem:[%s3 + $0x34] sm:$0xf] %v476
    %509 = vst [vmem:[%s3 + $0x38] sm:$0xf] %v477
    %510 = vst [vmem:[%s3 + $0x3c] sm:$0xf] %v478
  $region21: #{net_forward.7} parent=0 // pred_fallthru
    _
  // Predicated region
  $region22: #{net_forward.7} parent=0 // pred_check
    _
  $region23: #{net_forward.7} parent=0 // pred_check_branch
    %512 = sbr.rel (0) target = $region25
  $region24: #{net_forward.7} parent=0 // pred_region
    _
  $region25: #{net_forward.7} parent=0 // pred_fallthru
    _
  // Predicated region
  $region26: #{net_forward.7} parent=0 // pred_check
    _
  $region27: #{net_forward.7} parent=0 // pred_check_branch
    %514 = sbr.rel (0) target = $region29
  $region28: #{net_forward.7} parent=0 // pred_region
    _
  $region29: #{net_forward.7} parent=0 // pred_fallthru
    _

// kernel: net_forward.8
$region0: #{net_forward.8}
  #allocation0 [shape = 'u32[]', space=smem, size = 0x4, offset = 0x4, fixed_abs, tag = 'smem constant byte address 0x4 - core index']
  #allocation1 [shape = 'u32[144,128]{1,0:T(1,128)}', space=vmem, size = 0x12000, scoped, tag = 'internal scratch']
  %s0 = inlined_call_operand.vmem [shape: bf16[2,10,10,128], index: 0, kind: input, shape index: {}]
  %s1 = inlined_call_operand.vmem [shape: f32[9,128], index: 1, kind: input, shape index: {}]
  %s2 = inlined_call_operand.vmem [shape: f32[1,128], index: 2, kind: input, shape index: {}]
  %s3 = inlined_call_operand.vmem [shape: bf16[2,8,8,128], index: 3, kind: output, shape index: {0}]
  %s4 = inlined_call_operand.vmem [shape: bf16[2,1,128], index: 4, kind: output, shape index: {1}]
  %5 = xla_tuple %s3, %s4
  %s6 = sld [smem:[#allocation0]]
  $region53: #{net_forward.8} parent=0
    _
  %s8 = ssub.s32 1, %s6
  %s9 = scalar_select 0, %s8, %s6
  loop: start=0, step=1, limit=4
  $region2: #{net_forward.8} parent=0 // loop_pre_header
    _
  $region3: #{net_forward.8} parent=0 // loop_header
    %s11 = sphi 0, %s15
    %p12 = scmp.ge.s32.totalorder %s11, 4
    %s21 = sphi 0, %s23
    %s24 = sphi 0, %s21
    %s25 = sphi 0, %s24
    %s41 = sphi 0, %s25
    %s45 = sphi 0, %s45
    %s47 = sphi 0, %s45
    %s48 = sphi 0, %s47
    %s62 = sphi 0, %s48
    %s66 = sphi 0, %s66
    %s68 = sphi 0, %s66
    %s69 = sphi 0, %s68
    %s83 = sphi 0, %s69
    %s89 = sphi 0, %s91
    %s92 = sphi 0, %s89
    %s93 = sphi 0, %s92
    %s109 = sphi 0, %s93
    %s115 = sphi 0, %s117
    %s118 = sphi 0, %s115
    %s119 = sphi 0, %s118
    %s135 = sphi 0, %s119
  $region4: #{net_forward.8} parent=0 // loop_header_branch
    %14 = sbr.rel (%p12) target = $region8
  $region5: #{net_forward.8} parent=0 // loop_body
    %s16 = ssub.s32 %s11, 1
    %s17 = ssub.s32 %s11, 2
    %s18 = sadd.s32 %s11, 1
    %s19 = ssub.s32 %s11, %s18
    %p20 = scmp.eq.s32.totalorder %s19, 0
    %s22 = sadd.s32 %s21, 1
    %s23 = scalar_select %p20, %s21, %s22
    %p26 = pneg %p20
    %p27 = scmp.eq.s32.totalorder %s11, 1
    %p28 = por %p26, %p27
    %p29 = scmp.ne.s32.totalorder %s21, %s24
    %p30 = scmp.eq.s32.totalorder %s11, 0
    %p31 = por %p29, %p30
    %p32 = scmp.ne.s32.totalorder %s21, %s24
    %p33 = scmp.eq.s32.totalorder %s16, 1
    %p34 = por %p32, %p33
    %p35 = scmp.ne.s32.totalorder %s24, %s25
    %p36 = scmp.eq.s32.totalorder %s16, 0
    %p37 = por %p35, %p36
    %p38 = scmp.ne.s32.totalorder %s24, %s25
    %p39 = scmp.eq.s32.totalorder %s17, 1
    %p40 = por %p38, %p39
    %p42 = scmp.ne.s32.totalorder %s25, %s41
    %p43 = scmp.eq.s32.totalorder %s17, 0
    %p44 = por %p42, %p43
    %s46 = sadd.s32 %s45, 1
    %p49 = scmp.eq.s32.totalorder %s11, 1
    %p50 = scmp.ne.s32.totalorder %s45, %s47
    %p51 = scmp.eq.s32.totalorder %s11, 0
    %p52 = por %p50, %p51
    %p53 = scmp.ne.s32.totalorder %s45, %s47
    %p54 = scmp.eq.s32.totalorder %s16, 1
    %p55 = por %p53, %p54
    %p56 = scmp.ne.s32.totalorder %s47, %s48
    %p57 = scmp.eq.s32.totalorder %s16, 0
    %p58 = por %p56, %p57
    %p59 = scmp.ne.s32.totalorder %s47, %s48
    %p60 = scmp.eq.s32.totalorder %s17, 1
    %p61 = por %p59, %p60
    %p63 = scmp.ne.s32.totalorder %s48, %s62
    %p64 = scmp.eq.s32.totalorder %s17, 0
    %p65 = por %p63, %p64
    %s67 = sadd.s32 %s66, 1
    %p70 = scmp.eq.s32.totalorder %s11, 1
    %p71 = scmp.ne.s32.totalorder %s66, %s68
    %p72 = scmp.eq.s32.totalorder %s11, 0
    %p73 = por %p71, %p72
    %p74 = scmp.ne.s32.totalorder %s66, %s68
    %p75 = scmp.eq.s32.totalorder %s16, 1
    %p76 = por %p74, %p75
    %p77 = scmp.ne.s32.totalorder %s68, %s69
    %p78 = scmp.eq.s32.totalorder %s16, 0
    %p79 = por %p77, %p78
    %p80 = scmp.ne.s32.totalorder %s68, %s69
    %p81 = scmp.eq.s32.totalorder %s17, 1
    %p82 = por %p80, %p81
    %p84 = scmp.ne.s32.totalorder %s69, %s83
    %p85 = scmp.eq.s32.totalorder %s17, 0
    %p86 = por %p84, %p85
    %s87 = ssub.s32 %s11, %s18
    %p88 = scmp.eq.s32.totalorder %s87, 0
    %s90 = sadd.s32 %s89, 1
    %s91 = scalar_select %p88, %s89, %s90
    %p94 = pneg %p88
    %p95 = scmp.eq.s32.totalorder %s11, 1
    %p96 = por %p94, %p95
    %p97 = scmp.ne.s32.totalorder %s89, %s92
    %p98 = scmp.eq.s32.totalorder %s11, 0
    %p99 = por %p97, %p98
    %p100 = scmp.ne.s32.totalorder %s89, %s92
    %p101 = scmp.eq.s32.totalorder %s16, 1
    %p102 = por %p100, %p101
    %p103 = scmp.ne.s32.totalorder %s92, %s93
    %p104 = scmp.eq.s32.totalorder %s16, 0
    %p105 = por %p103, %p104
    %p106 = scmp.ne.s32.totalorder %s92, %s93
    %p107 = scmp.eq.s32.totalorder %s17, 1
    %p108 = por %p106, %p107
    %p110 = scmp.ne.s32.totalorder %s93, %s109
    %p111 = scmp.eq.s32.totalorder %s17, 0
    %p112 = por %p110, %p111
    %s113 = ssub.s32 %s11, %s18
    %p114 = scmp.eq.s32.totalorder %s113, 0
    %s116 = sadd.s32 %s115, 1
    %s117 = scalar_select %p114, %s115, %s116
    %p120 = pneg %p114
    %p121 = scmp.eq.s32.totalorder %s11, 1
    %p122 = por %p120, %p121
    %p123 = scmp.ne.s32.totalorder %s115, %s118
    %p124 = scmp.eq.s32.totalorder %s11, 0
    %p125 = por %p123, %p124
    %p126 = scmp.ne.s32.totalorder %s115, %s118
    %p127 = scmp.eq.s32.totalorder %s16, 1
    %p128 = por %p126, %p127
    %p129 = scmp.ne.s32.totalorder %s118, %s119
    %p130 = scmp.eq.s32.totalorder %s16, 0
    %p131 = por %p129, %p130
    %p132 = scmp.ne.s32.totalorder %s118, %s119
    %p133 = scmp.eq.s32.totalorder %s17, 1
    %p134 = por %p132, %p133
    %p136 = scmp.ne.s32.totalorder %s119, %s135
    %p137 = scmp.eq.s32.totalorder %s17, 0
    %p138 = por %p136, %p137
    %p139 = scmp.le.s32.totalorder 1, %s11
    %p140 = scmp.lt.s32.totalorder %s11, 3
    %p141 = pnand %p139, %p140
    %p142 = pneg %p141
    // Predicated region
    $region9: #{net_forward.8} parent=5 // pred_check
      _
    $region10: #{net_forward.8} parent=5 // pred_check_branch
      %144 = sbr.rel (%p141) target = $region12
    $region11: #{net_forward.8} parent=5 // pred_region
      %s145 = ssub.s32 %s11, 1
      // Predicated region
      $region13: #{net_forward.8} parent=11 // pred_check
        %p146 = pneg %p58
      $region14: #{net_forward.8} parent=11 // pred_check_branch
        %148 = sbr.rel (%p146) target = $region16
      $region15: #{net_forward.8} parent=11 // pred_region
        _
      $region16: #{net_forward.8} parent=11 // pred_fallthru
        _
      // Predicated region
      $region17: #{net_forward.8} parent=11 // pred_check
        %p149 = pneg %p79
      $region18: #{net_forward.8} parent=11 // pred_check_branch
        %151 = sbr.rel (%p149) target = $region20
      $region19: #{net_forward.8} parent=11 // pred_region
        _
      $region20: #{net_forward.8} parent=11 // pred_fallthru
        _
    $region12: #{net_forward.8} parent=5 // pred_fallthru
      _
    %p152 = scmp.lt.s32.totalorder %s11, 2
    // Predicated region
    $region21: #{net_forward.8} parent=5 // pred_check
      %p153 = pneg %p152
    $region22: #{net_forward.8} parent=5 // pred_check_branch
      %155 = sbr.rel (%p153) target = $region24
    $region23: #{net_forward.8} parent=5 // pred_region
      // Predicated region
      $region25: #{net_forward.8} parent=23 // pred_check
        %p156 = pneg %p31
      $region26: #{net_forward.8} parent=23 // pred_check_branch
        %158 = sbr.rel (%p156) target = $region28
      $region27: #{net_forward.8} parent=23 // pred_region
        %p159 = scmp.lt.s32.totalorder %s11, 1
        %s160 = scalar_select %p159, %s11, 1
        %s161 = smul.addr %s160, 20
        %s162 = smul.addr %s161, 4
        %s163 = scalar_lea.vmem %s0, %s162
      $region28: #{net_forward.8} parent=23 // pred_fallthru
        _
    $region24: #{net_forward.8} parent=5 // pred_fallthru
      _
    %p164 = scmp.le.s32.totalorder 1, %s11
    %p165 = scmp.lt.s32.totalorder %s11, 3
    %p166 = pnand %p164, %p165
    %p167 = pneg %p166
    // Predicated region
    $region29: #{net_forward.8} parent=5 // pred_check
      _
    $region30: #{net_forward.8} parent=5 // pred_check_branch
      %169 = sbr.rel (%p166) target = $region32
    $region31: #{net_forward.8} parent=5 // pred_region
      %s170 = ssub.s32 %s11, 1
      %p171 = scmp.lt.s32.totalorder %s16, 1
      %s172 = scalar_select %p171, %s16, 1
      %s173 = smul.addr %s172, 20
      %s174 = smul.addr %s173, 4
      %s175 = scalar_lea.vmem %s0, %s174
      %p176 = pneg %p37
      %p177 = pneg %p34
      %p178 = pneg %p58
      %p179 = pneg %p55
      %p180 = pneg %p79
      %p181 = pneg %p76
      %p182 = pneg %p105
      %p183 = pneg %p102
      %p184 = scmp.lt.s32.totalorder %s16, 1
      %s185 = scalar_select %p184, %s16, 1
      %s186 = smul.addr %s185, 8
      %s187 = smul.addr %s186, 4
      %s188 = scalar_lea.vmem %s3, %s187
      %p189 = pneg %p131
      %p190 = pneg %p128
      %p191 = scmp.lt.s32.totalorder %s16, 1
      %s192 = scalar_select %p191, %s16, 1
      %s193 = scalar_lea.vmem %s4, %s192
      %p194 = scmp.lt.s32.totalorder %s16, 1
      %s195 = scalar_select %p194, %s16, 1
      %s196 = smul.addr %s195, 20
      %s197 = smul.addr %s196, 4
      %s198 = scalar_lea.vmem %s0, %s197
      %p199 = scmp.lt.s32.totalorder %s16, 1
      %s200 = scalar_select %p199, %s16, 1
      %s201 = smul.addr %s200, 8
      %s202 = smul.addr %s201, 4
      %s203 = scalar_lea.vmem %s3, %s202
      %p204 = scmp.lt.s32.totalorder %s16, 1
      %s205 = scalar_select %p204, %s16, 1
      %s206 = scalar_lea.vmem %s4, %s205
      %v207 = vld [vmem:[%s198] sm:$0xf]
      %v208 = vld [vmem:[%s198 + $0x4] sm:$0x1]
      %v209 = vld [vmem:[%s198 + $0x8] sm:$0xf]
      %v210 = vld [vmem:[%s198 + $0xc] sm:$0x1]
      %v211 = vld [vmem:[%s198 + $0x10] sm:$0xf]
      %v212 = vld [vmem:[%s198 + $0x14] sm:$0x1]
      %v213 = vld [vmem:[%s198 + $0x18] sm:$0xf]
      %v214 = vld [vmem:[%s198 + $0x1c] sm:$0x1]
      %v215 = vld [vmem:[%s198 + $0x20] sm:$0xf]
      %v216 = vld [vmem:[%s198 + $0x24] sm:$0x1]
      %v217 = vld [vmem:[%s198 + $0x28] sm:$0xf]
      %v218 = vld [vmem:[%s198 + $0x2c] sm:$0x1]
      %v219 = vld [vmem:[%s198 + $0x30] sm:$0xf]
      %v220 = vld [vmem:[%s198 + $0x34] sm:$0x1]
      %v221 = vld [vmem:[%s198 + $0x38] sm:$0xf]
      %v222 = vld [vmem:[%s198 + $0x3c] sm:$0x1]
      %v223 = vld [vmem:[%s198 + $0x40] sm:$0xf]
      %v224 = vld [vmem:[%s198 + $0x44] sm:$0x1]
      %v225 = vld [vmem:[%s198 + $0x48] sm:$0xf]
      %v226 = vld [vmem:[%s198 + $0x4c] sm:$0x1]
      %v227 = vunpack.c.l.bf16 %v207
      %v228 = vunpack.c.l.bf16 %v208
      %v229 = vunpack.c.l.bf16 %v209
      %v230 = vunpack.c.l.bf16 %v210
      %v231 = vunpack.c.l.bf16 %v211
      %v232 = vunpack.c.l.bf16 %v212
      %v233 = vunpack.c.l.bf16 %v213
      %v234 = vunpack.c.l.bf16 %v214
      %v235 = vunpack.c.l.bf16 %v215
      %v236 = vunpack.c.l.bf16 %v216
      %v237 = vunpack.c.l.bf16 %v217
      %v238 = vunpack.c.l.bf16 %v218
      %v239 = vunpack.c.l.bf16 %v219
      %v240 = vunpack.c.l.bf16 %v220
      %v241 = vunpack.c.l.bf16 %v221
      %v242 = vunpack.c.l.bf16 %v222
      %v243 = vunpack.c.l.bf16 %v223
      %v244 = vunpack.c.l.bf16 %v224
      %v245 = vunpack.c.l.bf16 %v225
      %v246 = vunpack.c.l.bf16 %v226
      %v247 = vld [vmem:[%s1] sm:$0xff]
      %v248 = vld [vmem:[%s1 + $0x8] sm:$0x1]
      %v249 = vlaneseq
      %v250 = vshrl.u32 %v249, 7
      %v251 = vsub.s32 0, %v250
      %v252 = vrot.slane %v247, %v251
      %v253 = vmul.f32 %v227, %v252
      %v254 = vmul.f32 %v229, %v252
      %v255 = vmul.f32 %v231, %v252
      %v256 = vmul.f32 %v233, %v252
      %v257 = vmul.f32 %v235, %v252
      %v258 = vmul.f32 %v237, %v252
      %v259 = vmul.f32 %v239, %v252
      %v260 = vmul.f32 %v241, %v252
      %v261 = vadd.f32 %v253, 0.0
      %v262 = vadd.f32 %v254, 0.0
      %v263 = vadd.f32 %v255, 0.0
      %v264 = vadd.f32 %v256, 0.0
      %v265 = vadd.f32 %v257, 0.0
      %v266 = vadd.f32 %v258, 0.0
      %v267 = vadd.f32 %v259, 0.0
      %v268 = vadd.f32 %v260, 0.0
      %v269 = vlaneseq
      %v270 = vshrl.u32 %v269, 7
      %v271 = vsub.s32 1, %v270
      %v272 = vrot.slane %v247, %v271
      %v273 = vmul.f32 %v227, %v272
      %v274 = vmul.f32 %v228, %v272
      %v275 = vmul.f32 %v229, %v272
      %v276 = vmul.f32 %v230, %v272
      %v277 = vmul.f32 %v231, %v272
      %v278 = vmul.f32 %v232, %v272
      %v279 = vmul.f32 %v233, %v272
      %v280 = vmul.f32 %v234, %v272
      %v281 = vmul.f32 %v235, %v272
      %v282 = vmul.f32 %v236, %v272
      %v283 = vmul.f32 %v237, %v272
      %v284 = vmul.f32 %v238, %v272
      %v285 = vmul.f32 %v239, %v272
      %v286 = vmul.f32 %v240, %v272
      %v287 = vmul.f32 %v241, %v272
      %v288 = vmul.f32 %v242, %v272
      %vm305 = vcmask 1046528
      %v306 = vrot.slane %v273, 1
      %v307 = vrot.slane %v274, 1
      %v308 = vsel %vm305, %v306, %v307
      %v309 = vrot.slane %v275, 1
      %v310 = vrot.slane %v276, 1
      %v311 = vsel %vm305, %v309, %v310
      %v312 = vrot.slane %v277, 1
      %v313 = vrot.slane %v278, 1
      %v314 = vsel %vm305, %v312, %v313
      %v315 = vrot.slane %v279, 1
      %v316 = vrot.slane %v280, 1
      %v317 = vsel %vm305, %v315, %v316
      %v318 = vrot.slane %v281, 1
      %v319 = vrot.slane %v282, 1
      %v320 = vsel %vm305, %v318, %v319
      %v321 = vrot.slane %v283, 1
      %v322 = vrot.slane %v284, 1
      %v323 = vsel %vm305, %v321, %v322
      %v324 = vrot.slane %v285, 1
      %v325 = vrot.slane %v286, 1
      %v326 = vsel %vm305, %v324, %v325
      %v327 = vrot.slane %v287, 1
      %v328 = vrot.slane %v288, 1
      %v329 = vsel %vm305, %v327, %v328
      %v338 = vadd.f32 %v261, %v308
      %v339 = vadd.f32 %v262, %v311
      %v340 = vadd.f32 %v263, %v314
      %v341 = vadd.f32 %v264, %v317
      %v342 = vadd.f32 %v265, %v320
      %v343 = vadd.f32 %v266, %v323
      %v344 = vadd.f32 %v267, %v326
      %v345 = vadd.f32 %v268, %v329
      %v346 = vlaneseq
      %v347 = vshrl.u32 %v346, 7
      %v348 = vsub.s32 2, %v347
      %v349 = vrot.slane %v247, %v348
      %v350 = vmul.f32 %v227, %v349
      %v351 = vmul.f32 %v228, %v349
      %v352 = vmul.f32 %v229, %v349
      %v353 = vmul.f32 %v230, %v349
      %v354 = vmul.f32 %v231, %v349
      %v355 = vmul.f32 %v232, %v349
      %v356 = vmul.f32 %v233, %v349
      %v357 = vmul.f32 %v234, %v349
      %v358 = vmul.f32 %v235, %v349
      %v359 = vmul.f32 %v236, %v349
      %v360 = vmul.f32 %v237, %v349
      %v361 = vmul.f32 %v238, %v349
      %v362 = vmul.f32 %v239, %v349
      %v363 = vmul.f32 %v240, %v349
      %v364 = vmul.f32 %v241, %v349
      %v365 = vmul.f32 %v242, %v349
      %vm382 = vcmask 1045504
      %v383 = vrot.slane %v350, 2
      %v384 = vrot.slane %v351, 2
      %v385 = vsel %vm382, %v383, %v384
      %v386 = vrot.slane %v352, 2
      %v387 = vrot.slane %v353, 2
      %v388 = vsel %vm382, %v386, %v387
      %v389 = vrot.slane %v354, 2
      %v390 = vrot.slane %v355, 2
      %v391 = vsel %vm382, %v389, %v390
      %v392 = vrot.slane %v356, 2
      %v393 = vrot.slane %v357, 2
      %v394 = vsel %vm382, %v392, %v393
      %v395 = vrot.slane %v358, 2
      %v396 = vrot.slane %v359, 2
      %v397 = vsel %vm382, %v395, %v396
      %v398 = vrot.slane %v360, 2
      %v399 = vrot.slane %v361, 2
      %v400 = vsel %vm382, %v398, %v399
      %v401 = vrot.slane %v362, 2
      %v402 = vrot.slane %v363, 2
      %v403 = vsel %vm382, %v401, %v402
      %v404 = vrot.slane %v364, 2
      %v405 = vrot.slane %v365, 2
      %v406 = vsel %vm382, %v404, %v405
      %v415 = vadd.f32 %v338, %v385
      %v416 = vadd.f32 %v339, %v388
      %v417 = vadd.f32 %v340, %v391
      %v418 = vadd.f32 %v341, %v394
      %v419 = vadd.f32 %v342, %v397
      %v420 = vadd.f32 %v343, %v400
      %v421 = vadd.f32 %v344, %v403
      %v422 = vadd.f32 %v345, %v406
      %v423 = vlaneseq
      %v424 = vshrl.u32 %v423, 7
      %v425 = vsub.s32 3, %v424
      %v426 = vrot.slane %v247, %v425
      %v427 = vmul.f32 %v229, %v426
      %v428 = vmul.f32 %v231, %v426
      %v429 = vmul.f32 %v233, %v426
      %v430 = vmul.f32 %v235, %v426
      %v431 = vmul.f32 %v237, %v426
      %v432 = vmul.f32 %v239, %v426
      %v433 = vmul.f32 %v241, %v426
      %v434 = vmul.f32 %v243, %v426
      %v435 = vadd.f32 %v415, %v427
      %v436 = vadd.f32 %v416, %v428
      %v437 = vadd.f32 %v417, %v429
      %v438 = vadd.f32 %v418, %v430
      %v439 = vadd.f32 %v419, %v431
      %v440 = vadd.f32 %v420, %v432
      %v441 = vadd.f32 %v421, %v433
      %v442 = vadd.f32 %v422, %v434
      %v443 = vlaneseq
      %v444 = vshrl.u32 %v443, 7
      %v445 = vsub.s32 4, %v444
      %v446 = vrot.slane %v247, %v445
      %v447 = vmul.f32 %v229, %v446
      %v448 = vmul.f32 %v230, %v446
      %v449 = vmul.f32 %v231, %v446
      %v450 = vmul.f32 %v232, %v446
      %v451 = vmul.f32 %v233, %v446
      %v452 = vmul.f32 %v234, %v446
      %v453 = vmul.f32 %v235, %v446
      %v454 = vmul.f32 %v236, %v446
      %v455 = vmul.f32 %v237, %v446
      %v456 = vmul.f32 %v238, %v446
      %v457 = vmul.f32 %v239, %v446
      %v458 = vmul.f32 %v240, %v446
      %v459 = vmul.f32 %v241, %v446
      %v460 = vmul.f32 %v242, %v446
      %v461 = vmul.f32 %v243, %v446
      %v462 = vmul.f32 %v244, %v446
      %v479 = vrot.slane %v447, 1
      %v480 = vrot.slane %v448, 1
      %v481 = vsel %vm305, %v479, %v480
      %v482 = vrot.slane %v449, 1
      %v483 = vrot.slane %v450, 1
      %v484 = vsel %vm305, %v482, %v483
      %v485 = vrot.slane %v451, 1
      %v486 = vrot.slane %v452, 1
      %v487 = vsel %vm305, %v485, %v486
      %v488 = vrot.slane %v453, 1
      %v489 = vrot.slane %v454, 1
      %v490 = vsel %vm305, %v488, %v489
      %v491 = vrot.slane %v455, 1
      %v492 = vrot.slane %v456, 1
      %v493 = vsel %vm305, %v491, %v492
      %v494 = vrot.slane %v457, 1
      %v495 = vrot.slane %v458, 1
      %v496 = vsel %vm305, %v494, %v495
      %v497 = vrot.slane %v459, 1
      %v498 = vrot.slane %v460, 1
      %v499 = vsel %vm305, %v497, %v498
      %v500 = vrot.slane %v461, 1
      %v501 = vrot.slane %v462, 1
      %v502 = vsel %vm305, %v500, %v501
      %v511 = vadd.f32 %v435, %v481
      %v512 = vadd.f32 %v436, %v484
      %v513 = vadd.f32 %v437, %v487
      %v514 = vadd.f32 %v438, %v490
      %v515 = vadd.f32 %v439, %v493
      %v516 = vadd.f32 %v440, %v496
      %v517 = vadd.f32 %v441, %v499
      %v518 = vadd.f32 %v442, %v502
      %v519 = vlaneseq
      %v520 = vshrl.u32 %v519, 7
      %v521 = vsub.s32 5, %v520
      %v522 = vrot.slane %v247, %v521
      %v523 = vmul.f32 %v229, %v522
      %v524 = vmul.f32 %v230, %v522
      %v525 = vmul.f32 %v231, %v522
      %v526 = vmul.f32 %v232, %v522
      %v527 = vmul.f32 %v233, %v522
      %v528 = vmul.f32 %v234, %v522
      %v529 = vmul.f32 %v235, %v522
      %v530 = vmul.f32 %v236, %v522
      %v531 = vmul.f32 %v237, %v522
      %v532 = vmul.f32 %v238, %v522
      %v533 = vmul.f32 %v239, %v522
      %v534 = vmul.f32 %v240, %v522
      %v535 = vmul.f32 %v241, %v522
      %v536 = vmul.f32 %v242, %v522
      %v537 = vmul.f32 %v243, %v522
      %v538 = vmul.f32 %v244, %v522
      %v555 = vrot.slane %v523, 2
      %v556 = vrot.slane %v524, 2
      %v557 = vsel %vm382, %v555, %v556
      %v558 = vrot.slane %v525, 2
      %v559 = vrot.slane %v526, 2
      %v560 = vsel %vm382, %v558, %v559
      %v561 = vrot.slane %v527, 2
      %v562 = vrot.slane %v528, 2
      %v563 = vsel %vm382, %v561, %v562
      %v564 = vrot.slane %v529, 2
      %v565 = vrot.slane %v530, 2
      %v566 = vsel %vm382, %v564, %v565
      %v567 = vrot.slane %v531, 2
      %v568 = vrot.slane %v532, 2
      %v569 = vsel %vm382, %v567, %v568
      %v570 = vrot.slane %v533, 2
      %v571 = vrot.slane %v534, 2
      %v572 = vsel %vm382, %v570, %v571
      %v573 = vrot.slane %v535, 2
      %v574 = vrot.slane %v536, 2
      %v575 = vsel %vm382, %v573, %v574
      %v576 = vrot.slane %v537, 2
      %v577 = vrot.slane %v538, 2
      %v578 = vsel %vm382, %v576, %v577
      %v587 = vadd.f32 %v511, %v557
      %v588 = vadd.f32 %v512, %v560
      %v589 = vadd.f32 %v513, %v563
      %v590 = vadd.f32 %v514, %v566
      %v591 = vadd.f32 %v515, %v569
      %v592 = vadd.f32 %v516, %v572
      %v593 = vadd.f32 %v517, %v575
      %v594 = vadd.f32 %v518, %v578
      %v595 = vlaneseq
      %v596 = vshrl.u32 %v595, 7
      %v597 = vsub.s32 6, %v596
      %v598 = vrot.slane %v247, %v597
      %v599 = vmul.f32 %v231, %v598
      %v600 = vmul.f32 %v233, %v598
      %v601 = vmul.f32 %v235, %v598
      %v602 = vmul.f32 %v237, %v598
      %v603 = vmul.f32 %v239, %v598
      %v604 = vmul.f32 %v241, %v598
      %v605 = vmul.f32 %v243, %v598
      %v606 = vmul.f32 %v245, %v598
      %v607 = vadd.f32 %v587, %v599
      %v608 = vadd.f32 %v588, %v600
      %v609 = vadd.f32 %v589, %v601
      %v610 = vadd.f32 %v590, %v602
      %v611 = vadd.f32 %v591, %v603
      %v612 = vadd.f32 %v592, %v604
      %v613 = vadd.f32 %v593, %v605
      %v614 = vadd.f32 %v594, %v606
      %v615 = vlaneseq
      %v616 = vshrl.u32 %v615, 7
      %v617 = vsub.s32 7, %v616
      %v618 = vrot.slane %v247, %v617
      %v619 = vmul.f32 %v231, %v618
      %v620 = vmul.f32 %v232, %v618
      %v621 = vmul.f32 %v233, %v618
      %v622 = vmul.f32 %v234, %v618
      %v623 = vmul.f32 %v235, %v618
      %v624 = vmul.f32 %v236, %v618
      %v625 = vmul.f32 %v237, %v618
      %v626 = vmul.f32 %v238, %v618
      %v627 = vmul.f32 %v239, %v618
      %v628 = vmul.f32 %v240, %v618
      %v629 = vmul.f32 %v241, %v618
      %v630 = vmul.f32 %v242, %v618
      %v631 = vmul.f32 %v243, %v618
      %v632 = vmul.f32 %v244, %v618
      %v633 = vmul.f32 %v245, %v618
      %v634 = vmul.f32 %v246, %v618
      %v651 = vrot.slane %v619, 1
      %v652 = vrot.slane %v620, 1
      %v653 = vsel %vm305, %v651, %v652
      %v654 = vrot.slane %v621, 1
      %v655 = vrot.slane %v622, 1
      %v656 = vsel %vm305, %v654, %v655
      %v657 = vrot.slane %v623, 1
      %v658 = vrot.slane %v624, 1
      %v659 = vsel %vm305, %v657, %v658
      %v660 = vrot.slane %v625, 1
      %v661 = vrot.slane %v626, 1
      %v662 = vsel %vm305, %v660, %v661
      %v663 = vrot.slane %v627, 1
      %v664 = vrot.slane %v628, 1
      %v665 = vsel %vm305, %v663, %v664
      %v666 = vrot.slane %v629, 1
      %v667 = vrot.slane %v630, 1
      %v668 = vsel %vm305, %v666, %v667
      %v669 = vrot.slane %v631, 1
      %v670 = vrot.slane %v632, 1
      %v671 = vsel %vm305, %v669, %v670
      %v672 = vrot.slane %v633, 1
      %v673 = vrot.slane %v634, 1
      %v674 = vsel %vm305, %v672, %v673
      %v683 = vadd.f32 %v607, %v653
      %v684 = vadd.f32 %v608, %v656
      %v685 = vadd.f32 %v609, %v659
      %v686 = vadd.f32 %v610, %v662
      %v687 = vadd.f32 %v611, %v665
      %v688 = vadd.f32 %v612, %v668
      %v689 = vadd.f32 %v613, %v671
      %v690 = vadd.f32 %v614, %v674
      %v691 = vlaneseq
      %v692 = vshrl.u32 %v691, 7
      %v693 = vsub.s32 0, %v692
      %v694 = vrot.slane %v248, %v693
      %v695 = vmul.f32 %v231, %v694
      %v696 = vmul.f32 %v232, %v694
      %v697 = vmul.f32 %v233, %v694
      %v698 = vmul.f32 %v234, %v694
      %v699 = vmul.f32 %v235, %v694
      %v700 = vmul.f32 %v236, %v694
      %v701 = vmul.f32 %v237, %v694
      %v702 = vmul.f32 %v238, %v694
      %v703 = vmul.f32 %v239, %v694
      %v704 = vmul.f32 %v240, %v694
      %v705 = vmul.f32 %v241, %v694
      %v706 = vmul.f32 %v242, %v694
      %v707 = vmul.f32 %v243, %v694
      %v708 = vmul.f32 %v244, %v694
      %v709 = vmul.f32 %v245, %v694
      %v710 = vmul.f32 %v246, %v694
      %v727 = vrot.slane %v695, 2
      %v728 = vrot.slane %v696, 2
      %v729 = vsel %vm382, %v727, %v728
      %v730 = vrot.slane %v697, 2
      %v731 = vrot.slane %v698, 2
      %v732 = vsel %vm382, %v730, %v731
      %v733 = vrot.slane %v699, 2
      %v734 = vrot.slane %v700, 2
      %v735 = vsel %vm382, %v733, %v734
      %v736 = vrot.slane %v701, 2
      %v737 = vrot.slane %v702, 2
      %v738 = vsel %vm382, %v736, %v737
      %v739 = vrot.slane %v703, 2
      %v740 = vrot.slane %v704, 2
      %v741 = vsel %vm382, %v739, %v740
      %v742 = vrot.slane %v705, 2
      %v743 = vrot.slane %v706, 2
      %v744 = vsel %vm382, %v742, %v743
      %v745 = vrot.slane %v707, 2
      %v746 = vrot.slane %v708, 2
      %v747 = vsel %vm382, %v745, %v746
      %v748 = vrot.slane %v709, 2
      %v749 = vrot.slane %v710, 2
      %v750 = vsel %vm382, %v748, %v749
      %v759 = vadd.f32 %v683, %v729
      %v760 = vadd.f32 %v684, %v732
      %v761 = vadd.f32 %v685, %v735
      %v762 = vadd.f32 %v686, %v738
      %v763 = vadd.f32 %v687, %v741
      %v764 = vadd.f32 %v688, %v744
      %v765 = vadd.f32 %v689, %v747
      %v766 = vadd.f32 %v690, %v750
      %v767 = vld [vmem:[%s2] sm:$0x1]
      %v769 = vlaneseq
      %v770 = vshrl.u32 %v769, 7
      %v771 = vsub.s32 0, %v770
      %v772 = vrot.slane %v767, %v771
      %v774 = vadd.f32 %v759, %v772
      %v775 = vadd.f32 %v760, %v772
      %v776 = vadd.f32 %v761, %v772
      %v777 = vadd.f32 %v762, %v772
      %v778 = vadd.f32 %v763, %v772
      %v779 = vadd.f32 %v764, %v772
      %v780 = vadd.f32 %v765, %v772
      %v781 = vadd.f32 %v766, %v772
      %v782 = vxor.u32 %v774, 2147483648
      %v783 = vxor.u32 %v775, 2147483648
      %v784 = vxor.u32 %v776, 2147483648
      %v785 = vxor.u32 %v777, 2147483648
      %v786 = vxor.u32 %v778, 2147483648
      %v787 = vxor.u32 %v779, 2147483648
      %v788 = vxor.u32 %v780, 2147483648
      %v789 = vxor.u32 %v781, 2147483648
      %v790 = vmul.f32 %v782, 1.442695
      %v791 = vpow.pop %v790
      %v792 = vmul.f32 %v783, 1.442695
      %v793 = vpow.pop %v792
      %v794 = vmul.f32 %v784, 1.442695
      %v795 = vpow.pop %v794
      %v796 = vmul.f32 %v785, 1.442695
      %v797 = vpow.pop %v796
      %v798 = vmul.f32 %v786, 1.442695
      %v799 = vpow.pop %v798
      %v800 = vmul.f32 %v787, 1.442695
      %v801 = vpow.pop %v800
      %v802 = vmul.f32 %v788, 1.442695
      %v803 = vpow.pop %v802
      %v804 = vmul.f32 %v789, 1.442695
      %v805 = vpow.pop %v804
      %v806 = vadd.f32 %v791, 1.0
      %v807 = vadd.f32 %v793, 1.0
      %v808 = vadd.f32 %v795, 1.0
      %v809 = vadd.f32 %v797, 1.0
      %v810 = vadd.f32 %v799, 1.0
      %v811 = vadd.f32 %v801, 1.0
      %v812 = vadd.f32 %v803, 1.0
      %v813 = vadd.f32 %v805, 1.0
      %v814 = vrcp.pop %v806
      %v815 = vmul.f32 1.0, %v814
      %v816 = vrcp.pop %v807
      %v817 = vmul.f32 1.0, %v816
      %v818 = vrcp.pop %v808
      %v819 = vmul.f32 1.0, %v818
      %v820 = vrcp.pop %v809
      %v821 = vmul.f32 1.0, %v820
      %v822 = vrcp.pop %v810
      %v823 = vmul.f32 1.0, %v822
      %v824 = vrcp.pop %v811
      %v825 = vmul.f32 1.0, %v824
      %v826 = vrcp.pop %v812
      %v827 = vmul.f32 1.0, %v826
      %v828 = vrcp.pop %v813
      %v829 = vmul.f32 1.0, %v828
      %v830 = vmul.f32 %v774, %v815
      %v831 = vmul.f32 %v775, %v817
      %v832 = vmul.f32 %v776, %v819
      %v833 = vmul.f32 %v777, %v821
      %v834 = vmul.f32 %v778, %v823
      %v835 = vmul.f32 %v779, %v825
      %v836 = vmul.f32 %v780, %v827
      %v837 = vmul.f32 %v781, %v829
      %v838 = vpack.c.bf16 %v830, %v830
      %v839 = vpack.c.bf16 %v831, %v831
      %v840 = vpack.c.bf16 %v832, %v832
      %v841 = vpack.c.bf16 %v833, %v833
      %v842 = vpack.c.bf16 %v834, %v834
      %v843 = vpack.c.bf16 %v835, %v835
      %v844 = vpack.c.bf16 %v836, %v836
      %v845 = vpack.c.bf16 %v837, %v837
      %846 = vst [vmem:[%s203] sm:$0xf] %v838
      %847 = vst [vmem:[%s203 + $0x4] sm:$0xf] %v839
      %848 = vst [vmem:[%s203 + $0x8] sm:$0xf] %v840
      %849 = vst [vmem:[%s203 + $0xc] sm:$0xf] %v841
      %850 = vst [vmem:[%s203 + $0x10] sm:$0xf] %v842
      %851 = vst [vmem:[%s203 + $0x14] sm:$0xf] %v843
      %852 = vst [vmem:[%s203 + $0x18] sm:$0xf] %v844
      %853 = vst [vmem:[%s203 + $0x1c] sm:$0xf] %v845
      %v854 = vadd.f32 %v830, %v831
      %v855 = vadd.f32 %v854, %v832
      %v856 = vadd.f32 %v855, %v833
      %v857 = vadd.f32 %v856, %v834
      %v858 = vadd.f32 %v857, %v835
      %v859 = vadd.f32 %v858, %v836
      %v860 = vadd.f32 %v859, %v837
      %v861 = vrot.slane %v860, 4
      %v862 = vadd.f32 %v860, %v861
      %v863 = vrot.slane %v862, 2
      %v864 = vadd.f32 %v862, %v863
      %v865 = vrot.slane %v864, 1
      %v866 = vadd.f32 %v864, %v865
      %v867 = vmul.f32 %v866, 0.015625
      %v868 = vpack.c.bf16 %v867, %v867
      %vm869 = vcmask 1040384
      %vm870 = vsmask.f32 256
      %vm871 = vmand %vm869, %vm870
      %v872 = vld [vmem:[%s206] sm:$0x1]
      %v873 = vsel %vm871, %v868, %v872
      %874 = vst [vmem:[%s206] sm:$0x1] %v873
      %p875 = scmp.lt.s32.totalorder %s16, 1
      %s876 = scalar_select %p875, %s16, 1
      %s877 = smul.addr %s876, 8
      %s878 = smul.addr %s877, 4
      %s879 = scalar_lea.vmem %s3, %s878
      %p880 = scmp.lt.s32.totalorder %s16, 1
      %s881 = scalar_select %p880, %s16, 1
      %s882 = scalar_lea.vmem %s4, %s881
      // Predicated region
      $region33: #{net_forward.8} parent=31 // pred_check
        %p883 = pneg %p102
      $region34: #{net_forward.8} parent=31 // pred_check_branch
        %885 = sbr.rel (%p883) target = $region36
      $region35: #{net_forward.8} parent=31 // pred_region
        _
      $region36: #{net_forward.8} parent=31 // pred_fallthru
        _
      // Predicated region
      $region37: #{net_forward.8} parent=31 // pred_check
        %p886 = pneg %p128
      $region38: #{net_forward.8} parent=31 // pred_check_branch
        %888 = sbr.rel (%p886) target = $region40
      $region39: #{net_forward.8} parent=31 // pred_region
        _
      $region40: #{net_forward.8} parent=31 // pred_fallthru
        _
    $region32: #{net_forward.8} parent=5 // pred_fallthru
      _
    %p889 = scmp.le.s32.totalorder 2, %s11
    // Predicated region
    $region41: #{net_forward.8} parent=5 // pred_check
      %p890 = pneg %p889
    $region42: #{net_forward.8} parent=5 // pred_check_branch
      %892 = sbr.rel (%p890) target = $region44
    $region43: #{net_forward.8} parent=5 // pred_region
      %s893 = ssub.s32 %s11, 2
      // Predicated region
      $region45: #{net_forward.8} parent=43 // pred_check
        %p894 = pneg %p108
      $region46: #{net_forward.8} parent=43 // pred_check_branch
        %896 = sbr.rel (%p894) target = $region48
      $region47: #{net_forward.8} parent=43 // pred_region
        %p897 = scmp.lt.s32.totalorder %s17, 1
        %s898 = scalar_select %p897, %s17, 1
        %s899 = smul.addr %s898, 8
        %s900 = smul.addr %s899, 4
        %s901 = scalar_lea.vmem %s3, %s900
      $region48: #{net_forward.8} parent=43 // pred_fallthru
        _
      // Predicated region
      $region49: #{net_forward.8} parent=43 // pred_check
        %p902 = pneg %p134
      $region50: #{net_forward.8} parent=43 // pred_check_branch
        %904 = sbr.rel (%p902) target = $region52
      $region51: #{net_forward.8} parent=43 // pred_region
        %p905 = scmp.lt.s32.totalorder %s17, 1
        %s906 = scalar_select %p905, %s17, 1
        %s907 = scalar_lea.vmem %s4, %s906
      $region52: #{net_forward.8} parent=43 // pred_fallthru
        _
    $region44: #{net_forward.8} parent=5 // pred_fallthru
      _
  $region6: #{net_forward.8} parent=0 // loop_footer
    %s15 = sadd.s32 1, %s11
  $region7: #{net_forward.8} parent=0 // loop_footer_branch
    %10 = sbr.rel target = $region3
  $region8: #{net_forward.8} parent=0 // loop_exit
    _

// kernel: net_forward.9
$region0: #{net_forward.9}
  #allocation0 [shape = 'u32[]', space=smem, size = 0x4, offset = 0x4, fixed_abs, tag = 'smem constant byte address 0x4 - core index']
  #allocation1 [shape = 'u32[144,128]{1,0:T(1,128)}', space=vmem, size = 0x12000, scoped, tag = 'internal scratch']
  %s0 = inlined_call_operand.vmem [shape: bf16[2,1,128], index: 0, kind: input, shape index: {}]
  %s1 = inlined_call_operand.vmem [shape: bf16[128,8], index: 1, kind: input, shape index: {}]
  %s2 = inlined_call_operand.vmem [shape: f32[1,8], index: 2, kind: input, shape index: {}]
  %s3 = inlined_call_operand.vmem [shape: bf16[8,128], index: 3, kind: input, shape index: {}]
  %s4 = inlined_call_operand.vmem [shape: f32[1,128], index: 4, kind: input, shape index: {}]
  %s5 = inlined_call_operand.vmem [shape: bf16[2,1,128], index: 5, kind: output, shape index: {}]
  %s6 = sld [smem:[#allocation0]]
  $region30: #{net_forward.9} parent=0
    _
  %s8 = ssub.s32 1, %s6
  %s9 = scalar_select 0, %s8, %s6
  // Predicated region
  $region2: #{net_forward.9} parent=0 // pred_check
    _
  $region3: #{net_forward.9} parent=0 // pred_check_branch
    %11 = sbr.rel (0) target = $region5
  $region4: #{net_forward.9} parent=0 // pred_region
    _
  $region5: #{net_forward.9} parent=0 // pred_fallthru
    _
  // Predicated region
  $region6: #{net_forward.9} parent=0 // pred_check
    _
  $region7: #{net_forward.9} parent=0 // pred_check_branch
    %13 = sbr.rel (0) target = $region9
  $region8: #{net_forward.9} parent=0 // pred_region
    _
  $region9: #{net_forward.9} parent=0 // pred_fallthru
    _
  // Predicated region
  $region10: #{net_forward.9} parent=0 // pred_check
    _
  $region11: #{net_forward.9} parent=0 // pred_check_branch
    %15 = sbr.rel (0) target = $region13
  $region12: #{net_forward.9} parent=0 // pred_region
    _
  $region13: #{net_forward.9} parent=0 // pred_fallthru
    _
  // Predicated region
  $region14: #{net_forward.9} parent=0 // pred_check
    _
  $region15: #{net_forward.9} parent=0 // pred_check_branch
    %17 = sbr.rel (0) target = $region17
  $region16: #{net_forward.9} parent=0 // pred_region
    _
  $region17: #{net_forward.9} parent=0 // pred_fallthru
    _
  // Predicated region
  $region18: #{net_forward.9} parent=0 // pred_check
    _
  $region19: #{net_forward.9} parent=0 // pred_check_branch
    %19 = sbr.rel (0) target = $region21
  $region20: #{net_forward.9} parent=0 // pred_region
    _
  $region21: #{net_forward.9} parent=0 // pred_fallthru
    _
  %v21 = vld [vmem:[%s0] sm:$0x1]
  %v22 = vld [vmem:[%s0 + $0x1] sm:$0x1]
  %v23 = vld [vmem:[%s1] sm:$0xf]
  %v24 = vld [vmem:[%s1 + $0x4] sm:$0xf]
  %v25 = vld [vmem:[%s1 + $0x8] sm:$0xf]
  %v26 = vld [vmem:[%s1 + $0xc] sm:$0xf]
  %v27 = vld [vmem:[%s1 + $0x10] sm:$0xf]
  %v28 = vld [vmem:[%s1 + $0x14] sm:$0xf]
  %v29 = vld [vmem:[%s1 + $0x18] sm:$0xf]
  %v30 = vld [vmem:[%s1 + $0x1c] sm:$0xf]
  %v31 = vld [vmem:[%s1 + $0x20] sm:$0xf]
  %v32 = vld [vmem:[%s1 + $0x24] sm:$0xf]
  %v33 = vld [vmem:[%s1 + $0x28] sm:$0xf]
  %v34 = vld [vmem:[%s1 + $0x2c] sm:$0xf]
  %v35 = vld [vmem:[%s1 + $0x30] sm:$0xf]
  %v36 = vld [vmem:[%s1 + $0x34] sm:$0xf]
  %v37 = vld [vmem:[%s1 + $0x38] sm:$0xf]
  %v38 = vld [vmem:[%s1 + $0x3c] sm:$0xf]
  %v39 = vld [vmem:[%s2] sm:$0x1]
  %v41 = vlaneseq
  %v42 = vshrl.u32 %v41, 7
  %v43 = vsub.s32 0, %v42
  %v44 = vrot.slane %v39, %v43
  %v49 = vunpack.c.l.s4 1966171168
  %v50 = vunpack.c.0.s8 %v49
  %v51 = vlaneseq
  %v52 = vshrl.u32 %v51, 7
  %v53 = vsub.s32 %v50, %v52
  %v54 = vrot.slane %v21, %v53
  %v56 = vunpack.c.l.s4 1966171168
  %v57 = vunpack.c.0.s8 %v56
  %v58 = vlaneseq
  %v59 = vshrl.u32 %v58, 7
  %v60 = vsub.s32 %v57, %v59
  %v61 = vrot.slane %v54, %v60
  %v63 = vunpack.c.l.s4 1966171168
  %v64 = vunpack.c.0.s8 %v63
  %v65 = vlaneseq
  %v66 = vshrl.u32 %v65, 7
  %v67 = vsub.s32 %v64, %v66
  %v68 = vrot.slane %v22, %v67
  %v70 = vunpack.c.l.s4 1966171168
  %v71 = vunpack.c.0.s8 %v70
  %v72 = vlaneseq
  %v73 = vshrl.u32 %v72, 7
  %v74 = vsub.s32 %v71, %v73
  %v75 = vrot.slane %v68, %v74
  %v76 = vunpack.c.l.b16 %v61
  %v77 = vunpack.c.l.b16 %v75
  %v78 = vrot.slane %v77, 7
  %vm79 = vcmask 1041409
  %v80 = vsel %vm79, %v78, %v76
  %v81 = vpack.c.b16 %v80, %v80
  %v99 = vunpack.c.l.b16 %v23
  %v100 = vunpack.c.l.b16 %v24
  %v101 = vunpack.c.l.b16 %v25
  %v102 = vunpack.c.l.b16 %v26
  %v103 = vunpack.c.l.b16 %v27
  %v104 = vunpack.c.l.b16 %v28
  %v105 = vunpack.c.l.b16 %v29
  %v106 = vunpack.c.l.b16 %v30
  %v107 = vunpack.c.l.b16 %v31
  %v108 = vunpack.c.l.b16 %v32
  %v109 = vunpack.c.l.b16 %v33
  %v110 = vunpack.c.l.b16 %v34
  %v111 = vunpack.c.l.b16 %v35
  %v112 = vunpack.c.l.b16 %v36
  %v113 = vunpack.c.l.b16 %v37
  %v114 = vunpack.c.l.b16 %v38
  %v115 = vpack.c.b16 %v100, %v99
  %v116 = vpack.c.b16 %v102, %v101
  %v117 = vpack.c.b16 %v104, %v103
  %v118 = vpack.c.b16 %v106, %v105
  %v119 = vpack.c.b16 %v108, %v107
  %v120 = vpack.c.b16 %v110, %v109
  %v121 = vpack.c.b16 %v112, %v111
  %v122 = vpack.c.b16 %v114, %v113
  %131 = vmatprep.subr.bf16.mxu0 0
  %132 = vmatpush1.bf16.msra.mxu0 %v122
  %133 = vmatprep.subr.bf16.mxu0 0
  %134 = vmatpush1.bf16.msra.mxu0 %v121
  %135 = vmatprep.subr.bf16.mxu0 0
  %136 = vmatpush1.bf16.msra.mxu0 %v120
  %137 = vmatprep.subr.bf16.mxu0 0
  %138 = vmatpush1.bf16.msra.mxu0 %v119
  %139 = vmatprep.subr.bf16.mxu0 0
  %140 = vmatpush1.bf16.msra.mxu0 %v118
  %141 = vmatprep.subr.bf16.mxu0 0
  %142 = vmatpush1.bf16.msra.mxu0 %v117
  %143 = vmatprep.subr.bf16.mxu0 0
  %144 = vmatpush1.bf16.msra.mxu0 %v116
  %145 = vmatprep.subr.bf16.mxu0 0
  %146 = vmatpush1.bf16.msra.mxu0 %v115
  %147 = vmatprep.subr.bf16.mxu0 0
  %148 = vmatpush2.bf16.msra.mxu0 0
  %149 = vmatprep.subr.bf16.mxu0 0
  %150 = vmatpush2.bf16.msra.mxu0 0
  %151 = vmatprep.subr.bf16.mxu0 0
  %152 = vmatpush2.bf16.msra.mxu0 0
  %153 = vmatprep.subr.bf16.mxu0 0
  %154 = vmatpush2.bf16.msra.mxu0 0
  %155 = vmatprep.subr.bf16.mxu0 0
  %156 = vmatpush2.bf16.msra.mxu0 0
  %157 = vmatprep.subr.bf16.mxu0 0
  %158 = vmatpush2.bf16.msra.mxu0 0
  %159 = vmatprep.subr.bf16.mxu0 0
  %160 = vmatpush2.bf16.msra.mxu0 0
  %161 = vmatprep.subr.bf16.mxu0 0
  %162 = vmatpush2.bf16.msra.mxu0 0
  %163 = vmatprep.mubr.bf16.mxu0 0
  %164 = vmatmul.mubr.bf16.gmra.mxu0 %v81
  %v165 = vpop.f32.mrf.mxu0
  %v166 = vadd.f32 %v44, %v165
  %v167 = vpop.f32.mrf.mxu0
  %v168 = vpop.f32.mrf.mxu0
  %v169 = vpop.f32.mrf.mxu0
  %170 = vdwg.mxu0
  %v171 = vxor.u32 %v166, 2147483648
  %v172 = vmul.f32 %v171, 1.442695
  %v173 = vpow.pop %v172
  %v174 = vadd.f32 %v173, 1.0
  %v175 = vrcp.pop %v174
  %v176 = vmul.f32 1.0, %v175
  %v177 = vmul.f32 %v166, %v176
  %v178 = vpack.c.bf16 %v177, %v177
  %v179 = vld [vmem:[%s3] sm:$0xf]
  %v180 = vld [vmem:[%s4] sm:$0x1]
  %v182 = vlaneseq
  %v183 = vshrl.u32 %v182, 7
  %v184 = vsub.s32 0, %v183
  %v185 = vrot.slane %v180, %v184
  %vm187 = vcmask 64512
  %v189 = vsel %vm187, %v178, 0
  %vm191 = vcmask 1043456
  %v193 = vsel %vm191, %v179, 0
  %195 = vmatprep.subr.bf16.mxu0 0
  %196 = vmatpush1.bf16.msra.mxu0 0
  %197 = vmatprep.subr.bf16.mxu0 0
  %198 = vmatpush1.bf16.msra.mxu0 0
  %199 = vmatprep.subr.bf16.mxu0 0
  %200 = vmatpush1.bf16.msra.mxu0 0
  %201 = vmatprep.subr.bf16.mxu0 0
  %202 = vmatpush1.bf16.msra.mxu0 0
  %203 = vmatprep.subr.bf16.mxu0 0
  %204 = vmatpush1.bf16.msra.mxu0 0
  %205 = vmatprep.subr.bf16.mxu0 0
  %206 = vmatpush1.bf16.msra.mxu0 0
  %207 = vmatprep.subr.bf16.mxu0 0
  %208 = vmatpush1.bf16.msra.mxu0 0
  %209 = vmatprep.subr.bf16.mxu0 0
  %210 = vmatpush1.bf16.msra.mxu0 %v193
  %211 = vmatprep.subr.bf16.mxu0 0
  %212 = vmatpush2.bf16.msra.mxu0 0
  %213 = vmatprep.subr.bf16.mxu0 0
  %214 = vmatpush2.bf16.msra.mxu0 0
  %215 = vmatprep.subr.bf16.mxu0 0
  %216 = vmatpush2.bf16.msra.mxu0 0
  %217 = vmatprep.subr.bf16.mxu0 0
  %218 = vmatpush2.bf16.msra.mxu0 0
  %219 = vmatprep.subr.bf16.mxu0 0
  %220 = vmatpush2.bf16.msra.mxu0 0
  %221 = vmatprep.subr.bf16.mxu0 0
  %222 = vmatpush2.bf16.msra.mxu0 0
  %223 = vmatprep.subr.bf16.mxu0 0
  %224 = vmatpush2.bf16.msra.mxu0 0
  %225 = vmatprep.subr.bf16.mxu0 0
  %226 = vmatpush2.bf16.msra.mxu0 0
  %227 = vmatprep.mubr.bf16.mxu0 0
  %228 = vmatmul.mubr.bf16.gmra.mxu0 %v189
  %v229 = vpop.f32.mrf.mxu0
  %v230 = vadd.f32 %v185, %v229
  %v231 = vpop.f32.mrf.mxu0
  %v232 = vpop.f32.mrf.mxu0
  %v233 = vpop.f32.mrf.mxu0
  %234 = vdwg.mxu0
  %v235 = vxor.u32 %v230, 2147483648
  %v236 = vmul.f32 %v235, 1.442695
  %v237 = vpow.pop %v236
  %v238 = vadd.f32 %v237, 1.0
  %v239 = vrcp.pop %v238
  %v240 = vmul.f32 1.0, %v239
  %v243 = vunpack.c.l.s4 1966171168
  %v244 = vunpack.c.0.s8 %v243
  %v245 = vlaneseq
  %v246 = vshrl.u32 %v245, 7
  %v247 = vsub.s32 %v244, %v246
  %v248 = vrot.slane %v240, %v247
  %v249 = vcombine.high %v248, %v248
  %v251 = vunpack.c.l.s4 1966171168
  %v252 = vunpack.c.0.s8 %v251
  %v253 = vlaneseq
  %v254 = vshrl.u32 %v253, 7
  %v255 = vsub.s32 %v252, %v254
  %v256 = vrot.slane %v248, %v255
  %v258 = vunpack.c.l.s4 1966171168
  %v259 = vunpack.c.0.s8 %v258
  %v260 = vlaneseq
  %v261 = vshrl.u32 %v260, 7
  %v262 = vsub.s32 %v259, %v261
  %v263 = vrot.slane %v249, %v262
  %v266 = vpack.c.bf16 %v256, %v256
  %v267 = vpack.c.bf16 %v263, %v263
  %vm268 = vcmask 1040384
  %vm269 = vsmask.f32 256
  %vm270 = vmand %vm268, %vm269
  %v271 = vld [vmem:[%s5] sm:$0x1]
  %v272 = vsel %vm270, %v266, %v271
  %273 = vst [vmem:[%s5] sm:$0x1] %v272
  %v274 = vld [vmem:[%s5 + $0x1] sm:$0x1]
  %v275 = vsel %vm270, %v267, %v274
  %276 = vst [vmem:[%s5 + $0x1] sm:$0x1] %v275
  // Predicated region
  $region22: #{net_forward.9} parent=0 // pred_check
    _
  $region23: #{net_forward.9} parent=0 // pred_check_branch
    %278 = sbr.rel (0) target = $region25
  $region24: #{net_forward.9} parent=0 // pred_region
    _
  $region25: #{net_forward.9} parent=0 // pred_fallthru
    _
  // Predicated region
  $region26: #{net_forward.9} parent=0 // pred_check
    _
  $region27: #{net_forward.9} parent=0 // pred_check_branch
    %280 = sbr.rel (0) target = $region29
  $region28: #{net_forward.9} parent=0 // pred_region
    _
  $region29: #{net_forward.9} parent=0 // pred_fallthru
    _

// kernel: net_forward.11
$region0: #{net_forward.11}
  #allocation0 [shape = 'u32[]', space=smem, size = 0x4, offset = 0x4, fixed_abs, tag = 'smem constant byte address 0x4 - core index']
  #allocation1 [shape = 'u32[144,128]{1,0:T(1,128)}', space=vmem, size = 0x12000, scoped, tag = 'internal scratch']
  #allocation2 [shape = 'f32[8,128]{1,0:T(8,128)}', space=vmem, size = 0x1000, scoped, tag = 'scratch operand']
  %s0 = inlined_call_operand.vmem [shape: bf16[8,1280], index: 0, kind: input, shape index: {}]
  %s1 = inlined_call_operand.vmem [shape: bf16[1280,128], index: 1, kind: input, shape index: {}]
  %s2 = inlined_call_operand.vmem [shape: f32[1,128], index: 2, kind: input, shape index: {}]
  %s3 = inlined_call_operand.vmem [shape: f32[8,128], index: 3, kind: output, shape index: {}]
  %s4 = sld [smem:[#allocation0]]
  $region30: #{net_forward.11} parent=0
    _
  %s6 = ssub.s32 1, %s4
  %s7 = scalar_select 0, %s6, %s4
  // Predicated region
  $region2: #{net_forward.11} parent=0 // pred_check
    _
  $region3: #{net_forward.11} parent=0 // pred_check_branch
    %9 = sbr.rel (0) target = $region5
  $region4: #{net_forward.11} parent=0 // pred_region
    _
  $region5: #{net_forward.11} parent=0 // pred_fallthru
    _
  // Predicated region
  $region6: #{net_forward.11} parent=0 // pred_check
    _
  $region7: #{net_forward.11} parent=0 // pred_check_branch
    %11 = sbr.rel (0) target = $region9
  $region8: #{net_forward.11} parent=0 // pred_region
    _
  $region9: #{net_forward.11} parent=0 // pred_fallthru
    _
  // Predicated region
  $region10: #{net_forward.11} parent=0 // pred_check
    _
  $region11: #{net_forward.11} parent=0 // pred_check_branch
    %13 = sbr.rel (0) target = $region13
  $region12: #{net_forward.11} parent=0 // pred_region
    _
  $region13: #{net_forward.11} parent=0 // pred_fallthru
    _
  %p15 = scmp.eq.s32.totalorder 0, 0
  // Predicated region
  $region14: #{net_forward.11} parent=0 // pred_check
    %p16 = pneg %p15
  $region15: #{net_forward.11} parent=0 // pred_check_branch
    %18 = sbr.rel (%p16) target = $region17
  $region16: #{net_forward.11} parent=0 // pred_region
    %19 = vst [vmem:[#allocation2] sm:$0xff] 0.0
  $region17: #{net_forward.11} parent=0 // pred_fallthru
    _
  %v20 = vld [vmem:[#allocation2] sm:$0xff]
  %v21 = vld [vmem:[%s0] sm:$0xff]
  %v22 = vld [vmem:[%s0 + $0x8] sm:$0xff]
  %v23 = vld [vmem:[%s0 + $0x10] sm:$0xff]
  %v24 = vld [vmem:[%s0 + $0x18] sm:$0xff]
  %v25 = vld [vmem:[%s0 + $0x20] sm:$0xff]
  %v26 = vld [vmem:[%s1] sm:$0xf]
  %v27 = vld [vmem:[%s1 + $0x4] sm:$0xf]
  %v28 = vld [vmem:[%s1 + $0x8] sm:$0xf]
  %v29 = vld [vmem:[%s1 + $0xc] sm:$0xf]
  %v30 = vld [vmem:[%s1 + $0x10] sm:$0xf]
  %v31 = vld [vmem:[%s1 + $0x14] sm:$0xf]
  %v32 = vld [vmem:[%s1 + $0x18] sm:$0xf]
  %v33 = vld [vmem:[%s1 + $0x1c] sm:$0xf]
  %v34 = vld [vmem:[%s1 + $0x20] sm:$0xf]
  %v35 = vld [vmem:[%s1 + $0x24] sm:$0xf]
  %v36 = vld [vmem:[%s1 + $0x28] sm:$0xf]
  %v37 = vld [vmem:[%s1 + $0x2c] sm:$0xf]
  %v38 = vld [vmem:[%s1 + $0x30] sm:$0xf]
  %v39 = vld [vmem:[%s1 + $0x34] sm:$0xf]
  %v40 = vld [vmem:[%s1 + $0x38] sm:$0xf]
  %v41 = vld [vmem:[%s1 + $0x3c] sm:$0xf]
  %v42 = vld [vmem:[%s1 + $0x40] sm:$0xf]
  %v43 = vld [vmem:[%s1 + $0x44] sm:$0xf]
  %v44 = vld [vmem:[%s1 + $0x48] sm:$0xf]
  %v45 = vld [vmem:[%s1 + $0x4c] sm:$0xf]
  %v46 = vld [vmem:[%s1 + $0x50] sm:$0xf]
  %v47 = vld [vmem:[%s1 + $0x54] sm:$0xf]
  %v48 = vld [vmem:[%s1 + $0x58] sm:$0xf]
  %v49 = vld [vmem:[%s1 + $0x5c] sm:$0xf]
  %v50 = vld [vmem:[%s1 + $0x60] sm:$0xf]
  %v51 = vld [vmem:[%s1 + $0x64] sm:$0xf]
  %v52 = vld [vmem:[%s1 + $0x68] sm:$0xf]
  %v53 = vld [vmem:[%s1 + $0x6c] sm:$0xf]
  %v54 = vld [vmem:[%s1 + $0x70] sm:$0xf]
  %v55 = vld [vmem:[%s1 + $0x74] sm:$0xf]
  %v56 = vld [vmem:[%s1 + $0x78] sm:$0xf]
  %v57 = vld [vmem:[%s1 + $0x7c] sm:$0xf]
  %v58 = vld [vmem:[%s1 + $0x80] sm:$0xf]
  %v59 = vld [vmem:[%s1 + $0x84] sm:$0xf]
  %v60 = vld [vmem:[%s1 + $0x88] sm:$0xf]
  %v61 = vld [vmem:[%s1 + $0x8c] sm:$0xf]
  %v62 = vld [vmem:[%s1 + $0x90] sm:$0xf]
  %v63 = vld [vmem:[%s1 + $0x94] sm:$0xf]
  %v64 = vld [vmem:[%s1 + $0x98] sm:$0xf]
  %v65 = vld [vmem:[%s1 + $0x9c] sm:$0xf]
  %v66 = vld [vmem:[%s1 + $0xa0] sm:$0xf]
  %v67 = vld [vmem:[%s1 + $0xa4] sm:$0xf]
  %v68 = vld [vmem:[%s1 + $0xa8] sm:$0xf]
  %v69 = vld [vmem:[%s1 + $0xac] sm:$0xf]
  %v70 = vld [vmem:[%s1 + $0xb0] sm:$0xf]
  %v71 = vld [vmem:[%s1 + $0xb4] sm:$0xf]
  %v72 = vld [vmem:[%s1 + $0xb8] sm:$0xf]
  %v73 = vld [vmem:[%s1 + $0xbc] sm:$0xf]
  %v74 = vld [vmem:[%s1 + $0xc0] sm:$0xf]
  %v75 = vld [vmem:[%s1 + $0xc4] sm:$0xf]
  %v76 = vld [vmem:[%s1 + $0xc8] sm:$0xf]
  %v77 = vld [vmem:[%s1 + $0xcc] sm:$0xf]
  %v78 = vld [vmem:[%s1 + $0xd0] sm:$0xf]
  %v79 = vld [vmem:[%s1 + $0xd4] sm:$0xf]
  %v80 = vld [vmem:[%s1 + $0xd8] sm:$0xf]
  %v81 = vld [vmem:[%s1 + $0xdc] sm:$0xf]
  %v82 = vld [vmem:[%s1 + $0xe0] sm:$0xf]
  %v83 = vld [vmem:[%s1 + $0xe4] sm:$0xf]
  %v84 = vld [vmem:[%s1 + $0xe8] sm:$0xf]
  %v85 = vld [vmem:[%s1 + $0xec] sm:$0xf]
  %v86 = vld [vmem:[%s1 + $0xf0] sm:$0xf]
  %v87 = vld [vmem:[%s1 + $0xf4] sm:$0xf]
  %v88 = vld [vmem:[%s1 + $0xf8] sm:$0xf]
  %v89 = vld [vmem:[%s1 + $0xfc] sm:$0xf]
  %v90 = vld [vmem:[%s1 + $0x100] sm:$0xf]
  %v91 = vld [vmem:[%s1 + $0x104] sm:$0xf]
  %v92 = vld [vmem:[%s1 + $0x108] sm:$0xf]
  %v93 = vld [vmem:[%s1 + $0x10c] sm:$0xf]
  %v94 = vld [vmem:[%s1 + $0x110] sm:$0xf]
  %v95 = vld [vmem:[%s1 + $0x114] sm:$0xf]
  %v96 = vld [vmem:[%s1 + $0x118] sm:$0xf]
  %v97 = vld [vmem:[%s1 + $0x11c] sm:$0xf]
  %v98 = vld [vmem:[%s1 + $0x120] sm:$0xf]
  %v99 = vld [vmem:[%s1 + $0x124] sm:$0xf]
  %v100 = vld [vmem:[%s1 + $0x128] sm:$0xf]
  %v101 = vld [vmem:[%s1 + $0x12c] sm:$0xf]
  %v102 = vld [vmem:[%s1 + $0x130] sm:$0xf]
  %v103 = vld [vmem:[%s1 + $0x134] sm:$0xf]
  %v104 = vld [vmem:[%s1 + $0x138] sm:$0xf]
  %v105 = vld [vmem:[%s1 + $0x13c] sm:$0xf]
  %v106 = vld [vmem:[%s1 + $0x140] sm:$0xf]
  %v107 = vld [vmem:[%s1 + $0x144] sm:$0xf]
  %v108 = vld [vmem:[%s1 + $0x148] sm:$0xf]
  %v109 = vld [vmem:[%s1 + $0x14c] sm:$0xf]
  %v110 = vld [vmem:[%s1 + $0x150] sm:$0xf]
  %v111 = vld [vmem:[%s1 + $0x154] sm:$0xf]
  %v112 = vld [vmem:[%s1 + $0x158] sm:$0xf]
  %v113 = vld [vmem:[%s1 + $0x15c] sm:$0xf]
  %v114 = vld [vmem:[%s1 + $0x160] sm:$0xf]
  %v115 = vld [vmem:[%s1 + $0x164] sm:$0xf]
  %v116 = vld [vmem:[%s1 + $0x168] sm:$0xf]
  %v117 = vld [vmem:[%s1 + $0x16c] sm:$0xf]
  %v118 = vld [vmem:[%s1 + $0x170] sm:$0xf]
  %v119 = vld [vmem:[%s1 + $0x174] sm:$0xf]
  %v120 = vld [vmem:[%s1 + $0x178] sm:$0xf]
  %v121 = vld [vmem:[%s1 + $0x17c] sm:$0xf]
  %v122 = vld [vmem:[%s1 + $0x180] sm:$0xf]
  %v123 = vld [vmem:[%s1 + $0x184] sm:$0xf]
  %v124 = vld [vmem:[%s1 + $0x188] sm:$0xf]
  %v125 = vld [vmem:[%s1 + $0x18c] sm:$0xf]
  %v126 = vld [vmem:[%s1 + $0x190] sm:$0xf]
  %v127 = vld [vmem:[%s1 + $0x194] sm:$0xf]
  %v128 = vld [vmem:[%s1 + $0x198] sm:$0xf]
  %v129 = vld [vmem:[%s1 + $0x19c] sm:$0xf]
  %v130 = vld [vmem:[%s1 + $0x1a0] sm:$0xf]
  %v131 = vld [vmem:[%s1 + $0x1a4] sm:$0xf]
  %v132 = vld [vmem:[%s1 + $0x1a8] sm:$0xf]
  %v133 = vld [vmem:[%s1 + $0x1ac] sm:$0xf]
  %v134 = vld [vmem:[%s1 + $0x1b0] sm:$0xf]
  %v135 = vld [vmem:[%s1 + $0x1b4] sm:$0xf]
  %v136 = vld [vmem:[%s1 + $0x1b8] sm:$0xf]
  %v137 = vld [vmem:[%s1 + $0x1bc] sm:$0xf]
  %v138 = vld [vmem:[%s1 + $0x1c0] sm:$0xf]
  %v139 = vld [vmem:[%s1 + $0x1c4] sm:$0xf]
  %v140 = vld [vmem:[%s1 + $0x1c8] sm:$0xf]
  %v141 = vld [vmem:[%s1 + $0x1cc] sm:$0xf]
  %v142 = vld [vmem:[%s1 + $0x1d0] sm:$0xf]
  %v143 = vld [vmem:[%s1 + $0x1d4] sm:$0xf]
  %v144 = vld [vmem:[%s1 + $0x1d8] sm:$0xf]
  %v145 = vld [vmem:[%s1 + $0x1dc] sm:$0xf]
  %v146 = vld [vmem:[%s1 + $0x1e0] sm:$0xf]
  %v147 = vld [vmem:[%s1 + $0x1e4] sm:$0xf]
  %v148 = vld [vmem:[%s1 + $0x1e8] sm:$0xf]
  %v149 = vld [vmem:[%s1 + $0x1ec] sm:$0xf]
  %v150 = vld [vmem:[%s1 + $0x1f0] sm:$0xf]
  %v151 = vld [vmem:[%s1 + $0x1f4] sm:$0xf]
  %v152 = vld [vmem:[%s1 + $0x1f8] sm:$0xf]
  %v153 = vld [vmem:[%s1 + $0x1fc] sm:$0xf]
  %v154 = vld [vmem:[%s1 + $0x200] sm:$0xf]
  %v155 = vld [vmem:[%s1 + $0x204] sm:$0xf]
  %v156 = vld [vmem:[%s1 + $0x208] sm:$0xf]
  %v157 = vld [vmem:[%s1 + $0x20c] sm:$0xf]
  %v158 = vld [vmem:[%s1 + $0x210] sm:$0xf]
  %v159 = vld [vmem:[%s1 + $0x214] sm:$0xf]
  %v160 = vld [vmem:[%s1 + $0x218] sm:$0xf]
  %v161 = vld [vmem:[%s1 + $0x21c] sm:$0xf]
  %v162 = vld [vmem:[%s1 + $0x220] sm:$0xf]
  %v163 = vld [vmem:[%s1 + $0x224] sm:$0xf]
  %v164 = vld [vmem:[%s1 + $0x228] sm:$0xf]
  %v165 = vld [vmem:[%s1 + $0x22c] sm:$0xf]
  %v166 = vld [vmem:[%s1 + $0x230] sm:$0xf]
  %v167 = vld [vmem:[%s1 + $0x234] sm:$0xf]
  %v168 = vld [vmem:[%s1 + $0x238] sm:$0xf]
  %v169 = vld [vmem:[%s1 + $0x23c] sm:$0xf]
  %v170 = vld [vmem:[%s1 + $0x240] sm:$0xf]
  %v171 = vld [vmem:[%s1 + $0x244] sm:$0xf]
  %v172 = vld [vmem:[%s1 + $0x248] sm:$0xf]
  %v173 = vld [vmem:[%s1 + $0x24c] sm:$0xf]
  %v174 = vld [vmem:[%s1 + $0x250] sm:$0xf]
  %v175 = vld [vmem:[%s1 + $0x254] sm:$0xf]
  %v176 = vld [vmem:[%s1 + $0x258] sm:$0xf]
  %v177 = vld [vmem:[%s1 + $0x25c] sm:$0xf]
  %v178 = vld [vmem:[%s1 + $0x260] sm:$0xf]
  %v179 = vld [vmem:[%s1 + $0x264] sm:$0xf]
  %v180 = vld [vmem:[%s1 + $0x268] sm:$0xf]
  %v181 = vld [vmem:[%s1 + $0x26c] sm:$0xf]
  %v182 = vld [vmem:[%s1 + $0x270] sm:$0xf]
  %v183 = vld [vmem:[%s1 + $0x274] sm:$0xf]
  %v184 = vld [vmem:[%s1 + $0x278] sm:$0xf]
  %v185 = vld [vmem:[%s1 + $0x27c] sm:$0xf]
  %v191 = vunpack.c.l.b16 %v21
  %v192 = vunpack.c.h.b16 %v21
  %v193 = vunpack.c.l.b16 %v22
  %v194 = vunpack.c.h.b16 %v22
  %v195 = vunpack.c.l.b16 %v23
  %v196 = vunpack.c.h.b16 %v23
  %v197 = vunpack.c.l.b16 %v24
  %v198 = vunpack.c.h.b16 %v24
  %v199 = vunpack.c.l.b16 %v25
  %v200 = vunpack.c.h.b16 %v25
  %v201 = vpack.c.b16 %v191, %v191
  %v202 = vpack.c.b16 %v192, %v192
  %v203 = vpack.c.b16 %v193, %v193
  %v204 = vpack.c.b16 %v194, %v194
  %v205 = vpack.c.b16 %v195, %v195
  %v206 = vpack.c.b16 %v196, %v196
  %v207 = vpack.c.b16 %v197, %v197
  %v208 = vpack.c.b16 %v198, %v198
  %v209 = vpack.c.b16 %v199, %v199
  %v210 = vpack.c.b16 %v200, %v200
  %v381 = vunpack.c.l.b16 %v26
  %v382 = vunpack.c.l.b16 %v27
  %v383 = vunpack.c.l.b16 %v28
  %v384 = vunpack.c.l.b16 %v29
  %v385 = vunpack.c.l.b16 %v30
  %v386 = vunpack.c.l.b16 %v31
  %v387 = vunpack.c.l.b16 %v32
  %v388 = vunpack.c.l.b16 %v33
  %v389 = vunpack.c.l.b16 %v34
  %v390 = vunpack.c.l.b16 %v35
  %v391 = vunpack.c.l.b16 %v36
  %v392 = vunpack.c.l.b16 %v37
  %v393 = vunpack.c.l.b16 %v38
  %v394 = vunpack.c.l.b16 %v39
  %v395 = vunpack.c.l.b16 %v40
  %v396 = vunpack.c.l.b16 %v41
  %v397 = vunpack.c.l.b16 %v42
  %v398 = vunpack.c.l.b16 %v43
  %v399 = vunpack.c.l.b16 %v44
  %v400 = vunpack.c.l.b16 %v45
  %v401 = vunpack.c.l.b16 %v46
  %v402 = vunpack.c.l.b16 %v47
  %v403 = vunpack.c.l.b16 %v48
  %v404 = vunpack.c.l.b16 %v49
  %v405 = vunpack.c.l.b16 %v50
  %v406 = vunpack.c.l.b16 %v51
  %v407 = vunpack.c.l.b16 %v52
  %v408 = vunpack.c.l.b16 %v53
  %v409 = vunpack.c.l.b16 %v54
  %v410 = vunpack.c.l.b16 %v55
  %v411 = vunpack.c.l.b16 %v56
  %v412 = vunpack.c.l.b16 %v57
  %v413 = vunpack.c.l.b16 %v58
  %v414 = vunpack.c.l.b16 %v59
  %v415 = vunpack.c.l.b16 %v60
  %v416 = vunpack.c.l.b16 %v61
  %v417 = vunpack.c.l.b16 %v62
  %v418 = vunpack.c.l.b16 %v63
  %v419 = vunpack.c.l.b16 %v64
  %v420 = vunpack.c.l.b16 %v65
  %v421 = vunpack.c.l.b16 %v66
  %v422 = vunpack.c.l.b16 %v67
  %v423 = vunpack.c.l.b16 %v68
  %v424 = vunpack.c.l.b16 %v69
  %v425 = vunpack.c.l.b16 %v70
  %v426 = vunpack.c.l.b16 %v71
  %v427 = vunpack.c.l.b16 %v72
  %v428 = vunpack.c.l.b16 %v73
  %v429 = vunpack.c.l.b16 %v74
  %v430 = vunpack.c.l.b16 %v75
  %v431 = vunpack.c.l.b16 %v76
  %v432 = vunpack.c.l.b16 %v77
  %v433 = vunpack.c.l.b16 %v78
  %v434 = vunpack.c.l.b16 %v79
  %v435 = vunpack.c.l.b16 %v80
  %v436 = vunpack.c.l.b16 %v81
  %v437 = vunpack.c.l.b16 %v82
  %v438 = vunpack.c.l.b16 %v83
  %v439 = vunpack.c.l.b16 %v84
  %v440 = vunpack.c.l.b16 %v85
  %v441 = vunpack.c.l.b16 %v86
  %v442 = vunpack.c.l.b16 %v87
  %v443 = vunpack.c.l.b16 %v88
  %v444 = vunpack.c.l.b16 %v89
  %v445 = vunpack.c.l.b16 %v90
  %v446 = vunpack.c.l.b16 %v91
  %v447 = vunpack.c.l.b16 %v92
  %v448 = vunpack.c.l.b16 %v93
  %v449 = vunpack.c.l.b16 %v94
  %v450 = vunpack.c.l.b16 %v95
  %v451 = vunpack.c.l.b16 %v96
  %v452 = vunpack.c.l.b16 %v97
  %v453 = vunpack.c.l.b16 %v98
  %v454 = vunpack.c.l.b16 %v99
  %v455 = vunpack.c.l.b16 %v100
  %v456 = vunpack.c.l.b16 %v101
  %v457 = vunpack.c.l.b16 %v102
  %v458 = vunpack.c.l.b16 %v103
  %v459 = vunpack.c.l.b16 %v104
  %v460 = vunpack.c.l.b16 %v105
  %v461 = vunpack.c.l.b16 %v106
  %v462 = vunpack.c.l.b16 %v107
  %v463 = vunpack.c.l.b16 %v108
  %v464 = vunpack.c.l.b16 %v109
  %v465 = vunpack.c.l.b16 %v110
  %v466 = vunpack.c.l.b16 %v111
  %v467 = vunpack.c.l.b16 %v112
  %v468 = vunpack.c.l.b16 %v113
  %v469 = vunpack.c.l.b16 %v114
  %v470 = vunpack.c.l.b16 %v115
  %v471 = vunpack.c.l.b16 %v116
  %v472 = vunpack.c.l.b16 %v117
  %v473 = vunpack.c.l.b16 %v118
  %v474 = vunpack.c.l.b16 %v119
  %v475 = vunpack.c.l.b16 %v120
  %v476 = vunpack.c.l.b16 %v121
  %v477 = vunpack.c.l.b16 %v122
  %v478 = vunpack.c.l.b16 %v123
  %v479 = vunpack.c.l.b16 %v124
  %v480 = vunpack.c.l.b16 %v125
  %v481 = vunpack.c.l.b16 %v126
  %v482 = vunpack.c.l.b16 %v127
  %v483 = vunpack.c.l.b16 %v128
  %v484 = vunpack.c.l.b16 %v129
  %v485 = vunpack.c.l.b16 %v130
  %v486 = vunpack.c.l.b16 %v131
  %v487 = vunpack.c.l.b16 %v132
  %v488 = vunpack.c.l.b16 %v133
  %v489 = vunpack.c.l.b16 %v134
  %v490 = vunpack.c.l.b16 %v135
  %v491 = vunpack.c.l.b16 %v136
  %v492 = vunpack.c.l.b16 %v137
  %v493 = vunpack.c.l.b16 %v138
  %v494 = vunpack.c.l.b16 %v139
  %v495 = vunpack.c.l.b16 %v140
  %v496 = vunpack.c.l.b16 %v141
  %v497 = vunpack.c.l.b16 %v142
  %v498 = vunpack.c.l.b16 %v143
  %v499 = vunpack.c.l.b16 %v144
  %v500 = vunpack.c.l.b16 %v145
  %v501 = vunpack.c.l.b16 %v146
  %v502 = vunpack.c.l.b16 %v147
  %v503 = vunpack.c.l.b16 %v148
  %v504 = vunpack.c.l.b16 %v149
  %v505 = vunpack.c.l.b16 %v150
  %v506 = vunpack.c.l.b16 %v151
  %v507 = vunpack.c.l.b16 %v152
  %v508 = vunpack.c.l.b16 %v153
  %v509 = vunpack.c.l.b16 %v154
  %v510 = vunpack.c.l.b16 %v155
  %v511 = vunpack.c.l.b16 %v156
  %v512 = vunpack.c.l.b16 %v157
  %v513 = vunpack.c.l.b16 %v158
  %v514 = vunpack.c.l.b16 %v159
  %v515 = vunpack.c.l.b16 %v160
  %v516 = vunpack.c.l.b16 %v161
  %v517 = vunpack.c.l.b16 %v162
  %v518 = vunpack.c.l.b16 %v163
  %v519 = vunpack.c.l.b16 %v164
  %v520 = vunpack.c.l.b16 %v165
  %v521 = vunpack.c.l.b16 %v166
  %v522 = vunpack.c.l.b16 %v167
  %v523 = vunpack.c.l.b16 %v168
  %v524 = vunpack.c.l.b16 %v169
  %v525 = vunpack.c.l.b16 %v170
  %v526 = vunpack.c.l.b16 %v171
  %v527 = vunpack.c.l.b16 %v172
  %v528 = vunpack.c.l.b16 %v173
  %v529 = vunpack.c.l.b16 %v174
  %v530 = vunpack.c.l.b16 %v175
  %v531 = vunpack.c.l.b16 %v176
  %v532 = vunpack.c.l.b16 %v177
  %v533 = vunpack.c.l.b16 %v178
  %v534 = vunpack.c.l.b16 %v179
  %v535 = vunpack.c.l.b16 %v180
  %v536 = vunpack.c.l.b16 %v181
  %v537 = vunpack.c.l.b16 %v182
  %v538 = vunpack.c.l.b16 %v183
  %v539 = vunpack.c.l.b16 %v184
  %v540 = vunpack.c.l.b16 %v185
  %v541 = vpack.c.b16 %v382, %v381
  %v542 = vpack.c.b16 %v384, %v383
  %v543 = vpack.c.b16 %v386, %v385
  %v544 = vpack.c.b16 %v388, %v387
  %v545 = vpack.c.b16 %v390, %v389
  %v546 = vpack.c.b16 %v392, %v391
  %v547 = vpack.c.b16 %v394, %v393
  %v548 = vpack.c.b16 %v396, %v395
  %v549 = vpack.c.b16 %v398, %v397
  %v550 = vpack.c.b16 %v400, %v399
  %v551 = vpack.c.b16 %v402, %v401
  %v552 = vpack.c.b16 %v404, %v403
  %v553 = vpack.c.b16 %v406, %v405
  %v554 = vpack.c.b16 %v408, %v407
  %v555 = vpack.c.b16 %v410, %v409
  %v556 = vpack.c.b16 %v412, %v411
  %v557 = vpack.c.b16 %v414, %v413
  %v558 = vpack.c.b16 %v416, %v415
  %v559 = vpack.c.b16 %v418, %v417
  %v560 = vpack.c.b16 %v420, %v419
  %v561 = vpack.c.b16 %v422, %v421
  %v562 = vpack.c.b16 %v424, %v423
  %v563 = vpack.c.b16 %v426, %v425
  %v564 = vpack.c.b16 %v428, %v427
  %v565 = vpack.c.b16 %v430, %v429
  %v566 = vpack.c.b16 %v432, %v431
  %v567 = vpack.c.b16 %v434, %v433
  %v568 = vpack.c.b16 %v436, %v435
  %v569 = vpack.c.b16 %v438, %v437
  %v570 = vpack.c.b16 %v440, %v439
  %v571 = vpack.c.b16 %v442, %v441
  %v572 = vpack.c.b16 %v444, %v443
  %v573 = vpack.c.b16 %v446, %v445
  %v574 = vpack.c.b16 %v448, %v447
  %v575 = vpack.c.b16 %v450, %v449
  %v576 = vpack.c.b16 %v452, %v451
  %v577 = vpack.c.b16 %v454, %v453
  %v578 = vpack.c.b16 %v456, %v455
  %v579 = vpack.c.b16 %v458, %v457
  %v580 = vpack.c.b16 %v460, %v459
  %v581 = vpack.c.b16 %v462, %v461
  %v582 = vpack.c.b16 %v464, %v463
  %v583 = vpack.c.b16 %v466, %v465
  %v584 = vpack.c.b16 %v468, %v467
  %v585 = vpack.c.b16 %v470, %v469
  %v586 = vpack.c.b16 %v472, %v471
  %v587 = vpack.c.b16 %v474, %v473
  %v588 = vpack.c.b16 %v476, %v475
  %v589 = vpack.c.b16 %v478, %v477
  %v590 = vpack.c.b16 %v480, %v479
  %v591 = vpack.c.b16 %v482, %v481
  %v592 = vpack.c.b16 %v484, %v483
  %v593 = vpack.c.b16 %v486, %v485
  %v594 = vpack.c.b16 %v488, %v487
  %v595 = vpack.c.b16 %v490, %v489
  %v596 = vpack.c.b16 %v492, %v491
  %v597 = vpack.c.b16 %v494, %v493
  %v598 = vpack.c.b16 %v496, %v495
  %v599 = vpack.c.b16 %v498, %v497
  %v600 = vpack.c.b16 %v500, %v499
  %v601 = vpack.c.b16 %v502, %v501
  %v602 = vpack.c.b16 %v504, %v503
  %v603 = vpack.c.b16 %v506, %v505
  %v604 = vpack.c.b16 %v508, %v507
  %v605 = vpack.c.b16 %v510, %v509
  %v606 = vpack.c.b16 %v512, %v511
  %v607 = vpack.c.b16 %v514, %v513
  %v608 = vpack.c.b16 %v516, %v515
  %v609 = vpack.c.b16 %v518, %v517
  %v610 = vpack.c.b16 %v520, %v519
  %v611 = vpack.c.b16 %v522, %v521
  %v612 = vpack.c.b16 %v524, %v523
  %v613 = vpack.c.b16 %v526, %v525
  %v614 = vpack.c.b16 %v528, %v527
  %v615 = vpack.c.b16 %v530, %v529
  %v616 = vpack.c.b16 %v532, %v531
  %v617 = vpack.c.b16 %v534, %v533
  %v618 = vpack.c.b16 %v536, %v535
  %v619 = vpack.c.b16 %v538, %v537
  %v620 = vpack.c.b16 %v540, %v539
  %701 = vmatprep.subr.bf16.mxu0 0
  %702 = vmatpush1.bf16.msra.mxu0 %v548
  %703 = vmatprep.subr.bf16.mxu0 0
  %704 = vmatpush1.bf16.msra.mxu0 %v547
  %705 = vmatprep.subr.bf16.mxu0 0
  %706 = vmatpush1.bf16.msra.mxu0 %v546
  %707 = vmatprep.subr.bf16.mxu0 0
  %708 = vmatpush1.bf16.msra.mxu0 %v545
  %709 = vmatprep.subr.bf16.mxu0 0
  %710 = vmatpush1.bf16.msra.mxu0 %v544
  %711 = vmatprep.subr.bf16.mxu0 0
  %712 = vmatpush1.bf16.msra.mxu0 %v543
  %713 = vmatprep.subr.bf16.mxu0 0
  %714 = vmatpush1.bf16.msra.mxu0 %v542
  %715 = vmatprep.subr.bf16.mxu0 0
  %716 = vmatpush1.bf16.msra.mxu0 %v541
  %717 = vmatprep.subr.bf16.mxu0 0
  %718 = vmatpush2.bf16.msra.mxu0 %v556
  %719 = vmatprep.subr.bf16.mxu0 0
  %720 = vmatpush2.bf16.msra.mxu0 %v555
  %721 = vmatprep.subr.bf16.mxu0 0
  %722 = vmatpush2.bf16.msra.mxu0 %v554
  %723 = vmatprep.subr.bf16.mxu0 0
  %724 = vmatpush2.bf16.msra.mxu0 %v553
  %725 = vmatprep.subr.bf16.mxu0 0
  %726 = vmatpush2.bf16.msra.mxu0 %v552
  %727 = vmatprep.subr.bf16.mxu0 0
  %728 = vmatpush2.bf16.msra.mxu0 %v551
  %729 = vmatprep.subr.bf16.mxu0 0
  %730 = vmatpush2.bf16.msra.mxu0 %v550
  %731 = vmatprep.subr.bf16.mxu0 0
  %732 = vmatpush2.bf16.msra.mxu0 %v549
  %733 = vmatprep.mubr.bf16.mxu0 %v202
  %734 = vmatmul.mubr.bf16.gmra.mxu0 %v201
  %v735 = vpop.f32.mrf.mxu0
  %v736 = vadd.f32 0.0, %v735
  %v737 = vpop.f32.mrf.mxu0
  %v738 = vpop.f32.mrf.mxu0
  %v739 = vpop.f32.mrf.mxu0
  %740 = vdwg.mxu0
  %741 = vmatprep.subr.bf16.mxu0 0
  %742 = vmatpush1.bf16.msra.mxu0 %v564
  %743 = vmatprep.subr.bf16.mxu0 0
  %744 = vmatpush1.bf16.msra.mxu0 %v563
  %745 = vmatprep.subr.bf16.mxu0 0
  %746 = vmatpush1.bf16.msra.mxu0 %v562
  %747 = vmatprep.subr.bf16.mxu0 0
  %748 = vmatpush1.bf16.msra.mxu0 %v561
  %749 = vmatprep.subr.bf16.mxu0 0
  %750 = vmatpush1.bf16.msra.mxu0 %v560
  %751 = vmatprep.subr.bf16.mxu0 0
  %752 = vmatpush1.bf16.msra.mxu0 %v559
  %753 = vmatprep.subr.bf16.mxu0 0
  %754 = vmatpush1.bf16.msra.mxu0 %v558
  %755 = vmatprep.subr.bf16.mxu0 0
  %756 = vmatpush1.bf16.msra.mxu0 %v557
  %757 = vmatprep.subr.bf16.mxu0 0
  %758 = vmatpush2.bf16.msra.mxu0 %v572
  %759 = vmatprep.subr.bf16.mxu0 0
  %760 = vmatpush2.bf16.msra.mxu0 %v571
  %761 = vmatprep.subr.bf16.mxu0 0
  %762 = vmatpush2.bf16.msra.mxu0 %v570
  %763 = vmatprep.subr.bf16.mxu0 0
  %764 = vmatpush2.bf16.msra.mxu0 %v569
  %765 = vmatprep.subr.bf16.mxu0 0
  %766 = vmatpush2.bf16.msra.mxu0 %v568
  %767 = vmatprep.subr.bf16.mxu0 0
  %768 = vmatpush2.bf16.msra.mxu0 %v567
  %769 = vmatprep.subr.bf16.mxu0 0
  %770 = vmatpush2.bf16.msra.mxu0 %v566
  %771 = vmatprep.subr.bf16.mxu0 0
  %772 = vmatpush2.bf16.msra.mxu0 %v565
  %773 = vmatprep.mubr.bf16.mxu0 %v204
  %774 = vmatmul.mubr.bf16.gmra.mxu0 %v203
  %v775 = vpop.f32.mrf.mxu0
  %v776 = vadd.f32 %v736, %v775
  %v777 = vpop.f32.mrf.mxu0
  %v778 = vpop.f32.mrf.mxu0
  %v779 = vpop.f32.mrf.mxu0
  %780 = vdwg.mxu0
  %781 = vmatprep.subr.bf16.mxu0 0
  %782 = vmatpush1.bf16.msra.mxu0 %v580
  %783 = vmatprep.subr.bf16.mxu0 0
  %784 = vmatpush1.bf16.msra.mxu0 %v579
  %785 = vmatprep.subr.bf16.mxu0 0
  %786 = vmatpush1.bf16.msra.mxu0 %v578
  %787 = vmatprep.subr.bf16.mxu0 0
  %788 = vmatpush1.bf16.msra.mxu0 %v577
  %789 = vmatprep.subr.bf16.mxu0 0
  %790 = vmatpush1.bf16.msra.mxu0 %v576
  %791 = vmatprep.subr.bf16.mxu0 0
  %792 = vmatpush1.bf16.msra.mxu0 %v575
  %793 = vmatprep.subr.bf16.mxu0 0
  %794 = vmatpush1.bf16.msra.mxu0 %v574
  %795 = vmatprep.subr.bf16.mxu0 0
  %796 = vmatpush1.bf16.msra.mxu0 %v573
  %797 = vmatprep.subr.bf16.mxu0 0
  %798 = vmatpush2.bf16.msra.mxu0 %v588
  %799 = vmatprep.subr.bf16.mxu0 0
  %800 = vmatpush2.bf16.msra.mxu0 %v587
  %801 = vmatprep.subr.bf16.mxu0 0
  %802 = vmatpush2.bf16.msra.mxu0 %v586
  %803 = vmatprep.subr.bf16.mxu0 0
  %804 = vmatpush2.bf16.msra.mxu0 %v585
  %805 = vmatprep.subr.bf16.mxu0 0
  %806 = vmatpush2.bf16.msra.mxu0 %v584
  %807 = vmatprep.subr.bf16.mxu0 0
  %808 = vmatpush2.bf16.msra.mxu0 %v583
  %809 = vmatprep.subr.bf16.mxu0 0
  %810 = vmatpush2.bf16.msra.mxu0 %v582
  %811 = vmatprep.subr.bf16.mxu0 0
  %812 = vmatpush2.bf16.msra.mxu0 %v581
  %813 = vmatprep.mubr.bf16.mxu0 %v206
  %814 = vmatmul.mubr.bf16.gmra.mxu0 %v205
  %v815 = vpop.f32.mrf.mxu0
  %v816 = vadd.f32 %v776, %v815
  %v817 = vpop.f32.mrf.mxu0
  %v818 = vpop.f32.mrf.mxu0
  %v819 = vpop.f32.mrf.mxu0
  %820 = vdwg.mxu0
  %821 = vmatprep.subr.bf16.mxu0 0
  %822 = vmatpush1.bf16.msra.mxu0 %v596
  %823 = vmatprep.subr.bf16.mxu0 0
  %824 = vmatpush1.bf16.msra.mxu0 %v595
  %825 = vmatprep.subr.bf16.mxu0 0
  %826 = vmatpush1.bf16.msra.mxu0 %v594
  %827 = vmatprep.subr.bf16.mxu0 0
  %828 = vmatpush1.bf16.msra.mxu0 %v593
  %829 = vmatprep.subr.bf16.mxu0 0
  %830 = vmatpush1.bf16.msra.mxu0 %v592
  %831 = vmatprep.subr.bf16.mxu0 0
  %832 = vmatpush1.bf16.msra.mxu0 %v591
  %833 = vmatprep.subr.bf16.mxu0 0
  %834 = vmatpush1.bf16.msra.mxu0 %v590
  %835 = vmatprep.subr.bf16.mxu0 0
  %836 = vmatpush1.bf16.msra.mxu0 %v589
  %837 = vmatprep.subr.bf16.mxu0 0
  %838 = vmatpush2.bf16.msra.mxu0 %v604
  %839 = vmatprep.subr.bf16.mxu0 0
  %840 = vmatpush2.bf16.msra.mxu0 %v603
  %841 = vmatprep.subr.bf16.mxu0 0
  %842 = vmatpush2.bf16.msra.mxu0 %v602
  %843 = vmatprep.subr.bf16.mxu0 0
  %844 = vmatpush2.bf16.msra.mxu0 %v601
  %845 = vmatprep.subr.bf16.mxu0 0
  %846 = vmatpush2.bf16.msra.mxu0 %v600
  %847 = vmatprep.subr.bf16.mxu0 0
  %848 = vmatpush2.bf16.msra.mxu0 %v599
  %849 = vmatprep.subr.bf16.mxu0 0
  %850 = vmatpush2.bf16.msra.mxu0 %v598
  %851 = vmatprep.subr.bf16.mxu0 0
  %852 = vmatpush2.bf16.msra.mxu0 %v597
  %853 = vmatprep.mubr.bf16.mxu0 %v208
  %854 = vmatmul.mubr.bf16.gmra.mxu0 %v207
  %v855 = vpop.f32.mrf.mxu0
  %v856 = vadd.f32 %v816, %v855
  %v857 = vpop.f32.mrf.mxu0
  %v858 = vpop.f32.mrf.mxu0
  %v859 = vpop.f32.mrf.mxu0
  %860 = vdwg.mxu0
  %861 = vmatprep.subr.bf16.mxu0 0
  %862 = vmatpush1.bf16.msra.mxu0 %v612
  %863 = vmatprep.subr.bf16.mxu0 0
  %864 = vmatpush1.bf16.msra.mxu0 %v611
  %865 = vmatprep.subr.bf16.mxu0 0
  %866 = vmatpush1.bf16.msra.mxu0 %v610
  %867 = vmatprep.subr.bf16.mxu0 0
  %868 = vmatpush1.bf16.msra.mxu0 %v609
  %869 = vmatprep.subr.bf16.mxu0 0
  %870 = vmatpush1.bf16.msra.mxu0 %v608
  %871 = vmatprep.subr.bf16.mxu0 0
  %872 = vmatpush1.bf16.msra.mxu0 %v607
  %873 = vmatprep.subr.bf16.mxu0 0
  %874 = vmatpush1.bf16.msra.mxu0 %v606
  %875 = vmatprep.subr.bf16.mxu0 0
  %876 = vmatpush1.bf16.msra.mxu0 %v605
  %877 = vmatprep.subr.bf16.mxu0 0
  %878 = vmatpush2.bf16.msra.mxu0 %v620
  %879 = vmatprep.subr.bf16.mxu0 0
  %880 = vmatpush2.bf16.msra.mxu0 %v619
  %881 = vmatprep.subr.bf16.mxu0 0
  %882 = vmatpush2.bf16.msra.mxu0 %v618
  %883 = vmatprep.subr.bf16.mxu0 0
  %884 = vmatpush2.bf16.msra.mxu0 %v617
  %885 = vmatprep.subr.bf16.mxu0 0
  %886 = vmatpush2.bf16.msra.mxu0 %v616
  %887 = vmatprep.subr.bf16.mxu0 0
  %888 = vmatpush2.bf16.msra.mxu0 %v615
  %889 = vmatprep.subr.bf16.mxu0 0
  %890 = vmatpush2.bf16.msra.mxu0 %v614
  %891 = vmatprep.subr.bf16.mxu0 0
  %892 = vmatpush2.bf16.msra.mxu0 %v613
  %893 = vmatprep.mubr.bf16.mxu0 %v210
  %894 = vmatmul.mubr.bf16.gmra.mxu0 %v209
  %v895 = vpop.f32.mrf.mxu0
  %v896 = vadd.f32 %v856, %v895
  %v897 = vpop.f32.mrf.mxu0
  %v898 = vpop.f32.mrf.mxu0
  %v899 = vpop.f32.mrf.mxu0
  %900 = vdwg.mxu0
  %v901 = vadd.f32 %v20, %v896
  %902 = vst [vmem:[#allocation2] sm:$0xff] %v901
  // Predicated region
  $region18: #{net_forward.11} parent=0 // pred_check
    %p903 = pneg %p15
  $region19: #{net_forward.11} parent=0 // pred_check_branch
    %905 = sbr.rel (%p903) target = $region21
  $region20: #{net_forward.11} parent=0 // pred_region
    %v906 = vld [vmem:[#allocation2] sm:$0xff]
    %v907 = vld [vmem:[%s2] sm:$0x1]
    %v909 = vlaneseq
    %v910 = vshrl.u32 %v909, 7
    %v911 = vsub.s32 0, %v910
    %v912 = vrot.slane %v907, %v911
    %v914 = vadd.f32 %v906, %v912
    %915 = vst [vmem:[%s3] sm:$0xff] %v914
  $region21: #{net_forward.11} parent=0 // pred_fallthru
    _
  // Predicated region
  $region22: #{net_forward.11} parent=0 // pred_check
    _
  $region23: #{net_forward.11} parent=0 // pred_check_branch
    %917 = sbr.rel (0) target = $region25
  $region24: #{net_forward.11} parent=0 // pred_region
    _
  $region25: #{net_forward.11} parent=0 // pred_fallthru
    _
  // Predicated region
  $region26: #{net_forward.11} parent=0 // pred_check
    _
  $region27: #{net_forward.11} parent=0 // pred_check_branch
    %919 = sbr.rel (0) target = $region29
  $region28: #{net_forward.11} parent=0 // pred_region
    _
  $region29: #{net_forward.11} parent=0 // pred_fallthru
    _

// kernel: net_forward.10
$region0: #{net_forward.10}
  #allocation0 [shape = 'u32[]', space=smem, size = 0x4, offset = 0x4, fixed_abs, tag = 'smem constant byte address 0x4 - core index']
  #allocation1 [shape = 'u32[144,128]{1,0:T(1,128)}', space=vmem, size = 0x12000, scoped, tag = 'internal scratch']
  #allocation2 [shape = 'f32[1,1280]{1,0:T(1,128)}', space=vmem, size = 0x1400, scoped, tag = 'scratch operand']
  %s0 = inlined_call_operand.vmem [shape: bf16[128,128], index: 0, kind: input, shape index: {}]
  %s1 = inlined_call_operand.vmem [shape: bf16[2,1,128], index: 1, kind: input, shape index: {}]
  %s2 = inlined_call_operand.vmem [shape: bf16[128,32], index: 2, kind: input, shape index: {}]
  %s3 = inlined_call_operand.vmem [shape: f32[1,32], index: 3, kind: input, shape index: {}]
  %s4 = inlined_call_operand.vmem [shape: bf16[128,32], index: 4, kind: input, shape index: {}]
  %s5 = inlined_call_operand.vmem [shape: bf16[32,1280], index: 5, kind: input, shape index: {}]
  %s6 = inlined_call_operand.vmem [shape: f32[1,1280], index: 6, kind: input, shape index: {}]
  %s7 = inlined_call_operand.vmem [shape: bf16[2,1,1280], index: 7, kind: output, shape index: {}]
  %s8 = sld [smem:[#allocation0]]
  $region69: #{net_forward.10} parent=0
    _
  %s10 = ssub.s32 1, %s8
  %s11 = scalar_select 0, %s10, %s8
  loop: start=0, step=1, limit=4
  $region2: #{net_forward.10} parent=0 // loop_pre_header
    _
  $region3: #{net_forward.10} parent=0 // loop_header
    %s13 = sphi 0, %s17
    %p14 = scmp.ge.s32.totalorder %s13, 4
    %s20 = sphi 0, %s32
    %s21 = sphi 0, %s28
    %s22 = sphi 0, %s20
    %s23 = sphi 0, %s21
    %s24 = sphi 0, %s22
    %s25 = sphi 0, %s23
    %s37 = sphi 0, %s39
    %s40 = sphi 0, %s37
    %s41 = sphi 0, %s40
    %s57 = sphi 0, %s41
    %s63 = sphi 0, %s65
    %s66 = sphi 0, %s63
    %s67 = sphi 0, %s66
    %s83 = sphi 0, %s67
    %s87 = sphi 0, %s87
    %s89 = sphi 0, %s87
    %s90 = sphi 0, %s89
    %s104 = sphi 0, %s90
    %s108 = sphi 0, %s108
    %s110 = sphi 0, %s108
    %s111 = sphi 0, %s110
    %s125 = sphi 0, %s111
    %s133 = sphi 0, %s135
    %s136 = sphi 0, %s133
    %s137 = sphi 0, %s136
    %s153 = sphi 0, %s137
    %s157 = sphi 0, %s157
    %s159 = sphi 0, %s157
    %s160 = sphi 0, %s159
    %s174 = sphi 0, %s160
    %s178 = sphi 0, %s178
    %s180 = sphi 0, %s178
    %s181 = sphi 0, %s180
    %s195 = sphi 0, %s181
    %s201 = sphi 0, %s203
    %s204 = sphi 0, %s201
    %s205 = sphi 0, %s204
    %s221 = sphi 0, %s205
  $region4: #{net_forward.10} parent=0 // loop_header_branch
    %16 = sbr.rel (%p14) target = $region8
  $region5: #{net_forward.10} parent=0 // loop_body
    %s18 = ssub.s32 %s13, 1
    %s19 = ssub.s32 %s13, 2
    %s26 = sadd.s32 1, %s21
    %p27 = scmp.ge.s32.totalorder %s26, 1
    %s28 = scalar_select %p27, 0, %s26
    %s29 = sadd.s32 1, %s20
    %s30 = scalar_select %p27, %s29, %s20
    %p31 = scmp.ge.s32.totalorder %s30, 2
    %s32 = scalar_select %p31, 0, %s30
    %s33 = sadd.s32 %s20, %s21
    %s34 = sadd.s32 %s32, %s28
    %s35 = ssub.s32 %s33, %s34
    %p36 = scmp.eq.s32.totalorder %s35, 0
    %s38 = sadd.s32 %s37, 1
    %s39 = scalar_select %p36, %s37, %s38
    %p42 = pneg %p36
    %p43 = scmp.eq.s32.totalorder %s13, 1
    %p44 = por %p42, %p43
    %p45 = scmp.ne.s32.totalorder %s37, %s40
    %p46 = scmp.eq.s32.totalorder %s13, 0
    %p47 = por %p45, %p46
    %p48 = scmp.ne.s32.totalorder %s37, %s40
    %p49 = scmp.eq.s32.totalorder %s18, 1
    %p50 = por %p48, %p49
    %p51 = scmp.ne.s32.totalorder %s40, %s41
    %p52 = scmp.eq.s32.totalorder %s18, 0
    %p53 = por %p51, %p52
    %p54 = scmp.ne.s32.totalorder %s40, %s41
    %p55 = scmp.eq.s32.totalorder %s19, 1
    %p56 = por %p54, %p55
    %p58 = scmp.ne.s32.totalorder %s41, %s57
    %p59 = scmp.eq.s32.totalorder %s19, 0
    %p60 = por %p58, %p59
    %s61 = ssub.s32 %s20, %s32
    %p62 = scmp.eq.s32.totalorder %s61, 0
    %s64 = sadd.s32 %s63, 1
    %s65 = scalar_select %p62, %s63, %s64
    %p68 = pneg %p62
    %p69 = scmp.eq.s32.totalorder %s13, 1
    %p70 = por %p68, %p69
    %p71 = scmp.ne.s32.totalorder %s63, %s66
    %p72 = scmp.eq.s32.totalorder %s13, 0
    %p73 = por %p71, %p72
    %p74 = scmp.ne.s32.totalorder %s63, %s66
    %p75 = scmp.eq.s32.totalorder %s18, 1
    %p76 = por %p74, %p75
    %p77 = scmp.ne.s32.totalorder %s66, %s67
    %p78 = scmp.eq.s32.totalorder %s18, 0
    %p79 = por %p77, %p78
    %p80 = scmp.ne.s32.totalorder %s66, %s67
    %p81 = scmp.eq.s32.totalorder %s19, 1
    %p82 = por %p80, %p81
    %p84 = scmp.ne.s32.totalorder %s67, %s83
    %p85 = scmp.eq.s32.totalorder %s19, 0
    %p86 = por %p84, %p85
    %s88 = sadd.s32 %s87, 1
    %p91 = scmp.eq.s32.totalorder %s13, 1
    %p92 = scmp.ne.s32.totalorder %s87, %s89
    %p93 = scmp.eq.s32.totalorder %s13, 0
    %p94 = por %p92, %p93
    %p95 = scmp.ne.s32.totalorder %s87, %s89
    %p96 = scmp.eq.s32.totalorder %s18, 1
    %p97 = por %p95, %p96
    %p98 = scmp.ne.s32.totalorder %s89, %s90
    %p99 = scmp.eq.s32.totalorder %s18, 0
    %p100 = por %p98, %p99
    %p101 = scmp.ne.s32.totalorder %s89, %s90
    %p102 = scmp.eq.s32.totalorder %s19, 1
    %p103 = por %p101, %p102
    %p105 = scmp.ne.s32.totalorder %s90, %s104
    %p106 = scmp.eq.s32.totalorder %s19, 0
    %p107 = por %p105, %p106
    %s109 = sadd.s32 %s108, 1
    %p112 = scmp.eq.s32.totalorder %s13, 1
    %p113 = scmp.ne.s32.totalorder %s108, %s110
    %p114 = scmp.eq.s32.totalorder %s13, 0
    %p115 = por %p113, %p114
    %p116 = scmp.ne.s32.totalorder %s108, %s110
    %p117 = scmp.eq.s32.totalorder %s18, 1
    %p118 = por %p116, %p117
    %p119 = scmp.ne.s32.totalorder %s110, %s111
    %p120 = scmp.eq.s32.totalorder %s18, 0
    %p121 = por %p119, %p120
    %p122 = scmp.ne.s32.totalorder %s110, %s111
    %p123 = scmp.eq.s32.totalorder %s19, 1
    %p124 = por %p122, %p123
    %p126 = scmp.ne.s32.totalorder %s111, %s125
    %p127 = scmp.eq.s32.totalorder %s19, 0
    %p128 = por %p126, %p127
    %s129 = sadd.s32 %s20, %s21
    %s130 = sadd.s32 %s32, %s28
    %s131 = ssub.s32 %s129, %s130
    %p132 = scmp.eq.s32.totalorder %s131, 0
    %s134 = sadd.s32 %s133, 1
    %s135 = scalar_select %p132, %s133, %s134
    %p138 = pneg %p132
    %p139 = scmp.eq.s32.totalorder %s13, 1
    %p140 = por %p138, %p139
    %p141 = scmp.ne.s32.totalorder %s133, %s136
    %p142 = scmp.eq.s32.totalorder %s13, 0
    %p143 = por %p141, %p142
    %p144 = scmp.ne.s32.totalorder %s133, %s136
    %p145 = scmp.eq.s32.totalorder %s18, 1
    %p146 = por %p144, %p145
    %p147 = scmp.ne.s32.totalorder %s136, %s137
    %p148 = scmp.eq.s32.totalorder %s18, 0
    %p149 = por %p147, %p148
    %p150 = scmp.ne.s32.totalorder %s136, %s137
    %p151 = scmp.eq.s32.totalorder %s19, 1
    %p152 = por %p150, %p151
    %p154 = scmp.ne.s32.totalorder %s137, %s153
    %p155 = scmp.eq.s32.totalorder %s19, 0
    %p156 = por %p154, %p155
    %s158 = sadd.s32 %s157, 1
    %p161 = scmp.eq.s32.totalorder %s13, 1
    %p162 = scmp.ne.s32.totalorder %s157, %s159
    %p163 = scmp.eq.s32.totalorder %s13, 0
    %p164 = por %p162, %p163
    %p165 = scmp.ne.s32.totalorder %s157, %s159
    %p166 = scmp.eq.s32.totalorder %s18, 1
    %p167 = por %p165, %p166
    %p168 = scmp.ne.s32.totalorder %s159, %s160
    %p169 = scmp.eq.s32.totalorder %s18, 0
    %p170 = por %p168, %p169
    %p171 = scmp.ne.s32.totalorder %s159, %s160
    %p172 = scmp.eq.s32.totalorder %s19, 1
    %p173 = por %p171, %p172
    %p175 = scmp.ne.s32.totalorder %s160, %s174
    %p176 = scmp.eq.s32.totalorder %s19, 0
    %p177 = por %p175, %p176
    %s179 = sadd.s32 %s178, 1
    %p182 = scmp.eq.s32.totalorder %s13, 1
    %p183 = scmp.ne.s32.totalorder %s178, %s180
    %p184 = scmp.eq.s32.totalorder %s13, 0
    %p185 = por %p183, %p184
    %p186 = scmp.ne.s32.totalorder %s178, %s180
    %p187 = scmp.eq.s32.totalorder %s18, 1
    %p188 = por %p186, %p187
    %p189 = scmp.ne.s32.totalorder %s180, %s181
    %p190 = scmp.eq.s32.totalorder %s18, 0
    %p191 = por %p189, %p190
    %p192 = scmp.ne.s32.totalorder %s180, %s181
    %p193 = scmp.eq.s32.totalorder %s19, 1
    %p194 = por %p192, %p193
    %p196 = scmp.ne.s32.totalorder %s181, %s195
    %p197 = scmp.eq.s32.totalorder %s19, 0
    %p198 = por %p196, %p197
    %s199 = ssub.s32 %s20, %s32
    %p200 = scmp.eq.s32.totalorder %s199, 0
    %s202 = sadd.s32 %s201, 1
    %s203 = scalar_select %p200, %s201, %s202
    %p206 = pneg %p200
    %p207 = scmp.eq.s32.totalorder %s13, 1
    %p208 = por %p206, %p207
    %p209 = scmp.ne.s32.totalorder %s201, %s204
    %p210 = scmp.eq.s32.totalorder %s13, 0
    %p211 = por %p209, %p210
    %p212 = scmp.ne.s32.totalorder %s201, %s204
    %p213 = scmp.eq.s32.totalorder %s18, 1
    %p214 = por %p212, %p213
    %p215 = scmp.ne.s32.totalorder %s204, %s205
    %p216 = scmp.eq.s32.totalorder %s18, 0
    %p217 = por %p215, %p216
    %p218 = scmp.ne.s32.totalorder %s204, %s205
    %p219 = scmp.eq.s32.totalorder %s19, 1
    %p220 = por %p218, %p219
    %p222 = scmp.ne.s32.totalorder %s205, %s221
    %p223 = scmp.eq.s32.totalorder %s19, 0
    %p224 = por %p222, %p223
    %p225 = scmp.le.s32.totalorder 1, %s13
    %p226 = scmp.lt.s32.totalorder %s13, 3
    %p227 = pnand %p225, %p226
    %p228 = pneg %p227
    // Predicated region
    $region9: #{net_forward.10} parent=5 // pred_check
      _
    $region10: #{net_forward.10} parent=5 // pred_check_branch
      %230 = sbr.rel (%p227) target = $region12
    $region11: #{net_forward.10} parent=5 // pred_region
      %s231 = ssub.s32 %s13, 1
      // Predicated region
      $region13: #{net_forward.10} parent=11 // pred_check
        %p232 = pneg %p100
      $region14: #{net_forward.10} parent=11 // pred_check_branch
        %234 = sbr.rel (%p232) target = $region16
      $region15: #{net_forward.10} parent=11 // pred_region
        _
      $region16: #{net_forward.10} parent=11 // pred_fallthru
        _
      // Predicated region
      $region17: #{net_forward.10} parent=11 // pred_check
        %p235 = pneg %p121
      $region18: #{net_forward.10} parent=11 // pred_check_branch
        %237 = sbr.rel (%p235) target = $region20
      $region19: #{net_forward.10} parent=11 // pred_region
        _
      $region20: #{net_forward.10} parent=11 // pred_fallthru
        _
      // Predicated region
      $region21: #{net_forward.10} parent=11 // pred_check
        %p238 = pneg %p170
      $region22: #{net_forward.10} parent=11 // pred_check_branch
        %240 = sbr.rel (%p238) target = $region24
      $region23: #{net_forward.10} parent=11 // pred_region
        _
      $region24: #{net_forward.10} parent=11 // pred_fallthru
        _
      // Predicated region
      $region25: #{net_forward.10} parent=11 // pred_check
        %p241 = pneg %p191
      $region26: #{net_forward.10} parent=11 // pred_check_branch
        %243 = sbr.rel (%p241) target = $region28
      $region27: #{net_forward.10} parent=11 // pred_region
        _
      $region28: #{net_forward.10} parent=11 // pred_fallthru
        _
    $region12: #{net_forward.10} parent=5 // pred_fallthru
      _
    %p244 = scmp.lt.s32.totalorder %s13, 2
    // Predicated region
    $region29: #{net_forward.10} parent=5 // pred_check
      %p245 = pneg %p244
    $region30: #{net_forward.10} parent=5 // pred_check_branch
      %247 = sbr.rel (%p245) target = $region32
    $region31: #{net_forward.10} parent=5 // pred_region
      // Predicated region
      $region33: #{net_forward.10} parent=31 // pred_check
        %p248 = pneg %p47
      $region34: #{net_forward.10} parent=31 // pred_check_branch
        %250 = sbr.rel (%p248) target = $region36
      $region35: #{net_forward.10} parent=31 // pred_region
        %s251 = sadd.s32 %s20, %s21
        %s252 = smul.u32 8, %s251
        %p253 = scmp.lt.s32.totalorder %s252, 15
        %s254 = scalar_select %p253, %s252, 15
        %s255 = smul.addr %s254, 4
        %s256 = scalar_lea.vmem %s0, %s255
        %s257 = sadd.s32 %s20, %s21
        %s258 = smul.u32 8, %s257
      $region36: #{net_forward.10} parent=31 // pred_fallthru
        _
      // Predicated region
      $region37: #{net_forward.10} parent=31 // pred_check
        %p259 = pneg %p73
      $region38: #{net_forward.10} parent=31 // pred_check_branch
        %261 = sbr.rel (%p259) target = $region40
      $region39: #{net_forward.10} parent=31 // pred_region
        %p262 = scmp.lt.s32.totalorder %s20, 1
        %s263 = scalar_select %p262, %s20, 1
        %s264 = scalar_lea.vmem %s1, %s263
      $region40: #{net_forward.10} parent=31 // pred_fallthru
        _
      // Predicated region
      $region41: #{net_forward.10} parent=31 // pred_check
        %p265 = pneg %p143
      $region42: #{net_forward.10} parent=31 // pred_check_branch
        %267 = sbr.rel (%p265) target = $region44
      $region43: #{net_forward.10} parent=31 // pred_region
        %s268 = sadd.s32 %s20, %s21
        %s269 = smul.u32 8, %s268
        %p270 = scmp.lt.s32.totalorder %s269, 15
        %s271 = scalar_select %p270, %s269, 15
        %s272 = smul.addr %s271, 4
        %s273 = scalar_lea.vmem %s4, %s272
        %s274 = sadd.s32 %s20, %s21
        %s275 = smul.u32 8, %s274
      $region44: #{net_forward.10} parent=31 // pred_fallthru
        _
    $region32: #{net_forward.10} parent=5 // pred_fallthru
      _
    %p276 = scmp.le.s32.totalorder 1, %s13
    %p277 = scmp.lt.s32.totalorder %s13, 3
    %p278 = pnand %p276, %p277
    %p279 = pneg %p278
    // Predicated region
    $region45: #{net_forward.10} parent=5 // pred_check
      _
    $region46: #{net_forward.10} parent=5 // pred_check_branch
      %281 = sbr.rel (%p278) target = $region48
    $region47: #{net_forward.10} parent=5 // pred_region
      %s282 = ssub.s32 %s13, 1
      %s283 = sadd.s32 %s22, %s23
      %s284 = smul.u32 8, %s283
      %p285 = scmp.lt.s32.totalorder %s284, 15
      %s286 = scalar_select %p285, %s284, 15
      %s287 = smul.addr %s286, 4
      %s288 = scalar_lea.vmem %s0, %s287
      %p289 = pneg %p53
      %p290 = pneg %p50
      %p291 = scmp.lt.s32.totalorder %s22, 1
      %s292 = scalar_select %p291, %s22, 1
      %s293 = scalar_lea.vmem %s1, %s292
      %p294 = pneg %p79
      %p295 = pneg %p76
      %p296 = pneg %p100
      %p297 = pneg %p97
      %p298 = pneg %p121
      %p299 = pneg %p118
      %s300 = sadd.s32 %s22, %s23
      %s301 = smul.u32 8, %s300
      %p302 = scmp.lt.s32.totalorder %s301, 15
      %s303 = scalar_select %p302, %s301, 15
      %s304 = smul.addr %s303, 4
      %s305 = scalar_lea.vmem %s4, %s304
      %p306 = pneg %p149
      %p307 = pneg %p146
      %p308 = pneg %p170
      %p309 = pneg %p167
      %p310 = pneg %p191
      %p311 = pneg %p188
      %p312 = pneg %p217
      %p313 = pneg %p214
      %p314 = scmp.lt.s32.totalorder %s22, 1
      %s315 = scalar_select %p314, %s22, 1
      %s316 = smul.addr %s315, 10
      %s317 = scalar_lea.vmem %s7, %s316
      %s318 = sadd.s32 %s22, %s23
      %s319 = smul.u32 8, %s318
      %p320 = scmp.lt.s32.totalorder %s319, 15
      %s321 = scalar_select %p320, %s319, 15
      %s322 = smul.addr %s321, 4
      %s323 = scalar_lea.vmem %s0, %s322
      %s324 = sadd.s32 %s22, %s23
      %s325 = smul.u32 8, %s324
      %p326 = scmp.lt.s32.totalorder %s22, 1
      %s327 = scalar_select %p326, %s22, 1
      %s328 = scalar_lea.vmem %s1, %s327
      %s329 = sadd.s32 %s22, %s23
      %s330 = smul.u32 8, %s329
      %p331 = scmp.lt.s32.totalorder %s330, 15
      %s332 = scalar_select %p331, %s330, 15
      %s333 = smul.addr %s332, 4
      %s334 = scalar_lea.vmem %s4, %s333
      %s335 = sadd.s32 %s22, %s23
      %s336 = smul.u32 8, %s335
      %p337 = scmp.lt.s32.totalorder %s22, 1
      %s338 = scalar_select %p337, %s22, 1
      %s339 = smul.addr %s338, 10
      %s340 = scalar_lea.vmem %s7, %s339
      %p342 = scmp.eq.s32.totalorder %s23, 0
      // Predicated region
      $region49: #{net_forward.10} parent=47 // pred_check
        %p343 = pneg %p342
      $region50: #{net_forward.10} parent=47 // pred_check_branch
        %345 = sbr.rel (%p343) target = $region52
      $region51: #{net_forward.10} parent=47 // pred_region
        %346 = vst [vmem:[#allocation2] sm:$0xff] 0.0
        %v347 = vlaneseq
        %vm348 = vcmp.ge.s32.totalorder %v347, 0
        %vm349 = vcmp.lt.s32.totalorder %v347, 256
        %vm350 = vmand %vm348, %vm349
        %351 = vst.msk [vmem:[#allocation2 + $0x8] sm:$0x3] %vm350, 0.0
      $region52: #{net_forward.10} parent=47 // pred_fallthru
        _
      %v352 = vld [vmem:[%s323] sm:$0xf]
      %v353 = vld [vmem:[%s323 + $0x4] sm:$0xf]
      %v354 = vld [vmem:[%s323 + $0x8] sm:$0xf]
      %v355 = vld [vmem:[%s323 + $0xc] sm:$0xf]
      %v356 = vld [vmem:[%s323 + $0x10] sm:$0xf]
      %v357 = vld [vmem:[%s323 + $0x14] sm:$0xf]
      %v358 = vld [vmem:[%s323 + $0x18] sm:$0xf]
      %v359 = vld [vmem:[%s323 + $0x1c] sm:$0xf]
      %v360 = vld [vmem:[%s328] sm:$0x1]
      %v362 = vpack.i.b16 %v360, %v360
      %v364 = vlaneseq
      %v365 = vshrl.u32 %v364, 7
      %v366 = vsub.s32 0, %v365
      %v367 = vrot.slane %v362, %v366
      %v369 = vunpack.c.l.b16 %v367
      %v370 = vpack.c.b16 %v369, %v369
      %v372 = vmul.bf16 %v352, %v370
      %v373 = vmul.bf16 %v353, %v370
      %v374 = vmul.bf16 %v354, %v370
      %v375 = vmul.bf16 %v355, %v370
      %v376 = vmul.bf16 %v356, %v370
      %v377 = vmul.bf16 %v357, %v370
      %v378 = vmul.bf16 %v358, %v370
      %v379 = vmul.bf16 %v359, %v370
      %v380 = vld [vmem:[%s2] sm:$0xf]
      %v381 = vld [vmem:[%s2 + $0x4] sm:$0xf]
      %v382 = vld [vmem:[%s2 + $0x8] sm:$0xf]
      %v383 = vld [vmem:[%s2 + $0xc] sm:$0xf]
      %v384 = vld [vmem:[%s2 + $0x10] sm:$0xf]
      %v385 = vld [vmem:[%s2 + $0x14] sm:$0xf]
      %v386 = vld [vmem:[%s2 + $0x18] sm:$0xf]
      %v387 = vld [vmem:[%s2 + $0x1c] sm:$0xf]
      %v388 = vld [vmem:[%s2 + $0x20] sm:$0xf]
      %v389 = vld [vmem:[%s2 + $0x24] sm:$0xf]
      %v390 = vld [vmem:[%s2 + $0x28] sm:$0xf]
      %v391 = vld [vmem:[%s2 + $0x2c] sm:$0xf]
      %v392 = vld [vmem:[%s2 + $0x30] sm:$0xf]
      %v393 = vld [vmem:[%s2 + $0x34] sm:$0xf]
      %v394 = vld [vmem:[%s2 + $0x38] sm:$0xf]
      %v395 = vld [vmem:[%s2 + $0x3c] sm:$0xf]
      %v396 = vld [vmem:[%s3] sm:$0x1]
      %v398 = vlaneseq
      %v399 = vshrl.u32 %v398, 7
      %v400 = vsub.s32 0, %v399
      %v401 = vrot.slane %v396, %v400
      %v411 = vunpack.c.l.b16 %v372
      %v412 = vunpack.c.l.b16 %v373
      %v413 = vunpack.c.l.b16 %v374
      %v414 = vunpack.c.l.b16 %v375
      %v415 = vunpack.c.l.b16 %v376
      %v416 = vunpack.c.l.b16 %v377
      %v417 = vunpack.c.l.b16 %v378
      %v418 = vunpack.c.l.b16 %v379
      %v419 = vpack.c.b16 %v412, %v411
      %v420 = vpack.c.b16 %v414, %v413
      %v421 = vpack.c.b16 %v416, %v415
      %v422 = vpack.c.b16 %v418, %v417
      %v443 = vunpack.c.l.b16 %v380
      %v444 = vunpack.c.l.b16 %v381
      %v445 = vunpack.c.l.b16 %v382
      %v446 = vunpack.c.l.b16 %v383
      %v447 = vunpack.c.l.b16 %v384
      %v448 = vunpack.c.l.b16 %v385
      %v449 = vunpack.c.l.b16 %v386
      %v450 = vunpack.c.l.b16 %v387
      %v451 = vunpack.c.l.b16 %v388
      %v452 = vunpack.c.l.b16 %v389
      %v453 = vunpack.c.l.b16 %v390
      %v454 = vunpack.c.l.b16 %v391
      %v455 = vunpack.c.l.b16 %v392
      %v456 = vunpack.c.l.b16 %v393
      %v457 = vunpack.c.l.b16 %v394
      %v458 = vunpack.c.l.b16 %v395
      %v459 = vpack.c.b16 %v444, %v443
      %v460 = vpack.c.b16 %v446, %v445
      %v461 = vpack.c.b16 %v448, %v447
      %v462 = vpack.c.b16 %v450, %v449
      %v463 = vpack.c.b16 %v452, %v451
      %v464 = vpack.c.b16 %v454, %v453
      %v465 = vpack.c.b16 %v456, %v455
      %v466 = vpack.c.b16 %v458, %v457
      %475 = vmatprep.subr.bf16.mxu0 0
      %476 = vmatpush1.bf16.msra.mxu0 %v466
      %477 = vmatprep.subr.bf16.mxu0 0
      %478 = vmatpush1.bf16.msra.mxu0 %v465
      %479 = vmatprep.subr.bf16.mxu0 0
      %480 = vmatpush1.bf16.msra.mxu0 %v464
      %481 = vmatprep.subr.bf16.mxu0 0
      %482 = vmatpush1.bf16.msra.mxu0 %v463
      %483 = vmatprep.subr.bf16.mxu0 0
      %484 = vmatpush1.bf16.msra.mxu0 %v462
      %485 = vmatprep.subr.bf16.mxu0 0
      %486 = vmatpush1.bf16.msra.mxu0 %v461
      %487 = vmatprep.subr.bf16.mxu0 0
      %488 = vmatpush1.bf16.msra.mxu0 %v460
      %489 = vmatprep.subr.bf16.mxu0 0
      %490 = vmatpush1.bf16.msra.mxu0 %v459
      %491 = vmatprep.subr.bf16.mxu0 0
      %492 = vmatpush2.bf16.msra.mxu0 0
      %493 = vmatprep.subr.bf16.mxu0 0
      %494 = vmatpush2.bf16.msra.mxu0 0
      %495 = vmatprep.subr.bf16.mxu0 0
      %496 = vmatpush2.bf16.msra.mxu0 0
      %497 = vmatprep.subr.bf16.mxu0 0
      %498 = vmatpush2.bf16.msra.mxu0 0
      %499 = vmatprep.subr.bf16.mxu0 0
      %500 = vmatpush2.bf16.msra.mxu0 0
      %501 = vmatprep.subr.bf16.mxu0 0
      %502 = vmatpush2.bf16.msra.mxu0 0
      %503 = vmatprep.subr.bf16.mxu0 0
      %504 = vmatpush2.bf16.msra.mxu0 0
      %505 = vmatprep.subr.bf16.mxu0 0
      %506 = vmatpush2.bf16.msra.mxu0 0
      %507 = vmatprep.mubr.bf16.mxu0 0
      %508 = vmatmul.mubr.bf16.gmra.mxu0 %v419
      %v509 = vpop.f32.mrf.mxu0
      %v510 = vadd.f32 %v401, %v509
      %v511 = vpop.f32.mrf.mxu0
      %v512 = vpop.f32.mrf.mxu0
      %v513 = vadd.f32 %v401, %v512
      %v514 = vpop.f32.mrf.mxu0
      %515 = vmatprep.mubr.bf16.mxu0 0
      %516 = vmatmul.mubr.bf16.gmra.mxu0 %v420
      %v517 = vpop.f32.mrf.mxu0
      %v518 = vadd.f32 %v401, %v517
      %v519 = vpop.f32.mrf.mxu0
      %v520 = vpop.f32.mrf.mxu0
      %v521 = vadd.f32 %v401, %v520
      %v522 = vpop.f32.mrf.mxu0
      %523 = vmatprep.mubr.bf16.mxu0 0
      %524 = vmatmul.mubr.bf16.gmra.mxu0 %v421
      %v525 = vpop.f32.mrf.mxu0
      %v526 = vadd.f32 %v401, %v525
      %v527 = vpop.f32.mrf.mxu0
      %v528 = vpop.f32.mrf.mxu0
      %v529 = vadd.f32 %v401, %v528
      %v530 = vpop.f32.mrf.mxu0
      %531 = vmatprep.mubr.bf16.mxu0 0
      %532 = vmatmul.mubr.bf16.gmra.mxu0 %v422
      %v533 = vpop.f32.mrf.mxu0
      %v534 = vadd.f32 %v401, %v533
      %v535 = vpop.f32.mrf.mxu0
      %v536 = vpop.f32.mrf.mxu0
      %v537 = vadd.f32 %v401, %v536
      %v538 = vpop.f32.mrf.mxu0
      %539 = vdwg.mxu0
      %v540 = vld [vmem:[%s334] sm:$0xf]
      %v541 = vld [vmem:[%s334 + $0x4] sm:$0xf]
      %v542 = vld [vmem:[%s334 + $0x8] sm:$0xf]
      %v543 = vld [vmem:[%s334 + $0xc] sm:$0xf]
      %v544 = vld [vmem:[%s334 + $0x10] sm:$0xf]
      %v545 = vld [vmem:[%s334 + $0x14] sm:$0xf]
      %v546 = vld [vmem:[%s334 + $0x18] sm:$0xf]
      %v547 = vld [vmem:[%s334 + $0x1c] sm:$0xf]
      %v548 = vunpack.c.l.bf16 %v540
      %v549 = vunpack.c.l.bf16 %v541
      %v550 = vunpack.c.l.bf16 %v542
      %v551 = vunpack.c.l.bf16 %v543
      %v552 = vunpack.c.l.bf16 %v544
      %v553 = vunpack.c.l.bf16 %v545
      %v554 = vunpack.c.l.bf16 %v546
      %v555 = vunpack.c.l.bf16 %v547
      %v556 = vadd.f32 %v510, %v548
      %v557 = vadd.f32 %v513, %v549
      %v558 = vadd.f32 %v518, %v550
      %v559 = vadd.f32 %v521, %v551
      %v560 = vadd.f32 %v526, %v552
      %v561 = vadd.f32 %v529, %v553
      %v562 = vadd.f32 %v534, %v554
      %v563 = vadd.f32 %v537, %v555
      %v564 = vpack.c.bf16 %v557, %v556
      %v565 = vpack.c.bf16 %v559, %v558
      %v566 = vpack.c.bf16 %v561, %v560
      %v567 = vpack.c.bf16 %v563, %v562
      %v568 = vld [vmem:[%s5] sm:$0xff]
      %v569 = vld [vmem:[%s5 + $0x8] sm:$0xff]
      %v570 = vld [vmem:[%s5 + $0x10] sm:$0xff]
      %v571 = vld [vmem:[%s5 + $0x18] sm:$0xff]
      %v572 = vld [vmem:[%s5 + $0x20] sm:$0xff]
      %v573 = vld [vmem:[%s5 + $0x28] sm:$0xff]
      %v574 = vld [vmem:[%s5 + $0x30] sm:$0xff]
      %v575 = vld [vmem:[%s5 + $0x38] sm:$0xff]
      %v576 = vld [vmem:[%s5 + $0x40] sm:$0xff]
      %v577 = vld [vmem:[%s5 + $0x48] sm:$0xff]
      %v578 = vld [vmem:[%s5 + $0x50] sm:$0xff]
      %v579 = vld [vmem:[%s5 + $0x58] sm:$0xff]
      %v580 = vld [vmem:[%s5 + $0x60] sm:$0xff]
      %v581 = vld [vmem:[%s5 + $0x68] sm:$0xff]
      %v582 = vld [vmem:[%s5 + $0x70] sm:$0xff]
      %v583 = vld [vmem:[%s5 + $0x78] sm:$0xff]
      %v584 = vld [vmem:[%s5 + $0x80] sm:$0xff]
      %v585 = vld [vmem:[%s5 + $0x88] sm:$0xff]
      %v586 = vld [vmem:[%s5 + $0x90] sm:$0xff]
      %v587 = vld [vmem:[%s5 + $0x98] sm:$0xff]
      %v588 = vld [vmem:[%s6] sm:$0xff]
      %v589 = vld [vmem:[%s6 + $0x8] sm:$0x3]
      %v592 = vlaneseq
      %v593 = vshrl.u32 %v592, 7
      %v594 = vsub.s32 0, %v593
      %v595 = vrot.slane %v588, %v594
      %v596 = vlaneseq
      %v597 = vshrl.u32 %v596, 7
      %v598 = vsub.s32 1, %v597
      %v599 = vrot.slane %v588, %v598
      %v600 = vlaneseq
      %v601 = vshrl.u32 %v600, 7
      %v602 = vsub.s32 2, %v601
      %v603 = vrot.slane %v588, %v602
      %v604 = vlaneseq
      %v605 = vshrl.u32 %v604, 7
      %v606 = vsub.s32 3, %v605
      %v607 = vrot.slane %v588, %v606
      %v608 = vlaneseq
      %v609 = vshrl.u32 %v608, 7
      %v610 = vsub.s32 4, %v609
      %v611 = vrot.slane %v588, %v610
      %v612 = vlaneseq
      %v613 = vshrl.u32 %v612, 7
      %v614 = vsub.s32 5, %v613
      %v615 = vrot.slane %v588, %v614
      %v616 = vlaneseq
      %v617 = vshrl.u32 %v616, 7
      %v618 = vsub.s32 6, %v617
      %v619 = vrot.slane %v588, %v618
      %v620 = vlaneseq
      %v621 = vshrl.u32 %v620, 7
      %v622 = vsub.s32 7, %v621
      %v623 = vrot.slane %v588, %v622
      %v624 = vlaneseq
      %v625 = vshrl.u32 %v624, 7
      %v626 = vsub.s32 0, %v625
      %v627 = vrot.slane %v589, %v626
      %v628 = vlaneseq
      %v629 = vshrl.u32 %v628, 7
      %v630 = vsub.s32 1, %v629
      %v631 = vrot.slane %v589, %v630
      %v662 = vunpack.c.l.b16 %v568
      %v663 = vunpack.c.h.b16 %v568
      %v664 = vunpack.c.l.b16 %v569
      %v665 = vunpack.c.h.b16 %v569
      %v666 = vunpack.c.l.b16 %v570
      %v667 = vunpack.c.h.b16 %v570
      %v668 = vunpack.c.l.b16 %v571
      %v669 = vunpack.c.h.b16 %v571
      %v670 = vunpack.c.l.b16 %v572
      %v671 = vunpack.c.h.b16 %v572
      %v672 = vunpack.c.l.b16 %v573
      %v673 = vunpack.c.h.b16 %v573
      %v674 = vunpack.c.l.b16 %v574
      %v675 = vunpack.c.h.b16 %v574
      %v676 = vunpack.c.l.b16 %v575
      %v677 = vunpack.c.h.b16 %v575
      %v678 = vunpack.c.l.b16 %v576
      %v679 = vunpack.c.h.b16 %v576
      %v680 = vunpack.c.l.b16 %v577
      %v681 = vunpack.c.h.b16 %v577
      %v682 = vunpack.c.l.b16 %v578
      %v683 = vunpack.c.h.b16 %v578
      %v684 = vunpack.c.l.b16 %v579
      %v685 = vunpack.c.h.b16 %v579
      %v686 = vunpack.c.l.b16 %v580
      %v687 = vunpack.c.h.b16 %v580
      %v688 = vunpack.c.l.b16 %v581
      %v689 = vunpack.c.h.b16 %v581
      %v690 = vunpack.c.l.b16 %v582
      %v691 = vunpack.c.h.b16 %v582
      %v692 = vunpack.c.l.b16 %v583
      %v693 = vunpack.c.h.b16 %v583
      %v694 = vunpack.c.l.b16 %v584
      %v695 = vunpack.c.h.b16 %v584
      %v696 = vunpack.c.l.b16 %v585
      %v697 = vunpack.c.h.b16 %v585
      %v698 = vunpack.c.l.b16 %v586
      %v699 = vunpack.c.h.b16 %v586
      %v700 = vunpack.c.l.b16 %v587
      %v701 = vunpack.c.h.b16 %v587
      %v702 = vpack.c.b16 %v672, %v662
      %v703 = vpack.c.b16 %v673, %v663
      %v704 = vpack.c.b16 %v674, %v664
      %v705 = vpack.c.b16 %v675, %v665
      %v706 = vpack.c.b16 %v676, %v666
      %v707 = vpack.c.b16 %v677, %v667
      %v708 = vpack.c.b16 %v678, %v668
      %v709 = vpack.c.b16 %v679, %v669
      %v710 = vpack.c.b16 %v680, %v670
      %v711 = vpack.c.b16 %v681, %v671
      %v712 = vpack.c.b16 %v692, %v682
      %v713 = vpack.c.b16 %v693, %v683
      %v714 = vpack.c.b16 %v694, %v684
      %v715 = vpack.c.b16 %v695, %v685
      %v716 = vpack.c.b16 %v696, %v686
      %v717 = vpack.c.b16 %v697, %v687
      %v718 = vpack.c.b16 %v698, %v688
      %v719 = vpack.c.b16 %v699, %v689
      %v720 = vpack.c.b16 %v700, %v690
      %v721 = vpack.c.b16 %v701, %v691
      %vm742 = vcmask 261120
      %v744 = vsel %vm742, %v564, 0
      %v747 = vsel %vm742, %v565, 0
      %v750 = vsel %vm742, %v566, 0
      %v753 = vsel %vm742, %v567, 0
      %755 = vmatprep.subr.bf16.mxu0 0
      %756 = vmatpush1.bf16.msra.mxu0 0
      %757 = vmatprep.subr.bf16.mxu0 0
      %758 = vmatpush1.bf16.msra.mxu0 0
      %759 = vmatprep.subr.bf16.mxu0 0
      %760 = vmatpush1.bf16.msra.mxu0 0
      %761 = vmatprep.subr.bf16.mxu0 0
      %762 = vmatpush1.bf16.msra.mxu0 0
      %763 = vmatprep.subr.bf16.mxu0 0
      %764 = vmatpush1.bf16.msra.mxu0 0
      %765 = vmatprep.subr.bf16.mxu0 0
      %766 = vmatpush1.bf16.msra.mxu0 0
      %767 = vmatprep.subr.bf16.mxu0 %v713
      %768 = vmatpush1.bf16.msra.mxu0 %v712
      %769 = vmatprep.subr.bf16.mxu0 %v703
      %770 = vmatpush1.bf16.msra.mxu0 %v702
      %771 = vmatprep.subr.bf16.mxu0 0
      %772 = vmatpush2.bf16.msra.mxu0 0
      %773 = vmatprep.subr.bf16.mxu0 0
      %774 = vmatpush2.bf16.msra.mxu0 0
      %775 = vmatprep.subr.bf16.mxu0 0
      %776 = vmatpush2.bf16.msra.mxu0 0
      %777 = vmatprep.subr.bf16.mxu0 0
      %778 = vmatpush2.bf16.msra.mxu0 0
      %779 = vmatprep.subr.bf16.mxu0 0
      %780 = vmatpush2.bf16.msra.mxu0 0
      %781 = vmatprep.subr.bf16.mxu0 0
      %782 = vmatpush2.bf16.msra.mxu0 0
      %783 = vmatprep.subr.bf16.mxu0 0
      %784 = vmatpush2.bf16.msra.mxu0 0
      %785 = vmatprep.subr.bf16.mxu0 0
      %786 = vmatpush2.bf16.msra.mxu0 0
      %787 = vmatprep.mubr.bf16.mxu0 0
      %788 = vmatmul.mubr.bf16.gmra.mxu0 %v744
      %v789 = vpop.f32.mrf.mxu0
      %v790 = vadd.f32 %v595, %v789
      %v791 = vpop.f32.mrf.mxu0
      %v792 = vadd.f32 %v599, %v791
      %v793 = vpop.f32.mrf.mxu0
      %v794 = vadd.f32 %v595, %v793
      %v795 = vpop.f32.mrf.mxu0
      %v796 = vadd.f32 %v599, %v795
      %797 = vmatprep.mubr.bf16.mxu0 0
      %798 = vmatmul.mubr.bf16.gmra.mxu0 %v747
      %v799 = vpop.f32.mrf.mxu0
      %v800 = vadd.f32 %v595, %v799
      %v801 = vpop.f32.mrf.mxu0
      %v802 = vadd.f32 %v599, %v801
      %v803 = vpop.f32.mrf.mxu0
      %v804 = vadd.f32 %v595, %v803
      %v805 = vpop.f32.mrf.mxu0
      %v806 = vadd.f32 %v599, %v805
      %807 = vmatprep.mubr.bf16.mxu0 0
      %808 = vmatmul.mubr.bf16.gmra.mxu0 %v750
      %v809 = vpop.f32.mrf.mxu0
      %v810 = vadd.f32 %v595, %v809
      %v811 = vpop.f32.mrf.mxu0
      %v812 = vadd.f32 %v599, %v811
      %v813 = vpop.f32.mrf.mxu0
      %v814 = vadd.f32 %v595, %v813
      %v815 = vpop.f32.mrf.mxu0
      %v816 = vadd.f32 %v599, %v815
      %817 = vmatprep.mubr.bf16.mxu0 0
      %818 = vmatmul.mubr.bf16.gmra.mxu0 %v753
      %v819 = vpop.f32.mrf.mxu0
      %v820 = vadd.f32 %v595, %v819
      %v821 = vpop.f32.mrf.mxu0
      %v822 = vadd.f32 %v599, %v821
      %v823 = vpop.f32.mrf.mxu0
      %v824 = vadd.f32 %v595, %v823
      %v825 = vpop.f32.mrf.mxu0
      %v826 = vadd.f32 %v599, %v825
      %827 = vdwg.mxu0
      %828 = vmatprep.subr.bf16.mxu0 0
      %829 = vmatpush1.bf16.msra.mxu0 0
      %830 = vmatprep.subr.bf16.mxu0 0
      %831 = vmatpush1.bf16.msra.mxu0 0
      %832 = vmatprep.subr.bf16.mxu0 0
      %833 = vmatpush1.bf16.msra.mxu0 0
      %834 = vmatprep.subr.bf16.mxu0 0
      %835 = vmatpush1.bf16.msra.mxu0 0
      %836 = vmatprep.subr.bf16.mxu0 0
      %837 = vmatpush1.bf16.msra.mxu0 0
      %838 = vmatprep.subr.bf16.mxu0 0
      %839 = vmatpush1.bf16.msra.mxu0 0
      %840 = vmatprep.subr.bf16.mxu0 %v715
      %841 = vmatpush1.bf16.msra.mxu0 %v714
      %842 = vmatprep.subr.bf16.mxu0 %v705
      %843 = vmatpush1.bf16.msra.mxu0 %v704
      %844 = vmatprep.subr.bf16.mxu0 0
      %845 = vmatpush2.bf16.msra.mxu0 0
      %846 = vmatprep.subr.bf16.mxu0 0
      %847 = vmatpush2.bf16.msra.mxu0 0
      %848 = vmatprep.subr.bf16.mxu0 0
      %849 = vmatpush2.bf16.msra.mxu0 0
      %850 = vmatprep.subr.bf16.mxu0 0
      %851 = vmatpush2.bf16.msra.mxu0 0
      %852 = vmatprep.subr.bf16.mxu0 0
      %853 = vmatpush2.bf16.msra.mxu0 0
      %854 = vmatprep.subr.bf16.mxu0 0
      %855 = vmatpush2.bf16.msra.mxu0 0
      %856 = vmatprep.subr.bf16.mxu0 0
      %857 = vmatpush2.bf16.msra.mxu0 0
      %858 = vmatprep.subr.bf16.mxu0 0
      %859 = vmatpush2.bf16.msra.mxu0 0
      %860 = vmatprep.mubr.bf16.mxu0 0
      %861 = vmatmul.mubr.bf16.gmra.mxu0 %v744
      %v862 = vpop.f32.mrf.mxu0
      %v863 = vadd.f32 %v603, %v862
      %v864 = vpop.f32.mrf.mxu0
      %v865 = vadd.f32 %v607, %v864
      %v866 = vpop.f32.mrf.mxu0
      %v867 = vadd.f32 %v603, %v866
      %v868 = vpop.f32.mrf.mxu0
      %v869 = vadd.f32 %v607, %v868
      %870 = vmatprep.mubr.bf16.mxu0 0
      %871 = vmatmul.mubr.bf16.gmra.mxu0 %v747
      %v872 = vpop.f32.mrf.mxu0
      %v873 = vadd.f32 %v603, %v872
      %v874 = vpop.f32.mrf.mxu0
      %v875 = vadd.f32 %v607, %v874
      %v876 = vpop.f32.mrf.mxu0
      %v877 = vadd.f32 %v603, %v876
      %v878 = vpop.f32.mrf.mxu0
      %v879 = vadd.f32 %v607, %v878
      %880 = vmatprep.mubr.bf16.mxu0 0
      %881 = vmatmul.mubr.bf16.gmra.mxu0 %v750
      %v882 = vpop.f32.mrf.mxu0
      %v883 = vadd.f32 %v603, %v882
      %v884 = vpop.f32.mrf.mxu0
      %v885 = vadd.f32 %v607, %v884
      %v886 = vpop.f32.mrf.mxu0
      %v887 = vadd.f32 %v603, %v886
      %v888 = vpop.f32.mrf.mxu0
      %v889 = vadd.f32 %v607, %v888
      %890 = vmatprep.mubr.bf16.mxu0 0
      %891 = vmatmul.mubr.bf16.gmra.mxu0 %v753
      %v892 = vpop.f32.mrf.mxu0
      %v893 = vadd.f32 %v603, %v892
      %v894 = vpop.f32.mrf.mxu0
      %v895 = vadd.f32 %v607, %v894
      %v896 = vpop.f32.mrf.mxu0
      %v897 = vadd.f32 %v603, %v896
      %v898 = vpop.f32.mrf.mxu0
      %v899 = vadd.f32 %v607, %v898
      %900 = vdwg.mxu0
      %901 = vmatprep.subr.bf16.mxu0 0
      %902 = vmatpush1.bf16.msra.mxu0 0
      %903 = vmatprep.subr.bf16.mxu0 0
      %904 = vmatpush1.bf16.msra.mxu0 0
      %905 = vmatprep.subr.bf16.mxu0 0
      %906 = vmatpush1.bf16.msra.mxu0 0
      %907 = vmatprep.subr.bf16.mxu0 0
      %908 = vmatpush1.bf16.msra.mxu0 0
      %909 = vmatprep.subr.bf16.mxu0 0
      %910 = vmatpush1.bf16.msra.mxu0 0
      %911 = vmatprep.subr.bf16.mxu0 0
      %912 = vmatpush1.bf16.msra.mxu0 0
      %913 = vmatprep.subr.bf16.mxu0 %v717
      %914 = vmatpush1.bf16.msra.mxu0 %v716
      %915 = vmatprep.subr.bf16.mxu0 %v707
      %916 = vmatpush1.bf16.msra.mxu0 %v706
      %917 = vmatprep.subr.bf16.mxu0 0
      %918 = vmatpush2.bf16.msra.mxu0 0
      %919 = vmatprep.subr.bf16.mxu0 0
      %920 = vmatpush2.bf16.msra.mxu0 0
      %921 = vmatprep.subr.bf16.mxu0 0
      %922 = vmatpush2.bf16.msra.mxu0 0
      %923 = vmatprep.subr.bf16.mxu0 0
      %924 = vmatpush2.bf16.msra.mxu0 0
      %925 = vmatprep.subr.bf16.mxu0 0
      %926 = vmatpush2.bf16.msra.mxu0 0
      %927 = vmatprep.subr.bf16.mxu0 0
      %928 = vmatpush2.bf16.msra.mxu0 0
      %929 = vmatprep.subr.bf16.mxu0 0
      %930 = vmatpush2.bf16.msra.mxu0 0
      %931 = vmatprep.subr.bf16.mxu0 0
      %932 = vmatpush2.bf16.msra.mxu0 0
      %933 = vmatprep.mubr.bf16.mxu0 0
      %934 = vmatmul.mubr.bf16.gmra.mxu0 %v744
      %v935 = vpop.f32.mrf.mxu0
      %v936 = vadd.f32 %v611, %v935
      %v937 = vpop.f32.mrf.mxu0
      %v938 = vadd.f32 %v615, %v937
      %v939 = vpop.f32.mrf.mxu0
      %v940 = vadd.f32 %v611, %v939
      %v941 = vpop.f32.mrf.mxu0
      %v942 = vadd.f32 %v615, %v941
      %943 = vmatprep.mubr.bf16.mxu0 0
      %944 = vmatmul.mubr.bf16.gmra.mxu0 %v747
      %v945 = vpop.f32.mrf.mxu0
      %v946 = vadd.f32 %v611, %v945
      %v947 = vpop.f32.mrf.mxu0
      %v948 = vadd.f32 %v615, %v947
      %v949 = vpop.f32.mrf.mxu0
      %v950 = vadd.f32 %v611, %v949
      %v951 = vpop.f32.mrf.mxu0
      %v952 = vadd.f32 %v615, %v951
      %953 = vmatprep.mubr.bf16.mxu0 0
      %954 = vmatmul.mubr.bf16.gmra.mxu0 %v750
      %v955 = vpop.f32.mrf.mxu0
      %v956 = vadd.f32 %v611, %v955
      %v957 = vpop.f32.mrf.mxu0
      %v958 = vadd.f32 %v615, %v957
      %v959 = vpop.f32.mrf.mxu0
      %v960 = vadd.f32 %v611, %v959
      %v961 = vpop.f32.mrf.mxu0
      %v962 = vadd.f32 %v615, %v961
      %963 = vmatprep.mubr.bf16.mxu0 0
      %964 = vmatmul.mubr.bf16.gmra.mxu0 %v753
      %v965 = vpop.f32.mrf.mxu0
      %v966 = vadd.f32 %v611, %v965
      %v967 = vpop.f32.mrf.mxu0
      %v968 = vadd.f32 %v615, %v967
      %v969 = vpop.f32.mrf.mxu0
      %v970 = vadd.f32 %v611, %v969
      %v971 = vpop.f32.mrf.mxu0
      %v972 = vadd.f32 %v615, %v971
      %973 = vdwg.mxu0
      %974 = vmatprep.subr.bf16.mxu0 0
      %975 = vmatpush1.bf16.msra.mxu0 0
      %976 = vmatprep.subr.bf16.mxu0 0
      %977 = vmatpush1.bf16.msra.mxu0 0
      %978 = vmatprep.subr.bf16.mxu0 0
      %979 = vmatpush1.bf16.msra.mxu0 0
      %980 = vmatprep.subr.bf16.mxu0 0
      %981 = vmatpush1.bf16.msra.mxu0 0
      %982 = vmatprep.subr.bf16.mxu0 0
      %983 = vmatpush1.bf16.msra.mxu0 0
      %984 = vmatprep.subr.bf16.mxu0 0
      %985 = vmatpush1.bf16.msra.mxu0 0
      %986 = vmatprep.subr.bf16.mxu0 %v719
      %987 = vmatpush1.bf16.msra.mxu0 %v718
      %988 = vmatprep.subr.bf16.mxu0 %v709
      %989 = vmatpush1.bf16.msra.mxu0 %v708
      %990 = vmatprep.subr.bf16.mxu0 0
      %991 = vmatpush2.bf16.msra.mxu0 0
      %992 = vmatprep.subr.bf16.mxu0 0
      %993 = vmatpush2.bf16.msra.mxu0 0
      %994 = vmatprep.subr.bf16.mxu0 0
      %995 = vmatpush2.bf16.msra.mxu0 0
      %996 = vmatprep.subr.bf16.mxu0 0
      %997 = vmatpush2.bf16.msra.mxu0 0
      %998 = vmatprep.subr.bf16.mxu0 0
      %999 = vmatpush2.bf16.msra.mxu0 0
      %1000 = vmatprep.subr.bf16.mxu0 0
      %1001 = vmatpush2.bf16.msra.mxu0 0
      %1002 = vmatprep.subr.bf16.mxu0 0
      %1003 = vmatpush2.bf16.msra.mxu0 0
      %1004 = vmatprep.subr.bf16.mxu0 0
      %1005 = vmatpush2.bf16.msra.mxu0 0
      %1006 = vmatprep.mubr.bf16.mxu0 0
      %1007 = vmatmul.mubr.bf16.gmra.mxu0 %v744
      %v1008 = vpop.f32.mrf.mxu0
      %v1009 = vadd.f32 %v619, %v1008
      %v1010 = vpop.f32.mrf.mxu0
      %v1011 = vadd.f32 %v623, %v1010
      %v1012 = vpop.f32.mrf.mxu0
      %v1013 = vadd.f32 %v619, %v1012
      %v1014 = vpop.f32.mrf.mxu0
      %v1015 = vadd.f32 %v623, %v1014
      %1016 = vmatprep.mubr.bf16.mxu0 0
      %1017 = vmatmul.mubr.bf16.gmra.mxu0 %v747
      %v1018 = vpop.f32.mrf.mxu0
      %v1019 = vadd.f32 %v619, %v1018
      %v1020 = vpop.f32.mrf.mxu0
      %v1021 = vadd.f32 %v623, %v1020
      %v1022 = vpop.f32.mrf.mxu0
      %v1023 = vadd.f32 %v619, %v1022
      %v1024 = vpop.f32.mrf.mxu0
      %v1025 = vadd.f32 %v623, %v1024
      %1026 = vmatprep.mubr.bf16.mxu0 0
      %1027 = vmatmul.mubr.bf16.gmra.mxu0 %v750
      %v1028 = vpop.f32.mrf.mxu0
      %v1029 = vadd.f32 %v619, %v1028
      %v1030 = vpop.f32.mrf.mxu0
      %v1031 = vadd.f32 %v623, %v1030
      %v1032 = vpop.f32.mrf.mxu0
      %v1033 = vadd.f32 %v619, %v1032
      %v1034 = vpop.f32.mrf.mxu0
      %v1035 = vadd.f32 %v623, %v1034
      %1036 = vmatprep.mubr.bf16.mxu0 0
      %1037 = vmatmul.mubr.bf16.gmra.mxu0 %v753
      %v1038 = vpop.f32.mrf.mxu0
      %v1039 = vadd.f32 %v619, %v1038
      %v1040 = vpop.f32.mrf.mxu0
      %v1041 = vadd.f32 %v623, %v1040
      %v1042 = vpop.f32.mrf.mxu0
      %v1043 = vadd.f32 %v619, %v1042
      %v1044 = vpop.f32.mrf.mxu0
      %v1045 = vadd.f32 %v623, %v1044
      %1046 = vdwg.mxu0
      %1047 = vmatprep.subr.bf16.mxu0 0
      %1048 = vmatpush1.bf16.msra.mxu0 0
      %1049 = vmatprep.subr.bf16.mxu0 0
      %1050 = vmatpush1.bf16.msra.mxu0 0
      %1051 = vmatprep.subr.bf16.mxu0 0
      %1052 = vmatpush1.bf16.msra.mxu0 0
      %1053 = vmatprep.subr.bf16.mxu0 0
      %1054 = vmatpush1.bf16.msra.mxu0 0
      %1055 = vmatprep.subr.bf16.mxu0 0
      %1056 = vmatpush1.bf16.msra.mxu0 0
      %1057 = vmatprep.subr.bf16.mxu0 0
      %1058 = vmatpush1.bf16.msra.mxu0 0
      %1059 = vmatprep.subr.bf16.mxu0 %v721
      %1060 = vmatpush1.bf16.msra.mxu0 %v720
      %1061 = vmatprep.subr.bf16.mxu0 %v711
      %1062 = vmatpush1.bf16.msra.mxu0 %v710
      %1063 = vmatprep.subr.bf16.mxu0 0
      %1064 = vmatpush2.bf16.msra.mxu0 0
      %1065 = vmatprep.subr.bf16.mxu0 0
      %1066 = vmatpush2.bf16.msra.mxu0 0
      %1067 = vmatprep.subr.bf16.mxu0 0
      %1068 = vmatpush2.bf16.msra.mxu0 0
      %1069 = vmatprep.subr.bf16.mxu0 0
      %1070 = vmatpush2.bf16.msra.mxu0 0
      %1071 = vmatprep.subr.bf16.mxu0 0
      %1072 = vmatpush2.bf16.msra.mxu0 0
      %1073 = vmatprep.subr.bf16.mxu0 0
      %1074 = vmatpush2.bf16.msra.mxu0 0
      %1075 = vmatprep.subr.bf16.mxu0 0
      %1076 = vmatpush2.bf16.msra.mxu0 0
      %1077 = vmatprep.subr.bf16.mxu0 0
      %1078 = vmatpush2.bf16.msra.mxu0 0
      %1079 = vmatprep.mubr.bf16.mxu0 0
      %1080 = vmatmul.mubr.bf16.gmra.mxu0 %v744
      %v1081 = vpop.f32.mrf.mxu0
      %v1082 = vadd.f32 %v627, %v1081
      %v1083 = vpop.f32.mrf.mxu0
      %v1084 = vadd.f32 %v631, %v1083
      %v1085 = vpop.f32.mrf.mxu0
      %v1086 = vadd.f32 %v627, %v1085
      %v1087 = vpop.f32.mrf.mxu0
      %v1088 = vadd.f32 %v631, %v1087
      %1089 = vmatprep.mubr.bf16.mxu0 0
      %1090 = vmatmul.mubr.bf16.gmra.mxu0 %v747
      %v1091 = vpop.f32.mrf.mxu0
      %v1092 = vadd.f32 %v627, %v1091
      %v1093 = vpop.f32.mrf.mxu0
      %v1094 = vadd.f32 %v631, %v1093
      %v1095 = vpop.f32.mrf.mxu0
      %v1096 = vadd.f32 %v627, %v1095
      %v1097 = vpop.f32.mrf.mxu0
      %v1098 = vadd.f32 %v631, %v1097
      %1099 = vmatprep.mubr.bf16.mxu0 0
      %1100 = vmatmul.mubr.bf16.gmra.mxu0 %v750
      %v1101 = vpop.f32.mrf.mxu0
      %v1102 = vadd.f32 %v627, %v1101
      %v1103 = vpop.f32.mrf.mxu0
      %v1104 = vadd.f32 %v631, %v1103
      %v1105 = vpop.f32.mrf.mxu0
      %v1106 = vadd.f32 %v627, %v1105
      %v1107 = vpop.f32.mrf.mxu0
      %v1108 = vadd.f32 %v631, %v1107
      %1109 = vmatprep.mubr.bf16.mxu0 0
      %1110 = vmatmul.mubr.bf16.gmra.mxu0 %v753
      %v1111 = vpop.f32.mrf.mxu0
      %v1112 = vadd.f32 %v627, %v1111
      %v1113 = vpop.f32.mrf.mxu0
      %v1114 = vadd.f32 %v631, %v1113
      %v1115 = vpop.f32.mrf.mxu0
      %v1116 = vadd.f32 %v627, %v1115
      %v1117 = vpop.f32.mrf.mxu0
      %v1118 = vadd.f32 %v631, %v1117
      %1119 = vdwg.mxu0
      %v1120 = vxor.u32 %v790, 2147483648
      %v1121 = vxor.u32 %v792, 2147483648
      %v1122 = vxor.u32 %v863, 2147483648
      %v1123 = vxor.u32 %v865, 2147483648
      %v1124 = vxor.u32 %v936, 2147483648
      %v1125 = vxor.u32 %v938, 2147483648
      %v1126 = vxor.u32 %v1009, 2147483648
      %v1127 = vxor.u32 %v1011, 2147483648
      %v1128 = vxor.u32 %v1082, 2147483648
      %v1129 = vxor.u32 %v1084, 2147483648
      %v1130 = vxor.u32 %v794, 2147483648
      %v1131 = vxor.u32 %v796, 2147483648
      %v1132 = vxor.u32 %v867, 2147483648
      %v1133 = vxor.u32 %v869, 2147483648
      %v1134 = vxor.u32 %v940, 2147483648
      %v1135 = vxor.u32 %v942, 2147483648
      %v1136 = vxor.u32 %v1013, 2147483648
      %v1137 = vxor.u32 %v1015, 2147483648
      %v1138 = vxor.u32 %v1086, 2147483648
      %v1139 = vxor.u32 %v1088, 2147483648
      %v1140 = vxor.u32 %v800, 2147483648
      %v1141 = vxor.u32 %v802, 2147483648
      %v1142 = vxor.u32 %v873, 2147483648
      %v1143 = vxor.u32 %v875, 2147483648
      %v1144 = vxor.u32 %v946, 2147483648
      %v1145 = vxor.u32 %v948, 2147483648
      %v1146 = vxor.u32 %v1019, 2147483648
      %v1147 = vxor.u32 %v1021, 2147483648
      %v1148 = vxor.u32 %v1092, 2147483648
      %v1149 = vxor.u32 %v1094, 2147483648
      %v1150 = vxor.u32 %v804, 2147483648
      %v1151 = vxor.u32 %v806, 2147483648
      %v1152 = vxor.u32 %v877, 2147483648
      %v1153 = vxor.u32 %v879, 2147483648
      %v1154 = vxor.u32 %v950, 2147483648
      %v1155 = vxor.u32 %v952, 2147483648
      %v1156 = vxor.u32 %v1023, 2147483648
      %v1157 = vxor.u32 %v1025, 2147483648
      %v1158 = vxor.u32 %v1096, 2147483648
      %v1159 = vxor.u32 %v1098, 2147483648
      %v1160 = vxor.u32 %v810, 2147483648
      %v1161 = vxor.u32 %v812, 2147483648
      %v1162 = vxor.u32 %v883, 2147483648
      %v1163 = vxor.u32 %v885, 2147483648
      %v1164 = vxor.u32 %v956, 2147483648
      %v1165 = vxor.u32 %v958, 2147483648
      %v1166 = vxor.u32 %v1029, 2147483648
      %v1167 = vxor.u32 %v1031, 2147483648
      %v1168 = vxor.u32 %v1102, 2147483648
      %v1169 = vxor.u32 %v1104, 2147483648
      %v1170 = vxor.u32 %v814, 2147483648
      %v1171 = vxor.u32 %v816, 2147483648
      %v1172 = vxor.u32 %v887, 2147483648
      %v1173 = vxor.u32 %v889, 2147483648
      %v1174 = vxor.u32 %v960, 2147483648
      %v1175 = vxor.u32 %v962, 2147483648
      %v1176 = vxor.u32 %v1033, 2147483648
      %v1177 = vxor.u32 %v1035, 2147483648
      %v1178 = vxor.u32 %v1106, 2147483648
      %v1179 = vxor.u32 %v1108, 2147483648
      %v1180 = vxor.u32 %v820, 2147483648
      %v1181 = vxor.u32 %v822, 2147483648
      %v1182 = vxor.u32 %v893, 2147483648
      %v1183 = vxor.u32 %v895, 2147483648
      %v1184 = vxor.u32 %v966, 2147483648
      %v1185 = vxor.u32 %v968, 2147483648
      %v1186 = vxor.u32 %v1039, 2147483648
      %v1187 = vxor.u32 %v1041, 2147483648
      %v1188 = vxor.u32 %v1112, 2147483648
      %v1189 = vxor.u32 %v1114, 2147483648
      %v1190 = vxor.u32 %v824, 2147483648
      %v1191 = vxor.u32 %v826, 2147483648
      %v1192 = vxor.u32 %v897, 2147483648
      %v1193 = vxor.u32 %v899, 2147483648
      %v1194 = vxor.u32 %v970, 2147483648
      %v1195 = vxor.u32 %v972, 2147483648
      %v1196 = vxor.u32 %v1043, 2147483648
      %v1197 = vxor.u32 %v1045, 2147483648
      %v1198 = vxor.u32 %v1116, 2147483648
      %v1199 = vxor.u32 %v1118, 2147483648
      %v1200 = vmul.f32 %v1120, 1.442695
      %v1201 = vpow.pop %v1200
      %v1202 = vmul.f32 %v1121, 1.442695
      %v1203 = vpow.pop %v1202
      %v1204 = vmul.f32 %v1122, 1.442695
      %v1205 = vpow.pop %v1204
      %v1206 = vmul.f32 %v1123, 1.442695
      %v1207 = vpow.pop %v1206
      %v1208 = vmul.f32 %v1124, 1.442695
      %v1209 = vpow.pop %v1208
      %v1210 = vmul.f32 %v1125, 1.442695
      %v1211 = vpow.pop %v1210
      %v1212 = vmul.f32 %v1126, 1.442695
      %v1213 = vpow.pop %v1212
      %v1214 = vmul.f32 %v1127, 1.442695
      %v1215 = vpow.pop %v1214
      %v1216 = vmul.f32 %v1128, 1.442695
      %v1217 = vpow.pop %v1216
      %v1218 = vmul.f32 %v1129, 1.442695
      %v1219 = vpow.pop %v1218
      %v1220 = vmul.f32 %v1130, 1.442695
      %v1221 = vpow.pop %v1220
      %v1222 = vmul.f32 %v1131, 1.442695
      %v1223 = vpow.pop %v1222
      %v1224 = vmul.f32 %v1132, 1.442695
      %v1225 = vpow.pop %v1224
      %v1226 = vmul.f32 %v1133, 1.442695
      %v1227 = vpow.pop %v1226
      %v1228 = vmul.f32 %v1134, 1.442695
      %v1229 = vpow.pop %v1228
      %v1230 = vmul.f32 %v1135, 1.442695
      %v1231 = vpow.pop %v1230
      %v1232 = vmul.f32 %v1136, 1.442695
      %v1233 = vpow.pop %v1232
      %v1234 = vmul.f32 %v1137, 1.442695
      %v1235 = vpow.pop %v1234
      %v1236 = vmul.f32 %v1138, 1.442695
      %v1237 = vpow.pop %v1236
      %v1238 = vmul.f32 %v1139, 1.442695
      %v1239 = vpow.pop %v1238
      %v1240 = vmul.f32 %v1140, 1.442695
      %v1241 = vpow.pop %v1240
      %v1242 = vmul.f32 %v1141, 1.442695
      %v1243 = vpow.pop %v1242
      %v1244 = vmul.f32 %v1142, 1.442695
      %v1245 = vpow.pop %v1244
      %v1246 = vmul.f32 %v1143, 1.442695
      %v1247 = vpow.pop %v1246
      %v1248 = vmul.f32 %v1144, 1.442695
      %v1249 = vpow.pop %v1248
      %v1250 = vmul.f32 %v1145, 1.442695
      %v1251 = vpow.pop %v1250
      %v1252 = vmul.f32 %v1146, 1.442695
      %v1253 = vpow.pop %v1252
      %v1254 = vmul.f32 %v1147, 1.442695
      %v1255 = vpow.pop %v1254
      %v1256 = vmul.f32 %v1148, 1.442695
      %v1257 = vpow.pop %v1256
      %v1258 = vmul.f32 %v1149, 1.442695
      %v1259 = vpow.pop %v1258
      %v1260 = vmul.f32 %v1150, 1.442695
      %v1261 = vpow.pop %v1260
      %v1262 = vmul.f32 %v1151, 1.442695
      %v1263 = vpow.pop %v1262
      %v1264 = vmul.f32 %v1152, 1.442695
      %v1265 = vpow.pop %v1264
      %v1266 = vmul.f32 %v1153, 1.442695
      %v1267 = vpow.pop %v1266
      %v1268 = vmul.f32 %v1154, 1.442695
      %v1269 = vpow.pop %v1268
      %v1270 = vmul.f32 %v1155, 1.442695
      %v1271 = vpow.pop %v1270
      %v1272 = vmul.f32 %v1156, 1.442695
      %v1273 = vpow.pop %v1272
      %v1274 = vmul.f32 %v1157, 1.442695
      %v1275 = vpow.pop %v1274
      %v1276 = vmul.f32 %v1158, 1.442695
      %v1277 = vpow.pop %v1276
      %v1278 = vmul.f32 %v1159, 1.442695
      %v1279 = vpow.pop %v1278
      %v1280 = vmul.f32 %v1160, 1.442695
      %v1281 = vpow.pop %v1280
      %v1282 = vmul.f32 %v1161, 1.442695
      %v1283 = vpow.pop %v1282
      %v1284 = vmul.f32 %v1162, 1.442695
      %v1285 = vpow.pop %v1284
      %v1286 = vmul.f32 %v1163, 1.442695
      %v1287 = vpow.pop %v1286
      %v1288 = vmul.f32 %v1164, 1.442695
      %v1289 = vpow.pop %v1288
      %v1290 = vmul.f32 %v1165, 1.442695
      %v1291 = vpow.pop %v1290
      %v1292 = vmul.f32 %v1166, 1.442695
      %v1293 = vpow.pop %v1292
      %v1294 = vmul.f32 %v1167, 1.442695
      %v1295 = vpow.pop %v1294
      %v1296 = vmul.f32 %v1168, 1.442695
      %v1297 = vpow.pop %v1296
      %v1298 = vmul.f32 %v1169, 1.442695
      %v1299 = vpow.pop %v1298
      %v1300 = vmul.f32 %v1170, 1.442695
      %v1301 = vpow.pop %v1300
      %v1302 = vmul.f32 %v1171, 1.442695
      %v1303 = vpow.pop %v1302
      %v1304 = vmul.f32 %v1172, 1.442695
      %v1305 = vpow.pop %v1304
      %v1306 = vmul.f32 %v1173, 1.442695
      %v1307 = vpow.pop %v1306
      %v1308 = vmul.f32 %v1174, 1.442695
      %v1309 = vpow.pop %v1308
      %v1310 = vmul.f32 %v1175, 1.442695
      %v1311 = vpow.pop %v1310
      %v1312 = vmul.f32 %v1176, 1.442695
      %v1313 = vpow.pop %v1312
      %v1314 = vmul.f32 %v1177, 1.442695
      %v1315 = vpow.pop %v1314
      %v1316 = vmul.f32 %v1178, 1.442695
      %v1317 = vpow.pop %v1316
      %v1318 = vmul.f32 %v1179, 1.442695
      %v1319 = vpow.pop %v1318
      %v1320 = vmul.f32 %v1180, 1.442695
      %v1321 = vpow.pop %v1320
      %v1322 = vmul.f32 %v1181, 1.442695
      %v1323 = vpow.pop %v1322
      %v1324 = vmul.f32 %v1182, 1.442695
      %v1325 = vpow.pop %v1324
      %v1326 = vmul.f32 %v1183, 1.442695
      %v1327 = vpow.pop %v1326
      %v1328 = vmul.f32 %v1184, 1.442695
      %v1329 = vpow.pop %v1328
      %v1330 = vmul.f32 %v1185, 1.442695
      %v1331 = vpow.pop %v1330
      %v1332 = vmul.f32 %v1186, 1.442695
      %v1333 = vpow.pop %v1332
      %v1334 = vmul.f32 %v1187, 1.442695
      %v1335 = vpow.pop %v1334
      %v1336 = vmul.f32 %v1188, 1.442695
      %v1337 = vpow.pop %v1336
      %v1338 = vmul.f32 %v1189, 1.442695
      %v1339 = vpow.pop %v1338
      %v1340 = vmul.f32 %v1190, 1.442695
      %v1341 = vpow.pop %v1340
      %v1342 = vmul.f32 %v1191, 1.442695
      %v1343 = vpow.pop %v1342
      %v1344 = vmul.f32 %v1192, 1.442695
      %v1345 = vpow.pop %v1344
      %v1346 = vmul.f32 %v1193, 1.442695
      %v1347 = vpow.pop %v1346
      %v1348 = vmul.f32 %v1194, 1.442695
      %v1349 = vpow.pop %v1348
      %v1350 = vmul.f32 %v1195, 1.442695
      %v1351 = vpow.pop %v1350
      %v1352 = vmul.f32 %v1196, 1.442695
      %v1353 = vpow.pop %v1352
      %v1354 = vmul.f32 %v1197, 1.442695
      %v1355 = vpow.pop %v1354
      %v1356 = vmul.f32 %v1198, 1.442695
      %v1357 = vpow.pop %v1356
      %v1358 = vmul.f32 %v1199, 1.442695
      %v1359 = vpow.pop %v1358
      %v1360 = vadd.f32 %v1201, 1.0
      %v1361 = vadd.f32 %v1203, 1.0
      %v1362 = vadd.f32 %v1205, 1.0
      %v1363 = vadd.f32 %v1207, 1.0
      %v1364 = vadd.f32 %v1209, 1.0
      %v1365 = vadd.f32 %v1211, 1.0
      %v1366 = vadd.f32 %v1213, 1.0
      %v1367 = vadd.f32 %v1215, 1.0
      %v1368 = vadd.f32 %v1217, 1.0
      %v1369 = vadd.f32 %v1219, 1.0
      %v1370 = vadd.f32 %v1221, 1.0
      %v1371 = vadd.f32 %v1223, 1.0
      %v1372 = vadd.f32 %v1225, 1.0
      %v1373 = vadd.f32 %v1227, 1.0
      %v1374 = vadd.f32 %v1229, 1.0
      %v1375 = vadd.f32 %v1231, 1.0
      %v1376 = vadd.f32 %v1233, 1.0
      %v1377 = vadd.f32 %v1235, 1.0
      %v1378 = vadd.f32 %v1237, 1.0
      %v1379 = vadd.f32 %v1239, 1.0
      %v1380 = vadd.f32 %v1241, 1.0
      %v1381 = vadd.f32 %v1243, 1.0
      %v1382 = vadd.f32 %v1245, 1.0
      %v1383 = vadd.f32 %v1247, 1.0
      %v1384 = vadd.f32 %v1249, 1.0
      %v1385 = vadd.f32 %v1251, 1.0
      %v1386 = vadd.f32 %v1253, 1.0
      %v1387 = vadd.f32 %v1255, 1.0
      %v1388 = vadd.f32 %v1257, 1.0
      %v1389 = vadd.f32 %v1259, 1.0
      %v1390 = vadd.f32 %v1261, 1.0
      %v1391 = vadd.f32 %v1263, 1.0
      %v1392 = vadd.f32 %v1265, 1.0
      %v1393 = vadd.f32 %v1267, 1.0
      %v1394 = vadd.f32 %v1269, 1.0
      %v1395 = vadd.f32 %v1271, 1.0
      %v1396 = vadd.f32 %v1273, 1.0
      %v1397 = vadd.f32 %v1275, 1.0
      %v1398 = vadd.f32 %v1277, 1.0
      %v1399 = vadd.f32 %v1279, 1.0
      %v1400 = vadd.f32 %v1281, 1.0
      %v1401 = vadd.f32 %v1283, 1.0
      %v1402 = vadd.f32 %v1285, 1.0
      %v1403 = vadd.f32 %v1287, 1.0
      %v1404 = vadd.f32 %v1289, 1.0
      %v1405 = vadd.f32 %v1291, 1.0
      %v1406 = vadd.f32 %v1293, 1.0
      %v1407 = vadd.f32 %v1295, 1.0
      %v1408 = vadd.f32 %v1297, 1.0
      %v1409 = vadd.f32 %v1299, 1.0
      %v1410 = vadd.f32 %v1301, 1.0
      %v1411 = vadd.f32 %v1303, 1.0
      %v1412 = vadd.f32 %v1305, 1.0
      %v1413 = vadd.f32 %v1307, 1.0
      %v1414 = vadd.f32 %v1309, 1.0
      %v1415 = vadd.f32 %v1311, 1.0
      %v1416 = vadd.f32 %v1313, 1.0
      %v1417 = vadd.f32 %v1315, 1.0
      %v1418 = vadd.f32 %v1317, 1.0
      %v1419 = vadd.f32 %v1319, 1.0
      %v1420 = vadd.f32 %v1321, 1.0
      %v1421 = vadd.f32 %v1323, 1.0
      %v1422 = vadd.f32 %v1325, 1.0
      %v1423 = vadd.f32 %v1327, 1.0
      %v1424 = vadd.f32 %v1329, 1.0
      %v1425 = vadd.f32 %v1331, 1.0
      %v1426 = vadd.f32 %v1333, 1.0
      %v1427 = vadd.f32 %v1335, 1.0
      %v1428 = vadd.f32 %v1337, 1.0
      %v1429 = vadd.f32 %v1339, 1.0
      %v1430 = vadd.f32 %v1341, 1.0
      %v1431 = vadd.f32 %v1343, 1.0
      %v1432 = vadd.f32 %v1345, 1.0
      %v1433 = vadd.f32 %v1347, 1.0
      %v1434 = vadd.f32 %v1349, 1.0
      %v1435 = vadd.f32 %v1351, 1.0
      %v1436 = vadd.f32 %v1353, 1.0
      %v1437 = vadd.f32 %v1355, 1.0
      %v1438 = vadd.f32 %v1357, 1.0
      %v1439 = vadd.f32 %v1359, 1.0
      %v1440 = vrcp.pop %v1360
      %v1441 = vmul.f32 1.0, %v1440
      %v1442 = vrcp.pop %v1361
      %v1443 = vmul.f32 1.0, %v1442
      %v1444 = vrcp.pop %v1362
      %v1445 = vmul.f32 1.0, %v1444
      %v1446 = vrcp.pop %v1363
      %v1447 = vmul.f32 1.0, %v1446
      %v1448 = vrcp.pop %v1364
      %v1449 = vmul.f32 1.0, %v1448
      %v1450 = vrcp.pop %v1365
      %v1451 = vmul.f32 1.0, %v1450
      %v1452 = vrcp.pop %v1366
      %v1453 = vmul.f32 1.0, %v1452
      %v1454 = vrcp.pop %v1367
      %v1455 = vmul.f32 1.0, %v1454
      %v1456 = vrcp.pop %v1368
      %v1457 = vmul.f32 1.0, %v1456
      %v1458 = vrcp.pop %v1369
      %v1459 = vmul.f32 1.0, %v1458
      %v1460 = vrcp.pop %v1370
      %v1461 = vmul.f32 1.0, %v1460
      %v1462 = vrcp.pop %v1371
      %v1463 = vmul.f32 1.0, %v1462
      %v1464 = vrcp.pop %v1372
      %v1465 = vmul.f32 1.0, %v1464
      %v1466 = vrcp.pop %v1373
      %v1467 = vmul.f32 1.0, %v1466
      %v1468 = vrcp.pop %v1374
      %v1469 = vmul.f32 1.0, %v1468
      %v1470 = vrcp.pop %v1375
      %v1471 = vmul.f32 1.0, %v1470
      %v1472 = vrcp.pop %v1376
      %v1473 = vmul.f32 1.0, %v1472
      %v1474 = vrcp.pop %v1377
      %v1475 = vmul.f32 1.0, %v1474
      %v1476 = vrcp.pop %v1378
      %v1477 = vmul.f32 1.0, %v1476
      %v1478 = vrcp.pop %v1379
      %v1479 = vmul.f32 1.0, %v1478
      %v1480 = vrcp.pop %v1380
      %v1481 = vmul.f32 1.0, %v1480
      %v1482 = vrcp.pop %v1381
      %v1483 = vmul.f32 1.0, %v1482
      %v1484 = vrcp.pop %v1382
      %v1485 = vmul.f32 1.0, %v1484
      %v1486 = vrcp.pop %v1383
      %v1487 = vmul.f32 1.0, %v1486
      %v1488 = vrcp.pop %v1384
      %v1489 = vmul.f32 1.0, %v1488
      %v1490 = vrcp.pop %v1385
      %v1491 = vmul.f32 1.0, %v1490
      %v1492 = vrcp.pop %v1386
      %v1493 = vmul.f32 1.0, %v1492
      %v1494 = vrcp.pop %v1387
      %v1495 = vmul.f32 1.0, %v1494
      %v1496 = vrcp.pop %v1388
      %v1497 = vmul.f32 1.0, %v1496
      %v1498 = vrcp.pop %v1389
      %v1499 = vmul.f32 1.0, %v1498
      %v1500 = vrcp.pop %v1390
      %v1501 = vmul.f32 1.0, %v1500
      %v1502 = vrcp.pop %v1391
      %v1503 = vmul.f32 1.0, %v1502
      %v1504 = vrcp.pop %v1392
      %v1505 = vmul.f32 1.0, %v1504
      %v1506 = vrcp.pop %v1393
      %v1507 = vmul.f32 1.0, %v1506
      %v1508 = vrcp.pop %v1394
      %v1509 = vmul.f32 1.0, %v1508
      %v1510 = vrcp.pop %v1395
      %v1511 = vmul.f32 1.0, %v1510
      %v1512 = vrcp.pop %v1396
      %v1513 = vmul.f32 1.0, %v1512
      %v1514 = vrcp.pop %v1397
      %v1515 = vmul.f32 1.0, %v1514
      %v1516 = vrcp.pop %v1398
      %v1517 = vmul.f32 1.0, %v1516
      %v1518 = vrcp.pop %v1399
      %v1519 = vmul.f32 1.0, %v1518
      %v1520 = vrcp.pop %v1400
      %v1521 = vmul.f32 1.0, %v1520
      %v1522 = vrcp.pop %v1401
      %v1523 = vmul.f32 1.0, %v1522
      %v1524 = vrcp.pop %v1402
      %v1525 = vmul.f32 1.0, %v1524
      %v1526 = vrcp.pop %v1403
      %v1527 = vmul.f32 1.0, %v1526
      %v1528 = vrcp.pop %v1404
      %v1529 = vmul.f32 1.0, %v1528
      %v1530 = vrcp.pop %v1405
      %v1531 = vmul.f32 1.0, %v1530
      %v1532 = vrcp.pop %v1406
      %v1533 = vmul.f32 1.0, %v1532
      %v1534 = vrcp.pop %v1407
      %v1535 = vmul.f32 1.0, %v1534
      %v1536 = vrcp.pop %v1408
      %v1537 = vmul.f32 1.0, %v1536
      %v1538 = vrcp.pop %v1409
      %v1539 = vmul.f32 1.0, %v1538
      %v1540 = vrcp.pop %v1410
      %v1541 = vmul.f32 1.0, %v1540
      %v1542 = vrcp.pop %v1411
      %v1543 = vmul.f32 1.0, %v1542
      %v1544 = vrcp.pop %v1412
      %v1545 = vmul.f32 1.0, %v1544
      %v1546 = vrcp.pop %v1413
      %v1547 = vmul.f32 1.0, %v1546
      %v1548 = vrcp.pop %v1414
      %v1549 = vmul.f32 1.0, %v1548
      %v1550 = vrcp.pop %v1415
      %v1551 = vmul.f32 1.0, %v1550
      %v1552 = vrcp.pop %v1416
      %v1553 = vmul.f32 1.0, %v1552
      %v1554 = vrcp.pop %v1417
      %v1555 = vmul.f32 1.0, %v1554
      %v1556 = vrcp.pop %v1418
      %v1557 = vmul.f32 1.0, %v1556
      %v1558 = vrcp.pop %v1419
      %v1559 = vmul.f32 1.0, %v1558
      %v1560 = vrcp.pop %v1420
      %v1561 = vmul.f32 1.0, %v1560
      %v1562 = vrcp.pop %v1421
      %v1563 = vmul.f32 1.0, %v1562
      %v1564 = vrcp.pop %v1422
      %v1565 = vmul.f32 1.0, %v1564
      %v1566 = vrcp.pop %v1423
      %v1567 = vmul.f32 1.0, %v1566
      %v1568 = vrcp.pop %v1424
      %v1569 = vmul.f32 1.0, %v1568
      %v1570 = vrcp.pop %v1425
      %v1571 = vmul.f32 1.0, %v1570
      %v1572 = vrcp.pop %v1426
      %v1573 = vmul.f32 1.0, %v1572
      %v1574 = vrcp.pop %v1427
      %v1575 = vmul.f32 1.0, %v1574
      %v1576 = vrcp.pop %v1428
      %v1577 = vmul.f32 1.0, %v1576
      %v1578 = vrcp.pop %v1429
      %v1579 = vmul.f32 1.0, %v1578
      %v1580 = vrcp.pop %v1430
      %v1581 = vmul.f32 1.0, %v1580
      %v1582 = vrcp.pop %v1431
      %v1583 = vmul.f32 1.0, %v1582
      %v1584 = vrcp.pop %v1432
      %v1585 = vmul.f32 1.0, %v1584
      %v1586 = vrcp.pop %v1433
      %v1587 = vmul.f32 1.0, %v1586
      %v1588 = vrcp.pop %v1434
      %v1589 = vmul.f32 1.0, %v1588
      %v1590 = vrcp.pop %v1435
      %v1591 = vmul.f32 1.0, %v1590
      %v1592 = vrcp.pop %v1436
      %v1593 = vmul.f32 1.0, %v1592
      %v1594 = vrcp.pop %v1437
      %v1595 = vmul.f32 1.0, %v1594
      %v1596 = vrcp.pop %v1438
      %v1597 = vmul.f32 1.0, %v1596
      %v1598 = vrcp.pop %v1439
      %v1599 = vmul.f32 1.0, %v1598
      %v1600 = vmul.f32 %v790, %v1441
      %v1601 = vmul.f32 %v792, %v1443
      %v1602 = vmul.f32 %v863, %v1445
      %v1603 = vmul.f32 %v865, %v1447
      %v1604 = vmul.f32 %v936, %v1449
      %v1605 = vmul.f32 %v938, %v1451
      %v1606 = vmul.f32 %v1009, %v1453
      %v1607 = vmul.f32 %v1011, %v1455
      %v1608 = vmul.f32 %v1082, %v1457
      %v1609 = vmul.f32 %v1084, %v1459
      %v1610 = vmul.f32 %v794, %v1461
      %v1611 = vmul.f32 %v796, %v1463
      %v1612 = vmul.f32 %v867, %v1465
      %v1613 = vmul.f32 %v869, %v1467
      %v1614 = vmul.f32 %v940, %v1469
      %v1615 = vmul.f32 %v942, %v1471
      %v1616 = vmul.f32 %v1013, %v1473
      %v1617 = vmul.f32 %v1015, %v1475
      %v1618 = vmul.f32 %v1086, %v1477
      %v1619 = vmul.f32 %v1088, %v1479
      %v1620 = vmul.f32 %v800, %v1481
      %v1621 = vmul.f32 %v802, %v1483
      %v1622 = vmul.f32 %v873, %v1485
      %v1623 = vmul.f32 %v875, %v1487
      %v1624 = vmul.f32 %v946, %v1489
      %v1625 = vmul.f32 %v948, %v1491
      %v1626 = vmul.f32 %v1019, %v1493
      %v1627 = vmul.f32 %v1021, %v1495
      %v1628 = vmul.f32 %v1092, %v1497
      %v1629 = vmul.f32 %v1094, %v1499
      %v1630 = vmul.f32 %v804, %v1501
      %v1631 = vmul.f32 %v806, %v1503
      %v1632 = vmul.f32 %v877, %v1505
      %v1633 = vmul.f32 %v879, %v1507
      %v1634 = vmul.f32 %v950, %v1509
      %v1635 = vmul.f32 %v952, %v1511
      %v1636 = vmul.f32 %v1023, %v1513
      %v1637 = vmul.f32 %v1025, %v1515
      %v1638 = vmul.f32 %v1096, %v1517
      %v1639 = vmul.f32 %v1098, %v1519
      %v1640 = vmul.f32 %v810, %v1521
      %v1641 = vmul.f32 %v812, %v1523
      %v1642 = vmul.f32 %v883, %v1525
      %v1643 = vmul.f32 %v885, %v1527
      %v1644 = vmul.f32 %v956, %v1529
      %v1645 = vmul.f32 %v958, %v1531
      %v1646 = vmul.f32 %v1029, %v1533
      %v1647 = vmul.f32 %v1031, %v1535
      %v1648 = vmul.f32 %v1102, %v1537
      %v1649 = vmul.f32 %v1104, %v1539
      %v1650 = vmul.f32 %v814, %v1541
      %v1651 = vmul.f32 %v816, %v1543
      %v1652 = vmul.f32 %v887, %v1545
      %v1653 = vmul.f32 %v889, %v1547
      %v1654 = vmul.f32 %v960, %v1549
      %v1655 = vmul.f32 %v962, %v1551
      %v1656 = vmul.f32 %v1033, %v1553
      %v1657 = vmul.f32 %v1035, %v1555
      %v1658 = vmul.f32 %v1106, %v1557
      %v1659 = vmul.f32 %v1108, %v1559
      %v1660 = vmul.f32 %v820, %v1561
      %v1661 = vmul.f32 %v822, %v1563
      %v1662 = vmul.f32 %v893, %v1565
      %v1663 = vmul.f32 %v895, %v1567
      %v1664 = vmul.f32 %v966, %v1569
      %v1665 = vmul.f32 %v968, %v1571
      %v1666 = vmul.f32 %v1039, %v1573
      %v1667 = vmul.f32 %v1041, %v1575
      %v1668 = vmul.f32 %v1112, %v1577
      %v1669 = vmul.f32 %v1114, %v1579
      %v1670 = vmul.f32 %v824, %v1581
      %v1671 = vmul.f32 %v826, %v1583
      %v1672 = vmul.f32 %v897, %v1585
      %v1673 = vmul.f32 %v899, %v1587
      %v1674 = vmul.f32 %v970, %v1589
      %v1675 = vmul.f32 %v972, %v1591
      %v1676 = vmul.f32 %v1043, %v1593
      %v1677 = vmul.f32 %v1045, %v1595
      %v1678 = vmul.f32 %v1116, %v1597
      %v1679 = vmul.f32 %v1118, %v1599
      %v1680 = vld [vmem:[#allocation2] sm:$0xff]
      %v1681 = vld [vmem:[#allocation2 + $0x8] sm:$0x3]
      %v1682 = vadd.f32 %v1600, %v1610
      %v1683 = vadd.f32 %v1682, %v1620
      %v1684 = vadd.f32 %v1683, %v1630
      %v1685 = vadd.f32 %v1684, %v1640
      %v1686 = vadd.f32 %v1685, %v1650
      %v1687 = vadd.f32 %v1686, %v1660
      %v1688 = vadd.f32 %v1687, %v1670
      %v1689 = vrot.slane %v1688, 4
      %v1690 = vadd.f32 %v1688, %v1689
      %v1691 = vrot.slane %v1690, 2
      %v1692 = vadd.f32 %v1690, %v1691
      %v1693 = vrot.slane %v1692, 1
      %v1694 = vadd.f32 %v1692, %v1693
      %v1695 = vadd.f32 %v1601, %v1611
      %v1696 = vadd.f32 %v1695, %v1621
      %v1697 = vadd.f32 %v1696, %v1631
      %v1698 = vadd.f32 %v1697, %v1641
      %v1699 = vadd.f32 %v1698, %v1651
      %v1700 = vadd.f32 %v1699, %v1661
      %v1701 = vadd.f32 %v1700, %v1671
      %v1702 = vrot.slane %v1701, 4
      %v1703 = vadd.f32 %v1701, %v1702
      %v1704 = vrot.slane %v1703, 2
      %v1705 = vadd.f32 %v1703, %v1704
      %v1706 = vrot.slane %v1705, 1
      %v1707 = vadd.f32 %v1705, %v1706
      %v1708 = vadd.f32 %v1602, %v1612
      %v1709 = vadd.f32 %v1708, %v1622
      %v1710 = vadd.f32 %v1709, %v1632
      %v1711 = vadd.f32 %v1710, %v1642
      %v1712 = vadd.f32 %v1711, %v1652
      %v1713 = vadd.f32 %v1712, %v1662
      %v1714 = vadd.f32 %v1713, %v1672
      %v1715 = vrot.slane %v1714, 4
      %v1716 = vadd.f32 %v1714, %v1715
      %v1717 = vrot.slane %v1716, 2
      %v1718 = vadd.f32 %v1716, %v1717
      %v1719 = vrot.slane %v1718, 1
      %v1720 = vadd.f32 %v1718, %v1719
      %v1721 = vadd.f32 %v1603, %v1613
      %v1722 = vadd.f32 %v1721, %v1623
      %v1723 = vadd.f32 %v1722, %v1633
      %v1724 = vadd.f32 %v1723, %v1643
      %v1725 = vadd.f32 %v1724, %v1653
      %v1726 = vadd.f32 %v1725, %v1663
      %v1727 = vadd.f32 %v1726, %v1673
      %v1728 = vrot.slane %v1727, 4
      %v1729 = vadd.f32 %v1727, %v1728
      %v1730 = vrot.slane %v1729, 2
      %v1731 = vadd.f32 %v1729, %v1730
      %v1732 = vrot.slane %v1731, 1
      %v1733 = vadd.f32 %v1731, %v1732
      %v1734 = vadd.f32 %v1604, %v1614
      %v1735 = vadd.f32 %v1734, %v1624
      %v1736 = vadd.f32 %v1735, %v1634
      %v1737 = vadd.f32 %v1736, %v1644
      %v1738 = vadd.f32 %v1737, %v1654
      %v1739 = vadd.f32 %v1738, %v1664
      %v1740 = vadd.f32 %v1739, %v1674
      %v1741 = vrot.slane %v1740, 4
      %v1742 = vadd.f32 %v1740, %v1741
      %v1743 = vrot.slane %v1742, 2
      %v1744 = vadd.f32 %v1742, %v1743
      %v1745 = vrot.slane %v1744, 1
      %v1746 = vadd.f32 %v1744, %v1745
      %v1747 = vadd.f32 %v1605, %v1615
      %v1748 = vadd.f32 %v1747, %v1625
      %v1749 = vadd.f32 %v1748, %v1635
      %v1750 = vadd.f32 %v1749, %v1645
      %v1751 = vadd.f32 %v1750, %v1655
      %v1752 = vadd.f32 %v1751, %v1665
      %v1753 = vadd.f32 %v1752, %v1675
      %v1754 = vrot.slane %v1753, 4
      %v1755 = vadd.f32 %v1753, %v1754
      %v1756 = vrot.slane %v1755, 2
      %v1757 = vadd.f32 %v1755, %v1756
      %v1758 = vrot.slane %v1757, 1
      %v1759 = vadd.f32 %v1757, %v1758
      %v1760 = vadd.f32 %v1606, %v1616
      %v1761 = vadd.f32 %v1760, %v1626
      %v1762 = vadd.f32 %v1761, %v1636
      %v1763 = vadd.f32 %v1762, %v1646
      %v1764 = vadd.f32 %v1763, %v1656
      %v1765 = vadd.f32 %v1764, %v1666
      %v1766 = vadd.f32 %v1765, %v1676
      %v1767 = vrot.slane %v1766, 4
      %v1768 = vadd.f32 %v1766, %v1767
      %v1769 = vrot.slane %v1768, 2
      %v1770 = vadd.f32 %v1768, %v1769
      %v1771 = vrot.slane %v1770, 1
      %v1772 = vadd.f32 %v1770, %v1771
      %v1773 = vadd.f32 %v1607, %v1617
      %v1774 = vadd.f32 %v1773, %v1627
      %v1775 = vadd.f32 %v1774, %v1637
      %v1776 = vadd.f32 %v1775, %v1647
      %v1777 = vadd.f32 %v1776, %v1657
      %v1778 = vadd.f32 %v1777, %v1667
      %v1779 = vadd.f32 %v1778, %v1677
      %v1780 = vrot.slane %v1779, 4
      %v1781 = vadd.f32 %v1779, %v1780
      %v1782 = vrot.slane %v1781, 2
      %v1783 = vadd.f32 %v1781, %v1782
      %v1784 = vrot.slane %v1783, 1
      %v1785 = vadd.f32 %v1783, %v1784
      %v1786 = vadd.f32 %v1608, %v1618
      %v1787 = vadd.f32 %v1786, %v1628
      %v1788 = vadd.f32 %v1787, %v1638
      %v1789 = vadd.f32 %v1788, %v1648
      %v1790 = vadd.f32 %v1789, %v1658
      %v1791 = vadd.f32 %v1790, %v1668
      %v1792 = vadd.f32 %v1791, %v1678
      %v1793 = vrot.slane %v1792, 4
      %v1794 = vadd.f32 %v1792, %v1793
      %v1795 = vrot.slane %v1794, 2
      %v1796 = vadd.f32 %v1794, %v1795
      %v1797 = vrot.slane %v1796, 1
      %v1798 = vadd.f32 %v1796, %v1797
      %v1799 = vadd.f32 %v1609, %v1619
      %v1800 = vadd.f32 %v1799, %v1629
      %v1801 = vadd.f32 %v1800, %v1639
      %v1802 = vadd.f32 %v1801, %v1649
      %v1803 = vadd.f32 %v1802, %v1659
      %v1804 = vadd.f32 %v1803, %v1669
      %v1805 = vadd.f32 %v1804, %v1679
      %v1806 = vrot.slane %v1805, 4
      %v1807 = vadd.f32 %v1805, %v1806
      %v1808 = vrot.slane %v1807, 2
      %v1809 = vadd.f32 %v1807, %v1808
      %v1810 = vrot.slane %v1809, 1
      %v1811 = vadd.f32 %v1809, %v1810
      %v1822 = vcombine.low %v1694, %v1707
      %v1823 = vcombine.low %v1720, %v1733
      %v1824 = vcombine.low %v1746, %v1759
      %v1825 = vcombine.low %v1772, %v1785
      %v1827 = vunpack.c.l.s4 1966171168
      %v1828 = vunpack.c.0.s8 %v1827
      %v1829 = vlaneseq
      %v1830 = vshrl.u32 %v1829, 7
      %v1831 = vsub.s32 %v1828, %v1830
      %v1832 = vrot.slane %v1822, %v1831
      %v1834 = vunpack.c.l.s4 1966171168
      %v1835 = vunpack.c.0.s8 %v1834
      %v1836 = vlaneseq
      %v1837 = vshrl.u32 %v1836, 7
      %v1838 = vsub.s32 %v1835, %v1837
      %v1839 = vrot.slane %v1823, %v1838
      %v1841 = vunpack.c.l.s4 1966171168
      %v1842 = vunpack.c.0.s8 %v1841
      %v1843 = vlaneseq
      %v1844 = vshrl.u32 %v1843, 7
      %v1845 = vsub.s32 %v1842, %v1844
      %v1846 = vrot.slane %v1824, %v1845
      %v1848 = vunpack.c.l.s4 1966171168
      %v1849 = vunpack.c.0.s8 %v1848
      %v1850 = vlaneseq
      %v1851 = vshrl.u32 %v1850, 7
      %v1852 = vsub.s32 %v1849, %v1851
      %v1853 = vrot.slane %v1825, %v1852
      %v1854 = vcombine.low %v1832, %v1839
      %v1855 = vcombine.low %v1846, %v1853
      %v1857 = vunpack.c.l.s4 1966171168
      %v1858 = vunpack.c.0.s8 %v1857
      %v1859 = vlaneseq
      %v1860 = vshrl.u32 %v1859, 7
      %v1861 = vsub.s32 %v1858, %v1860
      %v1862 = vrot.slane %v1854, %v1861
      %v1864 = vunpack.c.l.s4 1966171168
      %v1865 = vunpack.c.0.s8 %v1864
      %v1866 = vlaneseq
      %v1867 = vshrl.u32 %v1866, 7
      %v1868 = vsub.s32 %v1865, %v1867
      %v1869 = vrot.slane %v1855, %v1868
      %v1870 = vcombine.low %v1862, %v1869
      %v1871 = vcombine.low %v1798, %v1811
      %v1873 = vunpack.c.l.s4 1966171168
      %v1874 = vunpack.c.0.s8 %v1873
      %v1875 = vlaneseq
      %v1876 = vshrl.u32 %v1875, 7
      %v1877 = vsub.s32 %v1874, %v1876
      %v1878 = vrot.slane %v1871, %v1877
      %v1880 = vunpack.c.l.s4 1966171168
      %v1881 = vunpack.c.0.s8 %v1880
      %v1882 = vlaneseq
      %v1883 = vshrl.u32 %v1882, 7
      %v1884 = vsub.s32 %v1881, %v1883
      %v1885 = vrot.slane %v1878, %v1884
      %v1888 = vadd.f32 %v1680, %v1870
      %v1889 = vadd.f32 %v1681, %v1885
      %1890 = vst [vmem:[#allocation2] sm:$0xff] %v1888
      %v1891 = vlaneseq
      %vm1892 = vcmp.ge.s32.totalorder %v1891, 0
      %vm1893 = vcmp.lt.s32.totalorder %v1891, 256
      %vm1894 = vmand %vm1892, %vm1893
      %1895 = vst.msk [vmem:[#allocation2 + $0x8] sm:$0x3] %vm1894, %v1889
      // Predicated region
      $region53: #{net_forward.10} parent=47 // pred_check
        %p1896 = pneg %p342
      $region54: #{net_forward.10} parent=47 // pred_check_branch
        %1898 = sbr.rel (%p1896) target = $region56
      $region55: #{net_forward.10} parent=47 // pred_region
        %v1899 = vld [vmem:[#allocation2] sm:$0xff]
        %v1900 = vld [vmem:[#allocation2 + $0x8] sm:$0x3]
        %v1901 = vmul.f32 %v1899, 0.015625
        %v1902 = vmul.f32 %v1900, 0.015625
        %v1905 = vlaneseq
        %v1906 = vshrl.u32 %v1905, 7
        %v1907 = vsub.s32 0, %v1906
        %v1908 = vrot.slane %v1901, %v1907
        %v1909 = vlaneseq
        %v1910 = vshrl.u32 %v1909, 7
        %v1911 = vsub.s32 1, %v1910
        %v1912 = vrot.slane %v1901, %v1911
        %v1913 = vlaneseq
        %v1914 = vshrl.u32 %v1913, 7
        %v1915 = vsub.s32 2, %v1914
        %v1916 = vrot.slane %v1901, %v1915
        %v1917 = vlaneseq
        %v1918 = vshrl.u32 %v1917, 7
        %v1919 = vsub.s32 3, %v1918
        %v1920 = vrot.slane %v1901, %v1919
        %v1921 = vlaneseq
        %v1922 = vshrl.u32 %v1921, 7
        %v1923 = vsub.s32 4, %v1922
        %v1924 = vrot.slane %v1901, %v1923
        %v1925 = vlaneseq
        %v1926 = vshrl.u32 %v1925, 7
        %v1927 = vsub.s32 5, %v1926
        %v1928 = vrot.slane %v1901, %v1927
        %v1929 = vlaneseq
        %v1930 = vshrl.u32 %v1929, 7
        %v1931 = vsub.s32 6, %v1930
        %v1932 = vrot.slane %v1901, %v1931
        %v1933 = vlaneseq
        %v1934 = vshrl.u32 %v1933, 7
        %v1935 = vsub.s32 7, %v1934
        %v1936 = vrot.slane %v1901, %v1935
        %v1937 = vlaneseq
        %v1938 = vshrl.u32 %v1937, 7
        %v1939 = vsub.s32 0, %v1938
        %v1940 = vrot.slane %v1902, %v1939
        %v1941 = vlaneseq
        %v1942 = vshrl.u32 %v1941, 7
        %v1943 = vsub.s32 1, %v1942
        %v1944 = vrot.slane %v1902, %v1943
        %v1955 = vpack.c.bf16 %v1908, %v1908
        %v1956 = vpack.c.bf16 %v1912, %v1912
        %v1957 = vpack.c.bf16 %v1916, %v1916
        %v1958 = vpack.c.bf16 %v1920, %v1920
        %v1959 = vpack.c.bf16 %v1924, %v1924
        %v1960 = vpack.c.bf16 %v1928, %v1928
        %v1961 = vpack.c.bf16 %v1932, %v1932
        %v1962 = vpack.c.bf16 %v1936, %v1936
        %v1963 = vpack.c.bf16 %v1940, %v1940
        %v1964 = vpack.c.bf16 %v1944, %v1944
        %v1975 = vcombine.low %v1955, %v1956
        %v1976 = vcombine.low %v1957, %v1958
        %v1977 = vcombine.low %v1959, %v1960
        %v1978 = vcombine.low %v1961, %v1962
        %v1980 = vunpack.c.l.s4 1966171168
        %v1981 = vunpack.c.0.s8 %v1980
        %v1982 = vlaneseq
        %v1983 = vshrl.u32 %v1982, 7
        %v1984 = vsub.s32 %v1981, %v1983
        %v1985 = vrot.slane %v1975, %v1984
        %v1987 = vunpack.c.l.s4 1966171168
        %v1988 = vunpack.c.0.s8 %v1987
        %v1989 = vlaneseq
        %v1990 = vshrl.u32 %v1989, 7
        %v1991 = vsub.s32 %v1988, %v1990
        %v1992 = vrot.slane %v1976, %v1991
        %v1994 = vunpack.c.l.s4 1966171168
        %v1995 = vunpack.c.0.s8 %v1994
        %v1996 = vlaneseq
        %v1997 = vshrl.u32 %v1996, 7
        %v1998 = vsub.s32 %v1995, %v1997
        %v1999 = vrot.slane %v1977, %v1998
        %v2001 = vunpack.c.l.s4 1966171168
        %v2002 = vunpack.c.0.s8 %v2001
        %v2003 = vlaneseq
        %v2004 = vshrl.u32 %v2003, 7
        %v2005 = vsub.s32 %v2002, %v2004
        %v2006 = vrot.slane %v1978, %v2005
        %v2007 = vcombine.low %v1985, %v1992
        %v2008 = vcombine.low %v1999, %v2006
        %v2010 = vunpack.c.l.s4 1966171168
        %v2011 = vunpack.c.0.s8 %v2010
        %v2012 = vlaneseq
        %v2013 = vshrl.u32 %v2012, 7
        %v2014 = vsub.s32 %v2011, %v2013
        %v2015 = vrot.slane %v2007, %v2014
        %v2017 = vunpack.c.l.s4 1966171168
        %v2018 = vunpack.c.0.s8 %v2017
        %v2019 = vlaneseq
        %v2020 = vshrl.u32 %v2019, 7
        %v2021 = vsub.s32 %v2018, %v2020
        %v2022 = vrot.slane %v2008, %v2021
        %v2023 = vcombine.low %v2015, %v2022
        %v2024 = vcombine.low %v1963, %v1964
        %v2026 = vunpack.c.l.s4 1966171168
        %v2027 = vunpack.c.0.s8 %v2026
        %v2028 = vlaneseq
        %v2029 = vshrl.u32 %v2028, 7
        %v2030 = vsub.s32 %v2027, %v2029
        %v2031 = vrot.slane %v2024, %v2030
        %v2033 = vunpack.c.l.s4 1966171168
        %v2034 = vunpack.c.0.s8 %v2033
        %v2035 = vlaneseq
        %v2036 = vshrl.u32 %v2035, 7
        %v2037 = vsub.s32 %v2034, %v2036
        %v2038 = vrot.slane %v2031, %v2037
        %vm2041 = vcmask 1040384
        %vm2042 = vsmask.f32 256
        %vm2043 = vmand %vm2041, %vm2042
        %vm2044 = vcmask 1041409
        %vm2045 = vsmask.f32 1280
        %vm2046 = vmand %vm2044, %vm2045
        %vm2047 = vmor %vm2046, %vm2043
        %vm2048 = vcmask 1042434
        %vm2049 = vsmask.f32 2304
        %vm2050 = vmand %vm2048, %vm2049
        %vm2051 = vmor %vm2050, %vm2047
        %vm2052 = vcmask 1043459
        %vm2053 = vsmask.f32 3328
        %vm2054 = vmand %vm2052, %vm2053
        %vm2055 = vmor %vm2054, %vm2051
        %vm2056 = vcmask 1044484
        %vm2057 = vsmask.f32 4352
        %vm2058 = vmand %vm2056, %vm2057
        %vm2059 = vmor %vm2058, %vm2055
        %vm2060 = vcmask 1045509
        %vm2061 = vsmask.f32 5376
        %vm2062 = vmand %vm2060, %vm2061
        %vm2063 = vmor %vm2062, %vm2059
        %vm2064 = vcmask 1046534
        %vm2065 = vsmask.f32 6400
        %vm2066 = vmand %vm2064, %vm2065
        %vm2067 = vmor %vm2066, %vm2063
        %vm2068 = vcmask 1047559
        %vm2069 = vsmask.f32 7424
        %vm2070 = vmand %vm2068, %vm2069
        %vm2071 = vmor %vm2070, %vm2067
        %v2072 = vld [vmem:[%s340] sm:$0xff]
        %v2073 = vsel %vm2071, %v2023, %v2072
        %2074 = vst [vmem:[%s340] sm:$0xff] %v2073
        %v2075 = vld [vmem:[%s340 + $0x8] sm:$0x3]
        %v2076 = vsel %vm2047, %v2038, %v2075
        %2077 = vst [vmem:[%s340 + $0x8] sm:$0x3] %v2076
      $region56: #{net_forward.10} parent=47 // pred_fallthru
        _
      %p2078 = scmp.lt.s32.totalorder %s22, 1
      %s2079 = scalar_select %p2078, %s22, 1
      %s2080 = smul.addr %s2079, 10
      %s2081 = scalar_lea.vmem %s7, %s2080
      // Predicated region
      $region57: #{net_forward.10} parent=47 // pred_check
        %p2082 = pneg %p214
      $region58: #{net_forward.10} parent=47 // pred_check_branch
        %2084 = sbr.rel (%p2082) target = $region60
      $region59: #{net_forward.10} parent=47 // pred_region
        _
      $region60: #{net_forward.10} parent=47 // pred_fallthru
        _
    $region48: #{net_forward.10} parent=5 // pred_fallthru
      _
    %p2085 = scmp.le.s32.totalorder 2, %s13
    // Predicated region
    $region61: #{net_forward.10} parent=5 // pred_check
      %p2086 = pneg %p2085
    $region62: #{net_forward.10} parent=5 // pred_check_branch
      %2088 = sbr.rel (%p2086) target = $region64
    $region63: #{net_forward.10} parent=5 // pred_region
      %s2089 = ssub.s32 %s13, 2
      // Predicated region
      $region65: #{net_forward.10} parent=63 // pred_check
        %p2090 = pneg %p220
      $region66: #{net_forward.10} parent=63 // pred_check_branch
        %2092 = sbr.rel (%p2090) target = $region68
      $region67: #{net_forward.10} parent=63 // pred_region
        %p2093 = scmp.lt.s32.totalorder %s24, 1
        %s2094 = scalar_select %p2093, %s24, 1
        %s2095 = smul.addr %s2094, 10
        %s2096 = scalar_lea.vmem %s7, %s2095
      $region68: #{net_forward.10} parent=63 // pred_fallthru
        _
    $region64: #{net_forward.10} parent=5 // pred_fallthru
      _
  $region6: #{net_forward.10} parent=0 // loop_footer
    %s17 = sadd.s32 1, %s13
  $region7: #{net_forward.10} parent=0 // loop_footer_branch
    %12 = sbr.rel target = $region3
  $region8: #{net_forward.10} parent=0 // loop_exit
    _

</llo_original>
